<compile_context>
chip_gen: v7x
topology: tpu7x:2x2x1
jax: 0.10.0
libtpu: 0.0.40
codegen_flags: <defaults>
</compile_context>

<pallas_src>
import jax
import jax.numpy as jnp
from jax.experimental import pallas as pl
from jax.experimental.pallas import tpu as pltpu

# ---------------- problem / tiling constants ----------------
B = 2048     # batch (demo size; kernel is batch-gridded)
F = 32       # input_shape (number of sequence/interaction features)
N_PH = 2     # len(model_design)
N_AT = 2     # number of distinct additive traits
H = 16       # sos_architecture = [H, H]
TB = 512     # batch rows per grid block
SOS_OUTPUTLINEAR = False

LANES = 128
ROW_WEFF = 0              # rows [0, F)        : mask-folded additive-trait weights
ROW_W2 = F                # rows [F, F+128)    : zero-padded (128,128) hidden weight
ROW_TAIL = F + LANES      # rows [F+128, +8)   : w1 rows, b1, b2, w3^T, scalars
PK_ROWS = ROW_TAIL + 8    # 168 rows total (multiple of 8)


def mochi_kernel(x_ref, sel_ref, pk_ref, out_ref):
    x = x_ref[...]                                   # (TB, F)
    sel = sel_ref[...]                               # (TB, N_PH)

    # --- additive traits: one MXU matmul against the mask-folded weights ---
    # lanes: 0 -> additivetrait1(X*mask[0,0])   (phenotype 0, trait 1)
    #        1 -> additivetrait1(X*mask[0,1])   (phenotype 1, trait 1)
    #        2 -> additivetrait2(X*mask[1,1])   (phenotype 1, trait 2)
    weff = pk_ref[ROW_WEFF:ROW_WEFF + F, :]          # (F, 128)
    at = jnp.dot(x, weff, preferred_element_type=jnp.float32)   # (TB, 128)
    at_p0 = at[:, 0:1]
    at1 = at[:, 1:2]
    at2 = at[:, 2:3]

    # --- small parameters (single aligned (8,128) load, then value slices) ---
    tail = pk_ref[ROW_TAIL:ROW_TAIL + 8, :]          # (8, 128)
    w1r0 = tail[0:1, :]                              # Linear(2,H) row 0 (lane-padded)
    w1r1 = tail[1:2, :]                              # Linear(2,H) row 1
    b1r = tail[2:3, :]
    b2r = tail[3:4, :]
    w3r = tail[4:5, :]                               # Linear(H,1) weight as a row
    sc = tail[5:6, :]                                # scalars
    b3 = sc[:, 0:1]
    lw0, lb0 = sc[:, 1:2], sc[:, 2:3]                # |weight|, bias of linears[0]
    lw1, lb1 = sc[:, 3:4], sc[:, 4:5]                # |weight|, bias of linears[1]

    # --- phenotype 1: SumOfSigmoids over [trait1, trait2] (lane-padded) ---
    # cat([at1, at2], 1) @ W1.T + b1 expressed as two broadcast outer products.
    h = jax.nn.sigmoid(at1 * w1r0 + at2 * w1r1 + b1r)            # (TB, 128)
    # padded lanes of h are sigmoid(0)=0.5 but hit zero rows of w2 -> no effect.
    w2 = pk_ref[ROW_W2:ROW_W2 + LANES, :]                        # (128, 128)
    h = jax.nn.sigmoid(jnp.dot(h, w2, preferred_element_type=jnp.float32) + b2r)
    t1 = jnp.sum(h * w3r, axis=-1, keepdims=True) + b3           # (TB, 1)
    if not SOS_OUTPUTLINEAR:
        t1 = jax.nn.sigmoid(t1)

    # --- phenotype 0: 'Linear' transformation == sum of (single) additive trait
    t0 = at_p0

    # ConstrainedLinear(1,1) per phenotype, gated by select, summed over phenotypes.
    obs = (lw0 * t0 + lb0) * sel[:, 0:1] + (lw1 * t1 + lb1) * sel[:, 1:2]
    # TODO(synk): a fully lane-dense (1, TB) output layout would need a
    # sublane->lane relayout of this per-sample column; kept as (TB, 1) stores
    # to guarantee clean lowering.
    out_ref[...] = obs


def pack_params(mask, p):
    """Fold masks into additive-trait weights and pack all params into one
    lane-padded (PK_ROWS, 128) f32 buffer (single resident DMA)."""
    pk = jnp.zeros((PK_ROWS, LANES), jnp.float32)
    pk = pk.at[ROW_WEFF:ROW_WEFF + F, 0].set(mask[0, 0] * p["wat"][0])
    pk = pk.at[ROW_WEFF:ROW_WEFF + F, 1].set(mask[0, 1] * p["wat"][0])
    pk = pk.at[ROW_WEFF:ROW_WEFF + F, 2].set(mask[1, 1] * p["wat"][1])
    pk = pk.at[ROW_W2:ROW_W2 + H, 0:H].set(p["w2t"])
    pk = pk.at[ROW_TAIL + 0, 0:H].set(p["w1t"][0])
    pk = pk.at[ROW_TAIL + 1, 0:H].set(p["w1t"][1])
    pk = pk.at[ROW_TAIL + 2, 0:H].set(p["b1"][0])
    pk = pk.at[ROW_TAIL + 3, 0:H].set(p["b2"][0])
    pk = pk.at[ROW_TAIL + 4, 0:H].set(p["w3t"][:, 0])
    scal = jnp.stack([p["b3"][0, 0],
                      jnp.abs(p["lw"][0, 0]), p["lb"][0, 0],
                      jnp.abs(p["lw"][0, 1]), p["lb"][0, 1]])
    pk = pk.at[ROW_TAIL + 5, 0:5].set(scal)
    return pk


def mochi_forward(select, X, mask, params):
    bsz, feat = X.shape
    assert feat == F and bsz % TB == 0
    pk = pack_params(mask, params)
    return pl.pallas_call(
        mochi_kernel,
        out_shape=jax.ShapeDtypeStruct((bsz, 1), jnp.float32),
        grid=(bsz // TB,),
        in_specs=[
            pl.BlockSpec((TB, F), lambda i: (i, 0)),         # X block
            pl.BlockSpec((TB, N_PH), lambda i: (i, 0)),      # select block
            pl.BlockSpec((PK_ROWS, LANES), lambda i: (0, 0)),  # params, VMEM-resident
        ],
        out_specs=pl.BlockSpec((TB, 1), lambda i: (i, 0)),
        compiler_params=pltpu.CompilerParams(
            dimension_semantics=("parallel",)),
    )(X, select, pk)


def mochi_reference(select, X, mask, p):
    """Pure-JAX reference of the PyTorch forward pass (same synthetic design)."""
    hi = jax.lax.Precision.HIGHEST
    # phenotype 0
    at_p0 = jnp.dot(X * mask[0, 0], p["wat"][0][:, None], precision=hi)
    t0 = at_p0
    obs0 = (jnp.abs(p["lw"][:, 0:1]) * t0 + p["lb"][:, 0:1]) * select[:, 0:1]
    # phenotype 1 (SumOfSigmoids)
    at1 = jnp.dot(X * mask[0, 1], p["wat"][0][:, None], precision=hi)
    at2 = jnp.dot(X * mask[1, 1], p["wat"][1][:, None], precision=hi)
    cat = jnp.concatenate([at1, at2], axis=1)
    h = jax.nn.sigmoid(jnp.dot(cat, p["w1t"], precision=hi) + p["b1"])
    h = jax.nn.sigmoid(jnp.dot(h, p["w2t"], precision=hi) + p["b2"])
    t1 = jnp.dot(h, p["w3t"], precision=hi) + p["b3"]
    if not SOS_OUTPUTLINEAR:
        t1 = jax.nn.sigmoid(t1)
    obs1 = (jnp.abs(p["lw"][:, 1:2]) * t1 + p["lb"][:, 1:2]) * select[:, 1:2]
    return obs0 + obs1


if __name__ == "__main__":
    key = jax.random.PRNGKey(0)
    ks = jax.random.split(key, 14)
    f32 = jnp.float32

    # inputs
    X = jax.random.normal(ks[0], (B, F), f32)
    select = (jax.random.uniform(ks[1], (B, N_PH)) > 0.5).astype(f32)
    mask = (jax.random.uniform(ks[2], (N_AT, N_PH, F)) > 0.2).astype(f32)

    # deterministic parameter init (shapes dictated by MochiModel.__init__)
    params = {
        # additivetraits: N_AT x Linear(F, 1, bias=False) -> weights (N_AT, F)
        "wat": 0.1 * jax.random.normal(ks[3], (N_AT, F), f32),
        # sumofsigmoids_list[0][0]: Linear(2, H)   (stored transposed: (in, out))
        "w1t": 0.5 * jax.random.normal(ks[4], (2, H), f32),
        "b1": 0.1 * jax.random.normal(ks[5], (1, H), f32),
        # sumofsigmoids_list[1][0]: Linear(H, H)
        "w2t": 0.5 * jax.random.normal(ks[6], (H, H), f32),
        "b2": 0.1 * jax.random.normal(ks[7], (1, H), f32),
        # sumofsigmoids_list[2][0]: Linear(H, 1)
        "w3t": 0.5 * jax.random.normal(ks[8], (H, 1), f32),
        "b3": 0.1 * jax.random.normal(ks[9], (1, 1), f32),
        # linears: N_PH x ConstrainedLinear(1, 1)  -> weight (1, N_PH), bias (1, N_PH)
        "lw": jax.random.normal(ks[10], (1, N_PH), f32),
        "lb": 0.1 * jax.random.normal(ks[11], (1, N_PH), f32),
    }
    # TODO(synk): globalparams for non-'Linear' analytic transformations (e.g.
    # TwoStateFractionFolded) depend on the undefined get_transformation(); the
    # synthetic design uses the parameter-free 'Linear' transformation instead.

    out = mochi_forward(select, X, mask, params)
    out = jax.block_until_ready(out)

    ref = mochi_reference(select, X, mask, params)
    assert out.shape == (B, 1)
    assert jnp.allclose(out, ref, atol=1e-4, rtol=1e-4), (
        float(jnp.max(jnp.abs(out - ref))))
    print("KERNEL_OK")
</pallas_src>

<mosaic_0001>
module attributes {stable_mosaic.version = 11 : i64} {
  func.func @mochi_kernel(%arg0: i32, %arg1: memref<512x32xf32, #tpu.memory_space<vmem>>, %arg2: memref<512x2xf32, #tpu.memory_space<vmem>>, %arg3: memref<168x128xf32, #tpu.memory_space<vmem>>, %arg4: memref<512x1xf32, #tpu.memory_space<vmem>>) attributes {dimension_semantics = [#tpu.dimension_semantics<parallel>], iteration_bounds = array<i64: 4>, scalar_prefetch = 0 : i64, scratch_operands = 0 : i64, tpu.core_type = #tpu.core_type<tc>, window_params = [{transform_indices = @transform_0, window_bounds = array<i64: 512, 32>}, {transform_indices = @transform_1, window_bounds = array<i64: 512, 2>}, {pipeline_mode = #tpu.pipeline_mode<synchronous>, transform_indices = @transform_2, window_bounds = array<i64: 168, 128>}, {transform_indices = @transform_3, window_bounds = array<i64: 512, 1>}]} {
    %c0 = arith.constant 0 : index
    %c0_0 = arith.constant 0 : index
    %0 = vector.load %arg1[%c0, %c0_0] : memref<512x32xf32, #tpu.memory_space<vmem>>, vector<512x32xf32>
    %c0_1 = arith.constant 0 : index
    %c0_2 = arith.constant 0 : index
    %1 = vector.load %arg2[%c0_1, %c0_2] : memref<512x2xf32, #tpu.memory_space<vmem>>, vector<512x2xf32>
    %c0_3 = arith.constant 0 : index
    %c0_4 = arith.constant 0 : index
    %2 = vector.load %arg3[%c0_3, %c0_4] : memref<168x128xf32, #tpu.memory_space<vmem>>, vector<32x128xf32>
    %cst = arith.constant dense<0.000000e+00> : vector<512x128xf32>
    %3 = tpu.matmul %0, %2, %cst {dimension_numbers = #tpu.dot_dimension_numbers<[1], [0], [0], [1], [0, 0, 1, 1], [], []>} : vector<512x32xf32>, vector<32x128xf32>, vector<512x128xf32> -> vector<512x128xf32>
    %4 = vector.extract_strided_slice %3 {offsets = [0, 0], sizes = [512, 1], strides = [1, 1]} : vector<512x128xf32> to vector<512x1xf32>
    %5 = vector.extract_strided_slice %3 {offsets = [0, 1], sizes = [512, 1], strides = [1, 1]} : vector<512x128xf32> to vector<512x1xf32>
    %6 = vector.extract_strided_slice %3 {offsets = [0, 2], sizes = [512, 1], strides = [1, 1]} : vector<512x128xf32> to vector<512x1xf32>
    %c160 = arith.constant 160 : index
    %c0_5 = arith.constant 0 : index
    %7 = vector.load %arg3[%c160, %c0_5] : memref<168x128xf32, #tpu.memory_space<vmem>>, vector<8x128xf32>
    %8 = vector.extract_strided_slice %7 {offsets = [0, 0], sizes = [1, 128], strides = [1, 1]} : vector<8x128xf32> to vector<1x128xf32>
    %9 = vector.extract_strided_slice %7 {offsets = [1, 0], sizes = [1, 128], strides = [1, 1]} : vector<8x128xf32> to vector<1x128xf32>
    %10 = vector.extract_strided_slice %7 {offsets = [2, 0], sizes = [1, 128], strides = [1, 1]} : vector<8x128xf32> to vector<1x128xf32>
    %11 = vector.extract_strided_slice %7 {offsets = [3, 0], sizes = [1, 128], strides = [1, 1]} : vector<8x128xf32> to vector<1x128xf32>
    %12 = vector.extract_strided_slice %7 {offsets = [4, 0], sizes = [1, 128], strides = [1, 1]} : vector<8x128xf32> to vector<1x128xf32>
    %13 = vector.extract_strided_slice %7 {offsets = [5, 0], sizes = [1, 128], strides = [1, 1]} : vector<8x128xf32> to vector<1x128xf32>
    %14 = vector.extract_strided_slice %13 {offsets = [0, 0], sizes = [1, 1], strides = [1, 1]} : vector<1x128xf32> to vector<1x1xf32>
    %15 = vector.extract_strided_slice %13 {offsets = [0, 1], sizes = [1, 1], strides = [1, 1]} : vector<1x128xf32> to vector<1x1xf32>
    %16 = vector.extract_strided_slice %13 {offsets = [0, 2], sizes = [1, 1], strides = [1, 1]} : vector<1x128xf32> to vector<1x1xf32>
    %17 = vector.extract_strided_slice %13 {offsets = [0, 3], sizes = [1, 1], strides = [1, 1]} : vector<1x128xf32> to vector<1x1xf32>
    %18 = vector.extract_strided_slice %13 {offsets = [0, 4], sizes = [1, 1], strides = [1, 1]} : vector<1x128xf32> to vector<1x1xf32>
    %19 = vector.broadcast %5 : vector<512x1xf32> to vector<512x128xf32>
    %20 = vector.broadcast %8 : vector<1x128xf32> to vector<512x128xf32>
    %21 = arith.mulf %19, %20 : vector<512x128xf32>
    %22 = vector.broadcast %6 : vector<512x1xf32> to vector<512x128xf32>
    %23 = vector.broadcast %9 : vector<1x128xf32> to vector<512x128xf32>
    %24 = arith.mulf %22, %23 : vector<512x128xf32>
    %25 = arith.addf %21, %24 : vector<512x128xf32>
    %26 = vector.broadcast %10 : vector<1x128xf32> to vector<512x128xf32>
    %27 = arith.addf %25, %26 : vector<512x128xf32>
    %28 = arith.negf %27 : vector<512x128xf32>
    %29 = math.exp %28 : vector<512x128xf32>
    %cst_6 = arith.constant 1.000000e+00 : f32
    %30 = vector.broadcast %cst_6 : f32 to vector<512x128xf32>
    %31 = arith.addf %30, %29 : vector<512x128xf32>
    %32 = arith.divf %30, %31 : vector<512x128xf32>
    %c32 = arith.constant 32 : index
    %c0_7 = arith.constant 0 : index
    %33 = vector.load %arg3[%c32, %c0_7] : memref<168x128xf32, #tpu.memory_space<vmem>>, vector<128x128xf32>
    %cst_8 = arith.constant dense<0.000000e+00> : vector<512x128xf32>
    %34 = tpu.matmul %32, %33, %cst_8 {dimension_numbers = #tpu.dot_dimension_numbers<[1], [0], [0], [1], [0, 0, 1, 1], [], []>} : vector<512x128xf32>, vector<128x128xf32>, vector<512x128xf32> -> vector<512x128xf32>
    %35 = vector.broadcast %11 : vector<1x128xf32> to vector<512x128xf32>
    %36 = arith.addf %34, %35 : vector<512x128xf32>
    %37 = arith.negf %36 : vector<512x128xf32>
    %38 = math.exp %37 : vector<512x128xf32>
    %cst_9 = arith.constant 1.000000e+00 : f32
    %39 = vector.broadcast %cst_9 : f32 to vector<512x128xf32>
    %40 = arith.addf %39, %38 : vector<512x128xf32>
    %41 = arith.divf %39, %40 : vector<512x128xf32>
    %42 = vector.broadcast %12 : vector<1x128xf32> to vector<512x128xf32>
    %43 = arith.mulf %41, %42 : vector<512x128xf32>
    %cst_10 = arith.constant dense<0.000000e+00> : vector<512xf32>
    %44 = vector.multi_reduction <add>, %43, %cst_10 [1] : vector<512x128xf32> to vector<512xf32>
    %45 = vector.shape_cast %44 : vector<512xf32> to vector<512x1xf32>
    %46 = vector.broadcast %14 : vector<1x1xf32> to vector<512x1xf32>
    %47 = arith.addf %45, %46 : vector<512x1xf32>
    %48 = arith.negf %47 : vector<512x1xf32>
    %49 = math.exp %48 : vector<512x1xf32>
    %cst_11 = arith.constant 1.000000e+00 : f32
    %50 = vector.broadcast %cst_11 : f32 to vector<512x1xf32>
    %51 = arith.addf %50, %49 : vector<512x1xf32>
    %52 = arith.divf %50, %51 : vector<512x1xf32>
    %53 = vector.broadcast %15 : vector<1x1xf32> to vector<512x1xf32>
    %54 = arith.mulf %53, %4 : vector<512x1xf32>
    %55 = vector.broadcast %16 : vector<1x1xf32> to vector<512x1xf32>
    %56 = arith.addf %54, %55 : vector<512x1xf32>
    %57 = vector.extract_strided_slice %1 {offsets = [0, 0], sizes = [512, 1], strides = [1, 1]} : vector<512x2xf32> to vector<512x1xf32>
    %58 = arith.mulf %56, %57 : vector<512x1xf32>
    %59 = vector.broadcast %17 : vector<1x1xf32> to vector<512x1xf32>
    %60 = arith.mulf %59, %52 : vector<512x1xf32>
    %61 = vector.broadcast %18 : vector<1x1xf32> to vector<512x1xf32>
    %62 = arith.addf %60, %61 : vector<512x1xf32>
    %63 = vector.extract_strided_slice %1 {offsets = [0, 1], sizes = [512, 1], strides = [1, 1]} : vector<512x2xf32> to vector<512x1xf32>
    %64 = arith.mulf %62, %63 : vector<512x1xf32>
    %65 = arith.addf %58, %64 : vector<512x1xf32>
    %c0_12 = arith.constant 0 : index
    %c0_13 = arith.constant 0 : index
    %66 = vector.load %arg4[%c0_12, %c0_13] : memref<512x1xf32, #tpu.memory_space<vmem>>, vector<512x1xf32>
    tpu.vector_store %arg4[%c0_12, %c0_13], %65 {strides = array<i32>} : memref<512x1xf32, #tpu.memory_space<vmem>>, vector<512x1xf32>,
    return
  }
  func.func @transform_0(%arg0: i32) -> (i32, i32) {
    %c0_i32 = arith.constant 0 : i32
    %c0_i32_0 = arith.constant 0 : i32
    return %arg0, %c0_i32 : i32, i32
  }
  func.func @transform_1(%arg0: i32) -> (i32, i32) {
    %c0_i32 = arith.constant 0 : i32
    %c0_i32_0 = arith.constant 0 : i32
    return %arg0, %c0_i32 : i32, i32
  }
  func.func @transform_2(%arg0: i32) -> (i32, i32) {
    %c0_i32 = arith.constant 0 : i32
    %c0_i32_0 = arith.constant 0 : i32
    %c0_i32_1 = arith.constant 0 : i32
    return %c0_i32, %c0_i32_0 : i32, i32
  }
  func.func @transform_3(%arg0: i32) -> (i32, i32) {
    %c0_i32 = arith.constant 0 : i32
    %c0_i32_0 = arith.constant 0 : i32
    return %arg0, %c0_i32 : i32, i32
  }
}

</mosaic_0001>

<llo_original>
// kernel: tpu_custom_call.1
$region0: #{tpu_custom_call.1}
  #allocation0 [shape = 'u32[]', space=smem, size = 0x4, offset = 0x4, fixed_abs, tag = 'smem constant byte address 0x4 - core index']
  #allocation1 [shape = 'u32[144,128]{1,0:T(1,128)}', space=vmem, size = 0x12000, scoped, tag = 'internal scratch']
  %s0 = inlined_call_operand.vmem [shape: f32[2048,32], index: 0, kind: input, shape index: {}]
  %s1 = inlined_call_operand.vmem [shape: f32[2048,2], index: 1, kind: input, shape index: {}]
  %s2 = inlined_call_operand.vmem [shape: f32[168,128], index: 2, kind: input, shape index: {}]
  %s3 = inlined_call_operand.vmem [shape: f32[2048,1], index: 3, kind: output, shape index: {}]
  %s4 = sld [smem:[#allocation0]]
  $region45: #{tpu_custom_call.1} parent=0
    _
  %s6 = ssub.s32 1, %s4
  %s7 = scalar_select 0, %s6, %s4
  loop: start=0, step=1, limit=6
  $region2: #{tpu_custom_call.1} parent=0 // loop_pre_header
    _
  $region3: #{tpu_custom_call.1} parent=0 // loop_header
    %s9 = sphi 0, %s13
    %p10 = scmp.ge.s32.totalorder %s9, 6
    %s19 = sphi 0, %s21
    %s22 = sphi 0, %s19
    %s23 = sphi 0, %s22
    %s39 = sphi 0, %s23
    %s45 = sphi 0, %s47
    %s48 = sphi 0, %s45
    %s49 = sphi 0, %s48
    %s65 = sphi 0, %s49
    %s69 = sphi 0, %s69
    %s71 = sphi 0, %s69
    %s72 = sphi 0, %s71
    %s86 = sphi 0, %s72
    %s92 = sphi 0, %s94
    %s95 = sphi 0, %s92
    %s96 = sphi 0, %s95
    %s112 = sphi 0, %s96
  $region4: #{tpu_custom_call.1} parent=0 // loop_header_branch
    %12 = sbr.rel (%p10) target = $region8
  $region5: #{tpu_custom_call.1} parent=0 // loop_body
    %s14 = ssub.s32 %s9, 1
    %s15 = ssub.s32 %s9, 2
    %s16 = sadd.s32 %s9, 1
    %s17 = ssub.s32 %s9, %s16
    %p18 = scmp.eq.s32.totalorder %s17, 0
    %s20 = sadd.s32 %s19, 1
    %s21 = scalar_select %p18, %s19, %s20
    %p24 = pneg %p18
    %p25 = scmp.eq.s32.totalorder %s9, 3
    %p26 = por %p24, %p25
    %p27 = scmp.ne.s32.totalorder %s19, %s22
    %p28 = scmp.eq.s32.totalorder %s9, 0
    %p29 = por %p27, %p28
    %p30 = scmp.ne.s32.totalorder %s19, %s22
    %p31 = scmp.eq.s32.totalorder %s14, 3
    %p32 = por %p30, %p31
    %p33 = scmp.ne.s32.totalorder %s22, %s23
    %p34 = scmp.eq.s32.totalorder %s14, 0
    %p35 = por %p33, %p34
    %p36 = scmp.ne.s32.totalorder %s22, %s23
    %p37 = scmp.eq.s32.totalorder %s15, 3
    %p38 = por %p36, %p37
    %p40 = scmp.ne.s32.totalorder %s23, %s39
    %p41 = scmp.eq.s32.totalorder %s15, 0
    %p42 = por %p40, %p41
    %s43 = ssub.s32 %s9, %s16
    %p44 = scmp.eq.s32.totalorder %s43, 0
    %s46 = sadd.s32 %s45, 1
    %s47 = scalar_select %p44, %s45, %s46
    %p50 = pneg %p44
    %p51 = scmp.eq.s32.totalorder %s9, 3
    %p52 = por %p50, %p51
    %p53 = scmp.ne.s32.totalorder %s45, %s48
    %p54 = scmp.eq.s32.totalorder %s9, 0
    %p55 = por %p53, %p54
    %p56 = scmp.ne.s32.totalorder %s45, %s48
    %p57 = scmp.eq.s32.totalorder %s14, 3
    %p58 = por %p56, %p57
    %p59 = scmp.ne.s32.totalorder %s48, %s49
    %p60 = scmp.eq.s32.totalorder %s14, 0
    %p61 = por %p59, %p60
    %p62 = scmp.ne.s32.totalorder %s48, %s49
    %p63 = scmp.eq.s32.totalorder %s15, 3
    %p64 = por %p62, %p63
    %p66 = scmp.ne.s32.totalorder %s49, %s65
    %p67 = scmp.eq.s32.totalorder %s15, 0
    %p68 = por %p66, %p67
    %s70 = sadd.s32 %s69, 1
    %p73 = scmp.eq.s32.totalorder %s9, 3
    %p74 = scmp.ne.s32.totalorder %s69, %s71
    %p75 = scmp.eq.s32.totalorder %s9, 0
    %p76 = por %p74, %p75
    %p77 = scmp.ne.s32.totalorder %s69, %s71
    %p78 = scmp.eq.s32.totalorder %s14, 3
    %p79 = por %p77, %p78
    %p80 = scmp.ne.s32.totalorder %s71, %s72
    %p81 = scmp.eq.s32.totalorder %s14, 0
    %p82 = por %p80, %p81
    %p83 = scmp.ne.s32.totalorder %s71, %s72
    %p84 = scmp.eq.s32.totalorder %s15, 3
    %p85 = por %p83, %p84
    %p87 = scmp.ne.s32.totalorder %s72, %s86
    %p88 = scmp.eq.s32.totalorder %s15, 0
    %p89 = por %p87, %p88
    %s90 = ssub.s32 %s9, %s16
    %p91 = scmp.eq.s32.totalorder %s90, 0
    %s93 = sadd.s32 %s92, 1
    %s94 = scalar_select %p91, %s92, %s93
    %p97 = pneg %p91
    %p98 = scmp.eq.s32.totalorder %s9, 3
    %p99 = por %p97, %p98
    %p100 = scmp.ne.s32.totalorder %s92, %s95
    %p101 = scmp.eq.s32.totalorder %s9, 0
    %p102 = por %p100, %p101
    %p103 = scmp.ne.s32.totalorder %s92, %s95
    %p104 = scmp.eq.s32.totalorder %s14, 3
    %p105 = por %p103, %p104
    %p106 = scmp.ne.s32.totalorder %s95, %s96
    %p107 = scmp.eq.s32.totalorder %s14, 0
    %p108 = por %p106, %p107
    %p109 = scmp.ne.s32.totalorder %s95, %s96
    %p110 = scmp.eq.s32.totalorder %s15, 3
    %p111 = por %p109, %p110
    %p113 = scmp.ne.s32.totalorder %s96, %s112
    %p114 = scmp.eq.s32.totalorder %s15, 0
    %p115 = por %p113, %p114
    %p116 = scmp.le.s32.totalorder 1, %s9
    %p117 = scmp.lt.s32.totalorder %s9, 5
    %p118 = pnand %p116, %p117
    %p119 = pneg %p118
    // Predicated region
    $region9: #{tpu_custom_call.1} parent=5 // pred_check
      _
    $region10: #{tpu_custom_call.1} parent=5 // pred_check_branch
      %121 = sbr.rel (%p118) target = $region12
    $region11: #{tpu_custom_call.1} parent=5 // pred_region
      %s122 = ssub.s32 %s9, 1
      // Predicated region
      $region13: #{tpu_custom_call.1} parent=11 // pred_check
        %p123 = pneg %p82
      $region14: #{tpu_custom_call.1} parent=11 // pred_check_branch
        %125 = sbr.rel (%p123) target = $region16
      $region15: #{tpu_custom_call.1} parent=11 // pred_region
        _
      $region16: #{tpu_custom_call.1} parent=11 // pred_fallthru
        _
    $region12: #{tpu_custom_call.1} parent=5 // pred_fallthru
      _
    %p126 = scmp.lt.s32.totalorder %s9, 4
    // Predicated region
    $region17: #{tpu_custom_call.1} parent=5 // pred_check
      %p127 = pneg %p126
    $region18: #{tpu_custom_call.1} parent=5 // pred_check_branch
      %129 = sbr.rel (%p127) target = $region20
    $region19: #{tpu_custom_call.1} parent=5 // pred_region
      // Predicated region
      $region21: #{tpu_custom_call.1} parent=19 // pred_check
        %p130 = pneg %p29
      $region22: #{tpu_custom_call.1} parent=19 // pred_check_branch
        %132 = sbr.rel (%p130) target = $region24
      $region23: #{tpu_custom_call.1} parent=19 // pred_region
        %s133 = smul.u32 64, %s9
        %p134 = scmp.lt.s32.totalorder %s133, 255
        %s135 = scalar_select %p134, %s133, 255
        %s136 = smul.addr %s135, 8
        %s137 = scalar_lea.vmem %s0, %s136
        %s138 = smul.u32 64, %s9
      $region24: #{tpu_custom_call.1} parent=19 // pred_fallthru
        _
      // Predicated region
      $region25: #{tpu_custom_call.1} parent=19 // pred_check
        %p139 = pneg %p55
      $region26: #{tpu_custom_call.1} parent=19 // pred_check_branch
        %141 = sbr.rel (%p139) target = $region28
      $region27: #{tpu_custom_call.1} parent=19 // pred_region
        %s142 = smul.u32 64, %s9
        %p143 = scmp.lt.s32.totalorder %s142, 255
        %s144 = scalar_select %p143, %s142, 255
        %s145 = smul.addr %s144, 8
        %s146 = scalar_lea.vmem %s1, %s145
        %s147 = smul.u32 64, %s9
      $region28: #{tpu_custom_call.1} parent=19 // pred_fallthru
        _
    $region20: #{tpu_custom_call.1} parent=5 // pred_fallthru
      _
    %p148 = scmp.le.s32.totalorder 1, %s9
    %p149 = scmp.lt.s32.totalorder %s9, 5
    %p150 = pnand %p148, %p149
    %p151 = pneg %p150
    // Predicated region
    $region29: #{tpu_custom_call.1} parent=5 // pred_check
      _
    $region30: #{tpu_custom_call.1} parent=5 // pred_check_branch
      %153 = sbr.rel (%p150) target = $region32
    $region31: #{tpu_custom_call.1} parent=5 // pred_region
      %s154 = ssub.s32 %s9, 1
      %s155 = smul.u32 64, %s14
      %p156 = scmp.lt.s32.totalorder %s155, 255
      %s157 = scalar_select %p156, %s155, 255
      %s158 = smul.addr %s157, 8
      %s159 = scalar_lea.vmem %s0, %s158
      %p160 = pneg %p35
      %p161 = pneg %p32
      %s162 = smul.u32 64, %s14
      %p163 = scmp.lt.s32.totalorder %s162, 255
      %s164 = scalar_select %p163, %s162, 255
      %s165 = smul.addr %s164, 8
      %s166 = scalar_lea.vmem %s1, %s165
      %p167 = pneg %p61
      %p168 = pneg %p58
      %p169 = pneg %p82
      %p170 = pneg %p79
      %p171 = pneg %p108
      %p172 = pneg %p105
      %s173 = smul.u32 64, %s14
      %p174 = scmp.lt.s32.totalorder %s173, 255
      %s175 = scalar_select %p174, %s173, 255
      %s176 = smul.addr %s175, 8
      %s177 = scalar_lea.vmem %s3, %s176
      %s178 = smul.u32 64, %s14
      %p179 = scmp.lt.s32.totalorder %s178, 255
      %s180 = scalar_select %p179, %s178, 255
      %s181 = smul.addr %s180, 8
      %s182 = scalar_lea.vmem %s0, %s181
      %s183 = smul.u32 64, %s14
      %s184 = smul.u32 64, %s14
      %p185 = scmp.lt.s32.totalorder %s184, 255
      %s186 = scalar_select %p185, %s184, 255
      %s187 = smul.addr %s186, 8
      %s188 = scalar_lea.vmem %s1, %s187
      %s189 = smul.u32 64, %s14
      %s190 = smul.u32 64, %s14
      %p191 = scmp.lt.s32.totalorder %s190, 255
      %s192 = scalar_select %p191, %s190, 255
      %s193 = smul.addr %s192, 8
      %s194 = scalar_lea.vmem %s3, %s193
      %s195 = smul.u32 64, %s14
      %v196 = vld [vmem:[%s182] sm:$0xff]
      %v197 = vld [vmem:[%s182 + $0x8] sm:$0xff]
      %v198 = vld [vmem:[%s182 + $0x10] sm:$0xff]
      %v199 = vld [vmem:[%s182 + $0x18] sm:$0xff]
      %v200 = vld [vmem:[%s182 + $0x20] sm:$0xff]
      %v201 = vld [vmem:[%s182 + $0x28] sm:$0xff]
      %v202 = vld [vmem:[%s182 + $0x30] sm:$0xff]
      %v203 = vld [vmem:[%s182 + $0x38] sm:$0xff]
      %v204 = vld [vmem:[%s182 + $0x40] sm:$0xff]
      %v205 = vld [vmem:[%s182 + $0x48] sm:$0xff]
      %v206 = vld [vmem:[%s182 + $0x50] sm:$0xff]
      %v207 = vld [vmem:[%s182 + $0x58] sm:$0xff]
      %v208 = vld [vmem:[%s182 + $0x60] sm:$0xff]
      %v209 = vld [vmem:[%s182 + $0x68] sm:$0xff]
      %v210 = vld [vmem:[%s182 + $0x70] sm:$0xff]
      %v211 = vld [vmem:[%s182 + $0x78] sm:$0xff]
      %v212 = vld [vmem:[%s182 + $0x80] sm:$0xff]
      %v213 = vld [vmem:[%s182 + $0x88] sm:$0xff]
      %v214 = vld [vmem:[%s182 + $0x90] sm:$0xff]
      %v215 = vld [vmem:[%s182 + $0x98] sm:$0xff]
      %v216 = vld [vmem:[%s182 + $0xa0] sm:$0xff]
      %v217 = vld [vmem:[%s182 + $0xa8] sm:$0xff]
      %v218 = vld [vmem:[%s182 + $0xb0] sm:$0xff]
      %v219 = vld [vmem:[%s182 + $0xb8] sm:$0xff]
      %v220 = vld [vmem:[%s182 + $0xc0] sm:$0xff]
      %v221 = vld [vmem:[%s182 + $0xc8] sm:$0xff]
      %v222 = vld [vmem:[%s182 + $0xd0] sm:$0xff]
      %v223 = vld [vmem:[%s182 + $0xd8] sm:$0xff]
      %v224 = vld [vmem:[%s182 + $0xe0] sm:$0xff]
      %v225 = vld [vmem:[%s182 + $0xe8] sm:$0xff]
      %v226 = vld [vmem:[%s182 + $0xf0] sm:$0xff]
      %v227 = vld [vmem:[%s182 + $0xf8] sm:$0xff]
      %v228 = vld [vmem:[%s182 + $0x100] sm:$0xff]
      %v229 = vld [vmem:[%s182 + $0x108] sm:$0xff]
      %v230 = vld [vmem:[%s182 + $0x110] sm:$0xff]
      %v231 = vld [vmem:[%s182 + $0x118] sm:$0xff]
      %v232 = vld [vmem:[%s182 + $0x120] sm:$0xff]
      %v233 = vld [vmem:[%s182 + $0x128] sm:$0xff]
      %v234 = vld [vmem:[%s182 + $0x130] sm:$0xff]
      %v235 = vld [vmem:[%s182 + $0x138] sm:$0xff]
      %v236 = vld [vmem:[%s182 + $0x140] sm:$0xff]
      %v237 = vld [vmem:[%s182 + $0x148] sm:$0xff]
      %v238 = vld [vmem:[%s182 + $0x150] sm:$0xff]
      %v239 = vld [vmem:[%s182 + $0x158] sm:$0xff]
      %v240 = vld [vmem:[%s182 + $0x160] sm:$0xff]
      %v241 = vld [vmem:[%s182 + $0x168] sm:$0xff]
      %v242 = vld [vmem:[%s182 + $0x170] sm:$0xff]
      %v243 = vld [vmem:[%s182 + $0x178] sm:$0xff]
      %v244 = vld [vmem:[%s182 + $0x180] sm:$0xff]
      %v245 = vld [vmem:[%s182 + $0x188] sm:$0xff]
      %v246 = vld [vmem:[%s182 + $0x190] sm:$0xff]
      %v247 = vld [vmem:[%s182 + $0x198] sm:$0xff]
      %v248 = vld [vmem:[%s182 + $0x1a0] sm:$0xff]
      %v249 = vld [vmem:[%s182 + $0x1a8] sm:$0xff]
      %v250 = vld [vmem:[%s182 + $0x1b0] sm:$0xff]
      %v251 = vld [vmem:[%s182 + $0x1b8] sm:$0xff]
      %v252 = vld [vmem:[%s182 + $0x1c0] sm:$0xff]
      %v253 = vld [vmem:[%s182 + $0x1c8] sm:$0xff]
      %v254 = vld [vmem:[%s182 + $0x1d0] sm:$0xff]
      %v255 = vld [vmem:[%s182 + $0x1d8] sm:$0xff]
      %v256 = vld [vmem:[%s182 + $0x1e0] sm:$0xff]
      %v257 = vld [vmem:[%s182 + $0x1e8] sm:$0xff]
      %v258 = vld [vmem:[%s182 + $0x1f0] sm:$0xff]
      %v259 = vld [vmem:[%s182 + $0x1f8] sm:$0xff]
      %v260 = vld [vmem:[%s188] sm:$0xff]
      %v261 = vld [vmem:[%s188 + $0x8] sm:$0xff]
      %v262 = vld [vmem:[%s188 + $0x10] sm:$0xff]
      %v263 = vld [vmem:[%s188 + $0x18] sm:$0xff]
      %v264 = vld [vmem:[%s188 + $0x20] sm:$0xff]
      %v265 = vld [vmem:[%s188 + $0x28] sm:$0xff]
      %v266 = vld [vmem:[%s188 + $0x30] sm:$0xff]
      %v267 = vld [vmem:[%s188 + $0x38] sm:$0xff]
      %v268 = vld [vmem:[%s188 + $0x40] sm:$0xff]
      %v269 = vld [vmem:[%s188 + $0x48] sm:$0xff]
      %v270 = vld [vmem:[%s188 + $0x50] sm:$0xff]
      %v271 = vld [vmem:[%s188 + $0x58] sm:$0xff]
      %v272 = vld [vmem:[%s188 + $0x60] sm:$0xff]
      %v273 = vld [vmem:[%s188 + $0x68] sm:$0xff]
      %v274 = vld [vmem:[%s188 + $0x70] sm:$0xff]
      %v275 = vld [vmem:[%s188 + $0x78] sm:$0xff]
      %v276 = vld [vmem:[%s188 + $0x80] sm:$0xff]
      %v277 = vld [vmem:[%s188 + $0x88] sm:$0xff]
      %v278 = vld [vmem:[%s188 + $0x90] sm:$0xff]
      %v279 = vld [vmem:[%s188 + $0x98] sm:$0xff]
      %v280 = vld [vmem:[%s188 + $0xa0] sm:$0xff]
      %v281 = vld [vmem:[%s188 + $0xa8] sm:$0xff]
      %v282 = vld [vmem:[%s188 + $0xb0] sm:$0xff]
      %v283 = vld [vmem:[%s188 + $0xb8] sm:$0xff]
      %v284 = vld [vmem:[%s188 + $0xc0] sm:$0xff]
      %v285 = vld [vmem:[%s188 + $0xc8] sm:$0xff]
      %v286 = vld [vmem:[%s188 + $0xd0] sm:$0xff]
      %v287 = vld [vmem:[%s188 + $0xd8] sm:$0xff]
      %v288 = vld [vmem:[%s188 + $0xe0] sm:$0xff]
      %v289 = vld [vmem:[%s188 + $0xe8] sm:$0xff]
      %v290 = vld [vmem:[%s188 + $0xf0] sm:$0xff]
      %v291 = vld [vmem:[%s188 + $0xf8] sm:$0xff]
      %v292 = vld [vmem:[%s188 + $0x100] sm:$0xff]
      %v293 = vld [vmem:[%s188 + $0x108] sm:$0xff]
      %v294 = vld [vmem:[%s188 + $0x110] sm:$0xff]
      %v295 = vld [vmem:[%s188 + $0x118] sm:$0xff]
      %v296 = vld [vmem:[%s188 + $0x120] sm:$0xff]
      %v297 = vld [vmem:[%s188 + $0x128] sm:$0xff]
      %v298 = vld [vmem:[%s188 + $0x130] sm:$0xff]
      %v299 = vld [vmem:[%s188 + $0x138] sm:$0xff]
      %v300 = vld [vmem:[%s188 + $0x140] sm:$0xff]
      %v301 = vld [vmem:[%s188 + $0x148] sm:$0xff]
      %v302 = vld [vmem:[%s188 + $0x150] sm:$0xff]
      %v303 = vld [vmem:[%s188 + $0x158] sm:$0xff]
      %v304 = vld [vmem:[%s188 + $0x160] sm:$0xff]
      %v305 = vld [vmem:[%s188 + $0x168] sm:$0xff]
      %v306 = vld [vmem:[%s188 + $0x170] sm:$0xff]
      %v307 = vld [vmem:[%s188 + $0x178] sm:$0xff]
      %v308 = vld [vmem:[%s188 + $0x180] sm:$0xff]
      %v309 = vld [vmem:[%s188 + $0x188] sm:$0xff]
      %v310 = vld [vmem:[%s188 + $0x190] sm:$0xff]
      %v311 = vld [vmem:[%s188 + $0x198] sm:$0xff]
      %v312 = vld [vmem:[%s188 + $0x1a0] sm:$0xff]
      %v313 = vld [vmem:[%s188 + $0x1a8] sm:$0xff]
      %v314 = vld [vmem:[%s188 + $0x1b0] sm:$0xff]
      %v315 = vld [vmem:[%s188 + $0x1b8] sm:$0xff]
      %v316 = vld [vmem:[%s188 + $0x1c0] sm:$0xff]
      %v317 = vld [vmem:[%s188 + $0x1c8] sm:$0xff]
      %v318 = vld [vmem:[%s188 + $0x1d0] sm:$0xff]
      %v319 = vld [vmem:[%s188 + $0x1d8] sm:$0xff]
      %v320 = vld [vmem:[%s188 + $0x1e0] sm:$0xff]
      %v321 = vld [vmem:[%s188 + $0x1e8] sm:$0xff]
      %v322 = vld [vmem:[%s188 + $0x1f0] sm:$0xff]
      %v323 = vld [vmem:[%s188 + $0x1f8] sm:$0xff]
      %v324 = vld [vmem:[%s2] sm:$0xff]
      %v325 = vld [vmem:[%s2 + $0x8] sm:$0xff]
      %v326 = vld [vmem:[%s2 + $0x10] sm:$0xff]
      %v327 = vld [vmem:[%s2 + $0x18] sm:$0xff]
      %vm328 = vcmask 261120
      %v330 = vsel %vm328, %v196, 0
      %v333 = vsel %vm328, %v197, 0
      %v336 = vsel %vm328, %v198, 0
      %v339 = vsel %vm328, %v199, 0
      %v342 = vsel %vm328, %v200, 0
      %v345 = vsel %vm328, %v201, 0
      %v348 = vsel %vm328, %v202, 0
      %v351 = vsel %vm328, %v203, 0
      %v354 = vsel %vm328, %v204, 0
      %v357 = vsel %vm328, %v205, 0
      %v360 = vsel %vm328, %v206, 0
      %v363 = vsel %vm328, %v207, 0
      %v366 = vsel %vm328, %v208, 0
      %v369 = vsel %vm328, %v209, 0
      %v372 = vsel %vm328, %v210, 0
      %v375 = vsel %vm328, %v211, 0
      %v378 = vsel %vm328, %v212, 0
      %v381 = vsel %vm328, %v213, 0
      %v384 = vsel %vm328, %v214, 0
      %v387 = vsel %vm328, %v215, 0
      %v390 = vsel %vm328, %v216, 0
      %v393 = vsel %vm328, %v217, 0
      %v396 = vsel %vm328, %v218, 0
      %v399 = vsel %vm328, %v219, 0
      %v402 = vsel %vm328, %v220, 0
      %v405 = vsel %vm328, %v221, 0
      %v408 = vsel %vm328, %v222, 0
      %v411 = vsel %vm328, %v223, 0
      %v414 = vsel %vm328, %v224, 0
      %v417 = vsel %vm328, %v225, 0
      %v420 = vsel %vm328, %v226, 0
      %v423 = vsel %vm328, %v227, 0
      %v426 = vsel %vm328, %v228, 0
      %v429 = vsel %vm328, %v229, 0
      %v432 = vsel %vm328, %v230, 0
      %v435 = vsel %vm328, %v231, 0
      %v438 = vsel %vm328, %v232, 0
      %v441 = vsel %vm328, %v233, 0
      %v444 = vsel %vm328, %v234, 0
      %v447 = vsel %vm328, %v235, 0
      %v450 = vsel %vm328, %v236, 0
      %v453 = vsel %vm328, %v237, 0
      %v456 = vsel %vm328, %v238, 0
      %v459 = vsel %vm328, %v239, 0
      %v462 = vsel %vm328, %v240, 0
      %v465 = vsel %vm328, %v241, 0
      %v468 = vsel %vm328, %v242, 0
      %v471 = vsel %vm328, %v243, 0
      %v474 = vsel %vm328, %v244, 0
      %v477 = vsel %vm328, %v245, 0
      %v480 = vsel %vm328, %v246, 0
      %v483 = vsel %vm328, %v247, 0
      %v486 = vsel %vm328, %v248, 0
      %v489 = vsel %vm328, %v249, 0
      %v492 = vsel %vm328, %v250, 0
      %v495 = vsel %vm328, %v251, 0
      %v498 = vsel %vm328, %v252, 0
      %v501 = vsel %vm328, %v253, 0
      %v504 = vsel %vm328, %v254, 0
      %v507 = vsel %vm328, %v255, 0
      %v510 = vsel %vm328, %v256, 0
      %v513 = vsel %vm328, %v257, 0
      %v516 = vsel %vm328, %v258, 0
      %v519 = vsel %vm328, %v259, 0
      %521 = vmatprep.subr.mxu0 0.0
      %522 = vmatpush1.msra.mxu0 %v324
      %523 = vmatprep.subr.mxu0 0.0
      %524 = vmatpush1.msra.mxu0 %v325
      %525 = vmatprep.subr.mxu0 0.0
      %526 = vmatpush1.msra.mxu0 %v326
      %527 = vmatprep.subr.mxu0 0.0
      %528 = vmatpush1.msra.mxu0 %v327
      %529 = vmatprep.subr.mxu0 0.0
      %530 = vmatpush1.msra.mxu0 0.0
      %531 = vmatprep.subr.mxu0 0.0
      %532 = vmatpush1.msra.mxu0 0.0
      %533 = vmatprep.subr.mxu0 0.0
      %534 = vmatpush1.msra.mxu0 0.0
      %535 = vmatprep.subr.mxu0 0.0
      %536 = vmatpush1.msra.mxu0 0.0
      %537 = vmatprep.subr.mxu0 0.0
      %538 = vmatpush1.msra.mxu0 0.0
      %539 = vmatprep.subr.mxu0 0.0
      %540 = vmatpush1.msra.mxu0 0.0
      %541 = vmatprep.subr.mxu0 0.0
      %542 = vmatpush1.msra.mxu0 0.0
      %543 = vmatprep.subr.mxu0 0.0
      %544 = vmatpush1.msra.mxu0 0.0
      %545 = vmatprep.subr.mxu0 0.0
      %546 = vmatpush1.msra.mxu0 0.0
      %547 = vmatprep.subr.mxu0 0.0
      %548 = vmatpush1.msra.mxu0 0.0
      %549 = vmatprep.subr.mxu0 0.0
      %550 = vmatpush1.msra.mxu0 0.0
      %551 = vmatprep.subr.mxu0 0.0
      %552 = vmatpush1.msra.mxu0 0.0
      %553 = vmatprep.subr.mxu0 0.0
      %554 = vmatpush1.msra.mxu0 0.0
      %555 = vmatprep.subr.mxu0 0.0
      %556 = vmatpush1.msra.mxu0 0.0
      %557 = vmatprep.subr.mxu0 0.0
      %558 = vmatpush1.msra.mxu0 0.0
      %559 = vmatprep.subr.mxu0 0.0
      %560 = vmatpush1.msra.mxu0 0.0
      %561 = vmatprep.subr.mxu0 0.0
      %562 = vmatpush1.msra.mxu0 0.0
      %563 = vmatprep.subr.mxu0 0.0
      %564 = vmatpush1.msra.mxu0 0.0
      %565 = vmatprep.subr.mxu0 0.0
      %566 = vmatpush1.msra.mxu0 0.0
      %567 = vmatprep.subr.mxu0 0.0
      %568 = vmatpush1.msra.mxu0 0.0
      %569 = vmatprep.subr.mxu0 0.0
      %570 = vmatpush1.msra.mxu0 0.0
      %571 = vmatprep.subr.mxu0 0.0
      %572 = vmatpush1.msra.mxu0 0.0
      %573 = vmatprep.subr.mxu0 0.0
      %574 = vmatpush1.msra.mxu0 0.0
      %575 = vmatprep.subr.mxu0 0.0
      %576 = vmatpush1.msra.mxu0 0.0
      %577 = vmatprep.subr.mxu0 0.0
      %578 = vmatpush1.msra.mxu0 0.0
      %579 = vmatprep.subr.mxu0 0.0
      %580 = vmatpush1.msra.mxu0 0.0
      %581 = vmatprep.subr.mxu0 0.0
      %582 = vmatpush1.msra.mxu0 0.0
      %583 = vmatprep.subr.mxu0 0.0
      %584 = vmatpush1.msra.mxu0 0.0
      %585 = vmatprep.mubr.f32.mxu0 0.0
      %586 = vmatmul.mubr.f32.gmra.mrb[0].mxu0 %v330
      %v587 = vpop.f32.mrb[0].mxu0
      %v588 = vadd.f32 0.0, %v587
      %v589 = vpop.f32.mrb[0].mxu0
      %590 = vmatprep.mubr.f32.mxu0 0.0
      %591 = vmatmul.mubr.f32.gmra.mrb[0].mxu0 %v333
      %v592 = vpop.f32.mrb[0].mxu0
      %v593 = vadd.f32 0.0, %v592
      %v594 = vpop.f32.mrb[0].mxu0
      %595 = vmatprep.mubr.f32.mxu0 0.0
      %596 = vmatmul.mubr.f32.gmra.mrb[0].mxu0 %v336
      %v597 = vpop.f32.mrb[0].mxu0
      %v598 = vadd.f32 0.0, %v597
      %v599 = vpop.f32.mrb[0].mxu0
      %600 = vmatprep.mubr.f32.mxu0 0.0
      %601 = vmatmul.mubr.f32.gmra.mrb[0].mxu0 %v339
      %v602 = vpop.f32.mrb[0].mxu0
      %v603 = vadd.f32 0.0, %v602
      %v604 = vpop.f32.mrb[0].mxu0
      %605 = vmatprep.mubr.f32.mxu0 0.0
      %606 = vmatmul.mubr.f32.gmra.mrb[0].mxu0 %v342
      %v607 = vpop.f32.mrb[0].mxu0
      %v608 = vadd.f32 0.0, %v607
      %v609 = vpop.f32.mrb[0].mxu0
      %610 = vmatprep.mubr.f32.mxu0 0.0
      %611 = vmatmul.mubr.f32.gmra.mrb[0].mxu0 %v345
      %v612 = vpop.f32.mrb[0].mxu0
      %v613 = vadd.f32 0.0, %v612
      %v614 = vpop.f32.mrb[0].mxu0
      %615 = vmatprep.mubr.f32.mxu0 0.0
      %616 = vmatmul.mubr.f32.gmra.mrb[0].mxu0 %v348
      %v617 = vpop.f32.mrb[0].mxu0
      %v618 = vadd.f32 0.0, %v617
      %v619 = vpop.f32.mrb[0].mxu0
      %620 = vmatprep.mubr.f32.mxu0 0.0
      %621 = vmatmul.mubr.f32.gmra.mrb[0].mxu0 %v351
      %v622 = vpop.f32.mrb[0].mxu0
      %v623 = vadd.f32 0.0, %v622
      %v624 = vpop.f32.mrb[0].mxu0
      %625 = vmatprep.mubr.f32.mxu0 0.0
      %626 = vmatmul.mubr.f32.gmra.mrb[0].mxu0 %v354
      %v627 = vpop.f32.mrb[0].mxu0
      %v628 = vadd.f32 0.0, %v627
      %v629 = vpop.f32.mrb[0].mxu0
      %630 = vmatprep.mubr.f32.mxu0 0.0
      %631 = vmatmul.mubr.f32.gmra.mrb[0].mxu0 %v357
      %v632 = vpop.f32.mrb[0].mxu0
      %v633 = vadd.f32 0.0, %v632
      %v634 = vpop.f32.mrb[0].mxu0
      %635 = vmatprep.mubr.f32.mxu0 0.0
      %636 = vmatmul.mubr.f32.gmra.mrb[0].mxu0 %v360
      %v637 = vpop.f32.mrb[0].mxu0
      %v638 = vadd.f32 0.0, %v637
      %v639 = vpop.f32.mrb[0].mxu0
      %640 = vmatprep.mubr.f32.mxu0 0.0
      %641 = vmatmul.mubr.f32.gmra.mrb[0].mxu0 %v363
      %v642 = vpop.f32.mrb[0].mxu0
      %v643 = vadd.f32 0.0, %v642
      %v644 = vpop.f32.mrb[0].mxu0
      %645 = vmatprep.mubr.f32.mxu0 0.0
      %646 = vmatmul.mubr.f32.gmra.mrb[0].mxu0 %v366
      %v647 = vpop.f32.mrb[0].mxu0
      %v648 = vadd.f32 0.0, %v647
      %v649 = vpop.f32.mrb[0].mxu0
      %650 = vmatprep.mubr.f32.mxu0 0.0
      %651 = vmatmul.mubr.f32.gmra.mrb[0].mxu0 %v369
      %v652 = vpop.f32.mrb[0].mxu0
      %v653 = vadd.f32 0.0, %v652
      %v654 = vpop.f32.mrb[0].mxu0
      %655 = vmatprep.mubr.f32.mxu0 0.0
      %656 = vmatmul.mubr.f32.gmra.mrb[0].mxu0 %v372
      %v657 = vpop.f32.mrb[0].mxu0
      %v658 = vadd.f32 0.0, %v657
      %v659 = vpop.f32.mrb[0].mxu0
      %660 = vmatprep.mubr.f32.mxu0 0.0
      %661 = vmatmul.mubr.f32.gmra.mrb[0].mxu0 %v375
      %v662 = vpop.f32.mrb[0].mxu0
      %v663 = vadd.f32 0.0, %v662
      %v664 = vpop.f32.mrb[0].mxu0
      %665 = vmatprep.mubr.f32.mxu0 0.0
      %666 = vmatmul.mubr.f32.gmra.mrb[0].mxu0 %v378
      %v667 = vpop.f32.mrb[0].mxu0
      %v668 = vadd.f32 0.0, %v667
      %v669 = vpop.f32.mrb[0].mxu0
      %670 = vmatprep.mubr.f32.mxu0 0.0
      %671 = vmatmul.mubr.f32.gmra.mrb[0].mxu0 %v381
      %v672 = vpop.f32.mrb[0].mxu0
      %v673 = vadd.f32 0.0, %v672
      %v674 = vpop.f32.mrb[0].mxu0
      %675 = vmatprep.mubr.f32.mxu0 0.0
      %676 = vmatmul.mubr.f32.gmra.mrb[0].mxu0 %v384
      %v677 = vpop.f32.mrb[0].mxu0
      %v678 = vadd.f32 0.0, %v677
      %v679 = vpop.f32.mrb[0].mxu0
      %680 = vmatprep.mubr.f32.mxu0 0.0
      %681 = vmatmul.mubr.f32.gmra.mrb[0].mxu0 %v387
      %v682 = vpop.f32.mrb[0].mxu0
      %v683 = vadd.f32 0.0, %v682
      %v684 = vpop.f32.mrb[0].mxu0
      %685 = vmatprep.mubr.f32.mxu0 0.0
      %686 = vmatmul.mubr.f32.gmra.mrb[0].mxu0 %v390
      %v687 = vpop.f32.mrb[0].mxu0
      %v688 = vadd.f32 0.0, %v687
      %v689 = vpop.f32.mrb[0].mxu0
      %690 = vmatprep.mubr.f32.mxu0 0.0
      %691 = vmatmul.mubr.f32.gmra.mrb[0].mxu0 %v393
      %v692 = vpop.f32.mrb[0].mxu0
      %v693 = vadd.f32 0.0, %v692
      %v694 = vpop.f32.mrb[0].mxu0
      %695 = vmatprep.mubr.f32.mxu0 0.0
      %696 = vmatmul.mubr.f32.gmra.mrb[0].mxu0 %v396
      %v697 = vpop.f32.mrb[0].mxu0
      %v698 = vadd.f32 0.0, %v697
      %v699 = vpop.f32.mrb[0].mxu0
      %700 = vmatprep.mubr.f32.mxu0 0.0
      %701 = vmatmul.mubr.f32.gmra.mrb[0].mxu0 %v399
      %v702 = vpop.f32.mrb[0].mxu0
      %v703 = vadd.f32 0.0, %v702
      %v704 = vpop.f32.mrb[0].mxu0
      %705 = vmatprep.mubr.f32.mxu0 0.0
      %706 = vmatmul.mubr.f32.gmra.mrb[0].mxu0 %v402
      %v707 = vpop.f32.mrb[0].mxu0
      %v708 = vadd.f32 0.0, %v707
      %v709 = vpop.f32.mrb[0].mxu0
      %710 = vmatprep.mubr.f32.mxu0 0.0
      %711 = vmatmul.mubr.f32.gmra.mrb[0].mxu0 %v405
      %v712 = vpop.f32.mrb[0].mxu0
      %v713 = vadd.f32 0.0, %v712
      %v714 = vpop.f32.mrb[0].mxu0
      %715 = vmatprep.mubr.f32.mxu0 0.0
      %716 = vmatmul.mubr.f32.gmra.mrb[0].mxu0 %v408
      %v717 = vpop.f32.mrb[0].mxu0
      %v718 = vadd.f32 0.0, %v717
      %v719 = vpop.f32.mrb[0].mxu0
      %720 = vmatprep.mubr.f32.mxu0 0.0
      %721 = vmatmul.mubr.f32.gmra.mrb[0].mxu0 %v411
      %v722 = vpop.f32.mrb[0].mxu0
      %v723 = vadd.f32 0.0, %v722
      %v724 = vpop.f32.mrb[0].mxu0
      %725 = vmatprep.mubr.f32.mxu0 0.0
      %726 = vmatmul.mubr.f32.gmra.mrb[0].mxu0 %v414
      %v727 = vpop.f32.mrb[0].mxu0
      %v728 = vadd.f32 0.0, %v727
      %v729 = vpop.f32.mrb[0].mxu0
      %730 = vmatprep.mubr.f32.mxu0 0.0
      %731 = vmatmul.mubr.f32.gmra.mrb[0].mxu0 %v417
      %v732 = vpop.f32.mrb[0].mxu0
      %v733 = vadd.f32 0.0, %v732
      %v734 = vpop.f32.mrb[0].mxu0
      %735 = vmatprep.mubr.f32.mxu0 0.0
      %736 = vmatmul.mubr.f32.gmra.mrb[0].mxu0 %v420
      %v737 = vpop.f32.mrb[0].mxu0
      %v738 = vadd.f32 0.0, %v737
      %v739 = vpop.f32.mrb[0].mxu0
      %740 = vmatprep.mubr.f32.mxu0 0.0
      %741 = vmatmul.mubr.f32.gmra.mrb[0].mxu0 %v423
      %v742 = vpop.f32.mrb[0].mxu0
      %v743 = vadd.f32 0.0, %v742
      %v744 = vpop.f32.mrb[0].mxu0
      %745 = vmatprep.mubr.f32.mxu0 0.0
      %746 = vmatmul.mubr.f32.gmra.mrb[0].mxu0 %v426
      %v747 = vpop.f32.mrb[0].mxu0
      %v748 = vadd.f32 0.0, %v747
      %v749 = vpop.f32.mrb[0].mxu0
      %750 = vmatprep.mubr.f32.mxu0 0.0
      %751 = vmatmul.mubr.f32.gmra.mrb[0].mxu0 %v429
      %v752 = vpop.f32.mrb[0].mxu0
      %v753 = vadd.f32 0.0, %v752
      %v754 = vpop.f32.mrb[0].mxu0
      %755 = vmatprep.mubr.f32.mxu0 0.0
      %756 = vmatmul.mubr.f32.gmra.mrb[0].mxu0 %v432
      %v757 = vpop.f32.mrb[0].mxu0
      %v758 = vadd.f32 0.0, %v757
      %v759 = vpop.f32.mrb[0].mxu0
      %760 = vmatprep.mubr.f32.mxu0 0.0
      %761 = vmatmul.mubr.f32.gmra.mrb[0].mxu0 %v435
      %v762 = vpop.f32.mrb[0].mxu0
      %v763 = vadd.f32 0.0, %v762
      %v764 = vpop.f32.mrb[0].mxu0
      %765 = vmatprep.mubr.f32.mxu0 0.0
      %766 = vmatmul.mubr.f32.gmra.mrb[0].mxu0 %v438
      %v767 = vpop.f32.mrb[0].mxu0
      %v768 = vadd.f32 0.0, %v767
      %v769 = vpop.f32.mrb[0].mxu0
      %770 = vmatprep.mubr.f32.mxu0 0.0
      %771 = vmatmul.mubr.f32.gmra.mrb[0].mxu0 %v441
      %v772 = vpop.f32.mrb[0].mxu0
      %v773 = vadd.f32 0.0, %v772
      %v774 = vpop.f32.mrb[0].mxu0
      %775 = vmatprep.mubr.f32.mxu0 0.0
      %776 = vmatmul.mubr.f32.gmra.mrb[0].mxu0 %v444
      %v777 = vpop.f32.mrb[0].mxu0
      %v778 = vadd.f32 0.0, %v777
      %v779 = vpop.f32.mrb[0].mxu0
      %780 = vmatprep.mubr.f32.mxu0 0.0
      %781 = vmatmul.mubr.f32.gmra.mrb[0].mxu0 %v447
      %v782 = vpop.f32.mrb[0].mxu0
      %v783 = vadd.f32 0.0, %v782
      %v784 = vpop.f32.mrb[0].mxu0
      %785 = vmatprep.mubr.f32.mxu0 0.0
      %786 = vmatmul.mubr.f32.gmra.mrb[0].mxu0 %v450
      %v787 = vpop.f32.mrb[0].mxu0
      %v788 = vadd.f32 0.0, %v787
      %v789 = vpop.f32.mrb[0].mxu0
      %790 = vmatprep.mubr.f32.mxu0 0.0
      %791 = vmatmul.mubr.f32.gmra.mrb[0].mxu0 %v453
      %v792 = vpop.f32.mrb[0].mxu0
      %v793 = vadd.f32 0.0, %v792
      %v794 = vpop.f32.mrb[0].mxu0
      %795 = vmatprep.mubr.f32.mxu0 0.0
      %796 = vmatmul.mubr.f32.gmra.mrb[0].mxu0 %v456
      %v797 = vpop.f32.mrb[0].mxu0
      %v798 = vadd.f32 0.0, %v797
      %v799 = vpop.f32.mrb[0].mxu0
      %800 = vmatprep.mubr.f32.mxu0 0.0
      %801 = vmatmul.mubr.f32.gmra.mrb[0].mxu0 %v459
      %v802 = vpop.f32.mrb[0].mxu0
      %v803 = vadd.f32 0.0, %v802
      %v804 = vpop.f32.mrb[0].mxu0
      %805 = vmatprep.mubr.f32.mxu0 0.0
      %806 = vmatmul.mubr.f32.gmra.mrb[0].mxu0 %v462
      %v807 = vpop.f32.mrb[0].mxu0
      %v808 = vadd.f32 0.0, %v807
      %v809 = vpop.f32.mrb[0].mxu0
      %810 = vmatprep.mubr.f32.mxu0 0.0
      %811 = vmatmul.mubr.f32.gmra.mrb[0].mxu0 %v465
      %v812 = vpop.f32.mrb[0].mxu0
      %v813 = vadd.f32 0.0, %v812
      %v814 = vpop.f32.mrb[0].mxu0
      %815 = vmatprep.mubr.f32.mxu0 0.0
      %816 = vmatmul.mubr.f32.gmra.mrb[0].mxu0 %v468
      %v817 = vpop.f32.mrb[0].mxu0
      %v818 = vadd.f32 0.0, %v817
      %v819 = vpop.f32.mrb[0].mxu0
      %820 = vmatprep.mubr.f32.mxu0 0.0
      %821 = vmatmul.mubr.f32.gmra.mrb[0].mxu0 %v471
      %v822 = vpop.f32.mrb[0].mxu0
      %v823 = vadd.f32 0.0, %v822
      %v824 = vpop.f32.mrb[0].mxu0
      %825 = vmatprep.mubr.f32.mxu0 0.0
      %826 = vmatmul.mubr.f32.gmra.mrb[0].mxu0 %v474
      %v827 = vpop.f32.mrb[0].mxu0
      %v828 = vadd.f32 0.0, %v827
      %v829 = vpop.f32.mrb[0].mxu0
      %830 = vmatprep.mubr.f32.mxu0 0.0
      %831 = vmatmul.mubr.f32.gmra.mrb[0].mxu0 %v477
      %v832 = vpop.f32.mrb[0].mxu0
      %v833 = vadd.f32 0.0, %v832
      %v834 = vpop.f32.mrb[0].mxu0
      %835 = vmatprep.mubr.f32.mxu0 0.0
      %836 = vmatmul.mubr.f32.gmra.mrb[0].mxu0 %v480
      %v837 = vpop.f32.mrb[0].mxu0
      %v838 = vadd.f32 0.0, %v837
      %v839 = vpop.f32.mrb[0].mxu0
      %840 = vmatprep.mubr.f32.mxu0 0.0
      %841 = vmatmul.mubr.f32.gmra.mrb[0].mxu0 %v483
      %v842 = vpop.f32.mrb[0].mxu0
      %v843 = vadd.f32 0.0, %v842
      %v844 = vpop.f32.mrb[0].mxu0
      %845 = vmatprep.mubr.f32.mxu0 0.0
      %846 = vmatmul.mubr.f32.gmra.mrb[0].mxu0 %v486
      %v847 = vpop.f32.mrb[0].mxu0
      %v848 = vadd.f32 0.0, %v847
      %v849 = vpop.f32.mrb[0].mxu0
      %850 = vmatprep.mubr.f32.mxu0 0.0
      %851 = vmatmul.mubr.f32.gmra.mrb[0].mxu0 %v489
      %v852 = vpop.f32.mrb[0].mxu0
      %v853 = vadd.f32 0.0, %v852
      %v854 = vpop.f32.mrb[0].mxu0
      %855 = vmatprep.mubr.f32.mxu0 0.0
      %856 = vmatmul.mubr.f32.gmra.mrb[0].mxu0 %v492
      %v857 = vpop.f32.mrb[0].mxu0
      %v858 = vadd.f32 0.0, %v857
      %v859 = vpop.f32.mrb[0].mxu0
      %860 = vmatprep.mubr.f32.mxu0 0.0
      %861 = vmatmul.mubr.f32.gmra.mrb[0].mxu0 %v495
      %v862 = vpop.f32.mrb[0].mxu0
      %v863 = vadd.f32 0.0, %v862
      %v864 = vpop.f32.mrb[0].mxu0
      %865 = vmatprep.mubr.f32.mxu0 0.0
      %866 = vmatmul.mubr.f32.gmra.mrb[0].mxu0 %v498
      %v867 = vpop.f32.mrb[0].mxu0
      %v868 = vadd.f32 0.0, %v867
      %v869 = vpop.f32.mrb[0].mxu0
      %870 = vmatprep.mubr.f32.mxu0 0.0
      %871 = vmatmul.mubr.f32.gmra.mrb[0].mxu0 %v501
      %v872 = vpop.f32.mrb[0].mxu0
      %v873 = vadd.f32 0.0, %v872
      %v874 = vpop.f32.mrb[0].mxu0
      %875 = vmatprep.mubr.f32.mxu0 0.0
      %876 = vmatmul.mubr.f32.gmra.mrb[0].mxu0 %v504
      %v877 = vpop.f32.mrb[0].mxu0
      %v878 = vadd.f32 0.0, %v877
      %v879 = vpop.f32.mrb[0].mxu0
      %880 = vmatprep.mubr.f32.mxu0 0.0
      %881 = vmatmul.mubr.f32.gmra.mrb[0].mxu0 %v507
      %v882 = vpop.f32.mrb[0].mxu0
      %v883 = vadd.f32 0.0, %v882
      %v884 = vpop.f32.mrb[0].mxu0
      %885 = vmatprep.mubr.f32.mxu0 0.0
      %886 = vmatmul.mubr.f32.gmra.mrb[0].mxu0 %v510
      %v887 = vpop.f32.mrb[0].mxu0
      %v888 = vadd.f32 0.0, %v887
      %v889 = vpop.f32.mrb[0].mxu0
      %890 = vmatprep.mubr.f32.mxu0 0.0
      %891 = vmatmul.mubr.f32.gmra.mrb[0].mxu0 %v513
      %v892 = vpop.f32.mrb[0].mxu0
      %v893 = vadd.f32 0.0, %v892
      %v894 = vpop.f32.mrb[0].mxu0
      %895 = vmatprep.mubr.f32.mxu0 0.0
      %896 = vmatmul.mubr.f32.gmra.mrb[0].mxu0 %v516
      %v897 = vpop.f32.mrb[0].mxu0
      %v898 = vadd.f32 0.0, %v897
      %v899 = vpop.f32.mrb[0].mxu0
      %900 = vmatprep.mubr.f32.mxu0 0.0
      %901 = vmatmul.mubr.f32.gmra.mrb[0].mxu0 %v519
      %v902 = vpop.f32.mrb[0].mxu0
      %v903 = vadd.f32 0.0, %v902
      %v904 = vpop.f32.mrb[0].mxu0
      %905 = vdwg.mxu0
      %v906 = vld [vmem:[%s2 + $0xa0] sm:$0xff]
      %908 = vset.pattern.permute.xlu0 1
      %909 = vperm.xlu0 %908, %v588
      %v910 = vpop.permute.xlu0 %909
      %913 = vset.pattern.permute.xlu0 1
      %914 = vperm.xlu0 %913, %v593
      %v915 = vpop.permute.xlu0 %914
      %918 = vset.pattern.permute.xlu0 1
      %919 = vperm.xlu0 %918, %v598
      %v920 = vpop.permute.xlu0 %919
      %923 = vset.pattern.permute.xlu0 1
      %924 = vperm.xlu0 %923, %v603
      %v925 = vpop.permute.xlu0 %924
      %928 = vset.pattern.permute.xlu0 1
      %929 = vperm.xlu0 %928, %v608
      %v930 = vpop.permute.xlu0 %929
      %933 = vset.pattern.permute.xlu0 1
      %934 = vperm.xlu0 %933, %v613
      %v935 = vpop.permute.xlu0 %934
      %938 = vset.pattern.permute.xlu0 1
      %939 = vperm.xlu0 %938, %v618
      %v940 = vpop.permute.xlu0 %939
      %943 = vset.pattern.permute.xlu0 1
      %944 = vperm.xlu0 %943, %v623
      %v945 = vpop.permute.xlu0 %944
      %948 = vset.pattern.permute.xlu0 1
      %949 = vperm.xlu0 %948, %v628
      %v950 = vpop.permute.xlu0 %949
      %953 = vset.pattern.permute.xlu0 1
      %954 = vperm.xlu0 %953, %v633
      %v955 = vpop.permute.xlu0 %954
      %958 = vset.pattern.permute.xlu0 1
      %959 = vperm.xlu0 %958, %v638
      %v960 = vpop.permute.xlu0 %959
      %963 = vset.pattern.permute.xlu0 1
      %964 = vperm.xlu0 %963, %v643
      %v965 = vpop.permute.xlu0 %964
      %968 = vset.pattern.permute.xlu0 1
      %969 = vperm.xlu0 %968, %v648
      %v970 = vpop.permute.xlu0 %969
      %973 = vset.pattern.permute.xlu0 1
      %974 = vperm.xlu0 %973, %v653
      %v975 = vpop.permute.xlu0 %974
      %978 = vset.pattern.permute.xlu0 1
      %979 = vperm.xlu0 %978, %v658
      %v980 = vpop.permute.xlu0 %979
      %983 = vset.pattern.permute.xlu0 1
      %984 = vperm.xlu0 %983, %v663
      %v985 = vpop.permute.xlu0 %984
      %988 = vset.pattern.permute.xlu0 1
      %989 = vperm.xlu0 %988, %v668
      %v990 = vpop.permute.xlu0 %989
      %993 = vset.pattern.permute.xlu0 1
      %994 = vperm.xlu0 %993, %v673
      %v995 = vpop.permute.xlu0 %994
      %998 = vset.pattern.permute.xlu0 1
      %999 = vperm.xlu0 %998, %v678
      %v1000 = vpop.permute.xlu0 %999
      %1003 = vset.pattern.permute.xlu0 1
      %1004 = vperm.xlu0 %1003, %v683
      %v1005 = vpop.permute.xlu0 %1004
      %1008 = vset.pattern.permute.xlu0 1
      %1009 = vperm.xlu0 %1008, %v688
      %v1010 = vpop.permute.xlu0 %1009
      %1013 = vset.pattern.permute.xlu0 1
      %1014 = vperm.xlu0 %1013, %v693
      %v1015 = vpop.permute.xlu0 %1014
      %1018 = vset.pattern.permute.xlu0 1
      %1019 = vperm.xlu0 %1018, %v698
      %v1020 = vpop.permute.xlu0 %1019
      %1023 = vset.pattern.permute.xlu0 1
      %1024 = vperm.xlu0 %1023, %v703
      %v1025 = vpop.permute.xlu0 %1024
      %1028 = vset.pattern.permute.xlu0 1
      %1029 = vperm.xlu0 %1028, %v708
      %v1030 = vpop.permute.xlu0 %1029
      %1033 = vset.pattern.permute.xlu0 1
      %1034 = vperm.xlu0 %1033, %v713
      %v1035 = vpop.permute.xlu0 %1034
      %1038 = vset.pattern.permute.xlu0 1
      %1039 = vperm.xlu0 %1038, %v718
      %v1040 = vpop.permute.xlu0 %1039
      %1043 = vset.pattern.permute.xlu0 1
      %1044 = vperm.xlu0 %1043, %v723
      %v1045 = vpop.permute.xlu0 %1044
      %1048 = vset.pattern.permute.xlu0 1
      %1049 = vperm.xlu0 %1048, %v728
      %v1050 = vpop.permute.xlu0 %1049
      %1053 = vset.pattern.permute.xlu0 1
      %1054 = vperm.xlu0 %1053, %v733
      %v1055 = vpop.permute.xlu0 %1054
      %1058 = vset.pattern.permute.xlu0 1
      %1059 = vperm.xlu0 %1058, %v738
      %v1060 = vpop.permute.xlu0 %1059
      %1063 = vset.pattern.permute.xlu0 1
      %1064 = vperm.xlu0 %1063, %v743
      %v1065 = vpop.permute.xlu0 %1064
      %1068 = vset.pattern.permute.xlu0 1
      %1069 = vperm.xlu0 %1068, %v748
      %v1070 = vpop.permute.xlu0 %1069
      %1073 = vset.pattern.permute.xlu0 1
      %1074 = vperm.xlu0 %1073, %v753
      %v1075 = vpop.permute.xlu0 %1074
      %1078 = vset.pattern.permute.xlu0 1
      %1079 = vperm.xlu0 %1078, %v758
      %v1080 = vpop.permute.xlu0 %1079
      %1083 = vset.pattern.permute.xlu0 1
      %1084 = vperm.xlu0 %1083, %v763
      %v1085 = vpop.permute.xlu0 %1084
      %1088 = vset.pattern.permute.xlu0 1
      %1089 = vperm.xlu0 %1088, %v768
      %v1090 = vpop.permute.xlu0 %1089
      %1093 = vset.pattern.permute.xlu0 1
      %1094 = vperm.xlu0 %1093, %v773
      %v1095 = vpop.permute.xlu0 %1094
      %1098 = vset.pattern.permute.xlu0 1
      %1099 = vperm.xlu0 %1098, %v778
      %v1100 = vpop.permute.xlu0 %1099
      %1103 = vset.pattern.permute.xlu0 1
      %1104 = vperm.xlu0 %1103, %v783
      %v1105 = vpop.permute.xlu0 %1104
      %1108 = vset.pattern.permute.xlu0 1
      %1109 = vperm.xlu0 %1108, %v788
      %v1110 = vpop.permute.xlu0 %1109
      %1113 = vset.pattern.permute.xlu0 1
      %1114 = vperm.xlu0 %1113, %v793
      %v1115 = vpop.permute.xlu0 %1114
      %1118 = vset.pattern.permute.xlu0 1
      %1119 = vperm.xlu0 %1118, %v798
      %v1120 = vpop.permute.xlu0 %1119
      %1123 = vset.pattern.permute.xlu0 1
      %1124 = vperm.xlu0 %1123, %v803
      %v1125 = vpop.permute.xlu0 %1124
      %1128 = vset.pattern.permute.xlu0 1
      %1129 = vperm.xlu0 %1128, %v808
      %v1130 = vpop.permute.xlu0 %1129
      %1133 = vset.pattern.permute.xlu0 1
      %1134 = vperm.xlu0 %1133, %v813
      %v1135 = vpop.permute.xlu0 %1134
      %1138 = vset.pattern.permute.xlu0 1
      %1139 = vperm.xlu0 %1138, %v818
      %v1140 = vpop.permute.xlu0 %1139
      %1143 = vset.pattern.permute.xlu0 1
      %1144 = vperm.xlu0 %1143, %v823
      %v1145 = vpop.permute.xlu0 %1144
      %1148 = vset.pattern.permute.xlu0 1
      %1149 = vperm.xlu0 %1148, %v828
      %v1150 = vpop.permute.xlu0 %1149
      %1153 = vset.pattern.permute.xlu0 1
      %1154 = vperm.xlu0 %1153, %v833
      %v1155 = vpop.permute.xlu0 %1154
      %1158 = vset.pattern.permute.xlu0 1
      %1159 = vperm.xlu0 %1158, %v838
      %v1160 = vpop.permute.xlu0 %1159
      %1163 = vset.pattern.permute.xlu0 1
      %1164 = vperm.xlu0 %1163, %v843
      %v1165 = vpop.permute.xlu0 %1164
      %1168 = vset.pattern.permute.xlu0 1
      %1169 = vperm.xlu0 %1168, %v848
      %v1170 = vpop.permute.xlu0 %1169
      %1173 = vset.pattern.permute.xlu0 1
      %1174 = vperm.xlu0 %1173, %v853
      %v1175 = vpop.permute.xlu0 %1174
      %1178 = vset.pattern.permute.xlu0 1
      %1179 = vperm.xlu0 %1178, %v858
      %v1180 = vpop.permute.xlu0 %1179
      %1183 = vset.pattern.permute.xlu0 1
      %1184 = vperm.xlu0 %1183, %v863
      %v1185 = vpop.permute.xlu0 %1184
      %1188 = vset.pattern.permute.xlu0 1
      %1189 = vperm.xlu0 %1188, %v868
      %v1190 = vpop.permute.xlu0 %1189
      %1193 = vset.pattern.permute.xlu0 1
      %1194 = vperm.xlu0 %1193, %v873
      %v1195 = vpop.permute.xlu0 %1194
      %1198 = vset.pattern.permute.xlu0 1
      %1199 = vperm.xlu0 %1198, %v878
      %v1200 = vpop.permute.xlu0 %1199
      %1203 = vset.pattern.permute.xlu0 1
      %1204 = vperm.xlu0 %1203, %v883
      %v1205 = vpop.permute.xlu0 %1204
      %1208 = vset.pattern.permute.xlu0 1
      %1209 = vperm.xlu0 %1208, %v888
      %v1210 = vpop.permute.xlu0 %1209
      %1213 = vset.pattern.permute.xlu0 1
      %1214 = vperm.xlu0 %1213, %v893
      %v1215 = vpop.permute.xlu0 %1214
      %1218 = vset.pattern.permute.xlu0 1
      %1219 = vperm.xlu0 %1218, %v898
      %v1220 = vpop.permute.xlu0 %1219
      %1223 = vset.pattern.permute.xlu0 1
      %1224 = vperm.xlu0 %1223, %v903
      %v1225 = vpop.permute.xlu0 %1224
      %v1227 = vlaneseq
      %v1228 = vshrl.u32 %v1227, 7
      %v1229 = vsub.s32 0, %v1228
      %v1230 = vrot.slane %v906, %v1229
      %v1231 = vmul.f32 %v910, %v1230
      %v1232 = vmul.f32 %v915, %v1230
      %v1233 = vmul.f32 %v920, %v1230
      %v1234 = vmul.f32 %v925, %v1230
      %v1235 = vmul.f32 %v930, %v1230
      %v1236 = vmul.f32 %v935, %v1230
      %v1237 = vmul.f32 %v940, %v1230
      %v1238 = vmul.f32 %v945, %v1230
      %v1239 = vmul.f32 %v950, %v1230
      %v1240 = vmul.f32 %v955, %v1230
      %v1241 = vmul.f32 %v960, %v1230
      %v1242 = vmul.f32 %v965, %v1230
      %v1243 = vmul.f32 %v970, %v1230
      %v1244 = vmul.f32 %v975, %v1230
      %v1245 = vmul.f32 %v980, %v1230
      %v1246 = vmul.f32 %v985, %v1230
      %v1247 = vmul.f32 %v990, %v1230
      %v1248 = vmul.f32 %v995, %v1230
      %v1249 = vmul.f32 %v1000, %v1230
      %v1250 = vmul.f32 %v1005, %v1230
      %v1251 = vmul.f32 %v1010, %v1230
      %v1252 = vmul.f32 %v1015, %v1230
      %v1253 = vmul.f32 %v1020, %v1230
      %v1254 = vmul.f32 %v1025, %v1230
      %v1255 = vmul.f32 %v1030, %v1230
      %v1256 = vmul.f32 %v1035, %v1230
      %v1257 = vmul.f32 %v1040, %v1230
      %v1258 = vmul.f32 %v1045, %v1230
      %v1259 = vmul.f32 %v1050, %v1230
      %v1260 = vmul.f32 %v1055, %v1230
      %v1261 = vmul.f32 %v1060, %v1230
      %v1262 = vmul.f32 %v1065, %v1230
      %v1263 = vmul.f32 %v1070, %v1230
      %v1264 = vmul.f32 %v1075, %v1230
      %v1265 = vmul.f32 %v1080, %v1230
      %v1266 = vmul.f32 %v1085, %v1230
      %v1267 = vmul.f32 %v1090, %v1230
      %v1268 = vmul.f32 %v1095, %v1230
      %v1269 = vmul.f32 %v1100, %v1230
      %v1270 = vmul.f32 %v1105, %v1230
      %v1271 = vmul.f32 %v1110, %v1230
      %v1272 = vmul.f32 %v1115, %v1230
      %v1273 = vmul.f32 %v1120, %v1230
      %v1274 = vmul.f32 %v1125, %v1230
      %v1275 = vmul.f32 %v1130, %v1230
      %v1276 = vmul.f32 %v1135, %v1230
      %v1277 = vmul.f32 %v1140, %v1230
      %v1278 = vmul.f32 %v1145, %v1230
      %v1279 = vmul.f32 %v1150, %v1230
      %v1280 = vmul.f32 %v1155, %v1230
      %v1281 = vmul.f32 %v1160, %v1230
      %v1282 = vmul.f32 %v1165, %v1230
      %v1283 = vmul.f32 %v1170, %v1230
      %v1284 = vmul.f32 %v1175, %v1230
      %v1285 = vmul.f32 %v1180, %v1230
      %v1286 = vmul.f32 %v1185, %v1230
      %v1287 = vmul.f32 %v1190, %v1230
      %v1288 = vmul.f32 %v1195, %v1230
      %v1289 = vmul.f32 %v1200, %v1230
      %v1290 = vmul.f32 %v1205, %v1230
      %v1291 = vmul.f32 %v1210, %v1230
      %v1292 = vmul.f32 %v1215, %v1230
      %v1293 = vmul.f32 %v1220, %v1230
      %v1294 = vmul.f32 %v1225, %v1230
      %1295 = vset.pattern.permute.xlu0 2
      %1296 = vperm.xlu0 %1295, %v588
      %v1297 = vpop.permute.xlu0 %1296
      %1299 = vset.pattern.permute.xlu0 2
      %1300 = vperm.xlu0 %1299, %v593
      %v1301 = vpop.permute.xlu0 %1300
      %1303 = vset.pattern.permute.xlu0 2
      %1304 = vperm.xlu0 %1303, %v598
      %v1305 = vpop.permute.xlu0 %1304
      %1307 = vset.pattern.permute.xlu0 2
      %1308 = vperm.xlu0 %1307, %v603
      %v1309 = vpop.permute.xlu0 %1308
      %1311 = vset.pattern.permute.xlu0 2
      %1312 = vperm.xlu0 %1311, %v608
      %v1313 = vpop.permute.xlu0 %1312
      %1315 = vset.pattern.permute.xlu0 2
      %1316 = vperm.xlu0 %1315, %v613
      %v1317 = vpop.permute.xlu0 %1316
      %1319 = vset.pattern.permute.xlu0 2
      %1320 = vperm.xlu0 %1319, %v618
      %v1321 = vpop.permute.xlu0 %1320
      %1323 = vset.pattern.permute.xlu0 2
      %1324 = vperm.xlu0 %1323, %v623
      %v1325 = vpop.permute.xlu0 %1324
      %1327 = vset.pattern.permute.xlu0 2
      %1328 = vperm.xlu0 %1327, %v628
      %v1329 = vpop.permute.xlu0 %1328
      %1331 = vset.pattern.permute.xlu0 2
      %1332 = vperm.xlu0 %1331, %v633
      %v1333 = vpop.permute.xlu0 %1332
      %1335 = vset.pattern.permute.xlu0 2
      %1336 = vperm.xlu0 %1335, %v638
      %v1337 = vpop.permute.xlu0 %1336
      %1339 = vset.pattern.permute.xlu0 2
      %1340 = vperm.xlu0 %1339, %v643
      %v1341 = vpop.permute.xlu0 %1340
      %1343 = vset.pattern.permute.xlu0 2
      %1344 = vperm.xlu0 %1343, %v648
      %v1345 = vpop.permute.xlu0 %1344
      %1347 = vset.pattern.permute.xlu0 2
      %1348 = vperm.xlu0 %1347, %v653
      %v1349 = vpop.permute.xlu0 %1348
      %1351 = vset.pattern.permute.xlu0 2
      %1352 = vperm.xlu0 %1351, %v658
      %v1353 = vpop.permute.xlu0 %1352
      %1355 = vset.pattern.permute.xlu0 2
      %1356 = vperm.xlu0 %1355, %v663
      %v1357 = vpop.permute.xlu0 %1356
      %1359 = vset.pattern.permute.xlu0 2
      %1360 = vperm.xlu0 %1359, %v668
      %v1361 = vpop.permute.xlu0 %1360
      %1363 = vset.pattern.permute.xlu0 2
      %1364 = vperm.xlu0 %1363, %v673
      %v1365 = vpop.permute.xlu0 %1364
      %1367 = vset.pattern.permute.xlu0 2
      %1368 = vperm.xlu0 %1367, %v678
      %v1369 = vpop.permute.xlu0 %1368
      %1371 = vset.pattern.permute.xlu0 2
      %1372 = vperm.xlu0 %1371, %v683
      %v1373 = vpop.permute.xlu0 %1372
      %1375 = vset.pattern.permute.xlu0 2
      %1376 = vperm.xlu0 %1375, %v688
      %v1377 = vpop.permute.xlu0 %1376
      %1379 = vset.pattern.permute.xlu0 2
      %1380 = vperm.xlu0 %1379, %v693
      %v1381 = vpop.permute.xlu0 %1380
      %1383 = vset.pattern.permute.xlu0 2
      %1384 = vperm.xlu0 %1383, %v698
      %v1385 = vpop.permute.xlu0 %1384
      %1387 = vset.pattern.permute.xlu0 2
      %1388 = vperm.xlu0 %1387, %v703
      %v1389 = vpop.permute.xlu0 %1388
      %1391 = vset.pattern.permute.xlu0 2
      %1392 = vperm.xlu0 %1391, %v708
      %v1393 = vpop.permute.xlu0 %1392
      %1395 = vset.pattern.permute.xlu0 2
      %1396 = vperm.xlu0 %1395, %v713
      %v1397 = vpop.permute.xlu0 %1396
      %1399 = vset.pattern.permute.xlu0 2
      %1400 = vperm.xlu0 %1399, %v718
      %v1401 = vpop.permute.xlu0 %1400
      %1403 = vset.pattern.permute.xlu0 2
      %1404 = vperm.xlu0 %1403, %v723
      %v1405 = vpop.permute.xlu0 %1404
      %1407 = vset.pattern.permute.xlu0 2
      %1408 = vperm.xlu0 %1407, %v728
      %v1409 = vpop.permute.xlu0 %1408
      %1411 = vset.pattern.permute.xlu0 2
      %1412 = vperm.xlu0 %1411, %v733
      %v1413 = vpop.permute.xlu0 %1412
      %1415 = vset.pattern.permute.xlu0 2
      %1416 = vperm.xlu0 %1415, %v738
      %v1417 = vpop.permute.xlu0 %1416
      %1419 = vset.pattern.permute.xlu0 2
      %1420 = vperm.xlu0 %1419, %v743
      %v1421 = vpop.permute.xlu0 %1420
      %1423 = vset.pattern.permute.xlu0 2
      %1424 = vperm.xlu0 %1423, %v748
      %v1425 = vpop.permute.xlu0 %1424
      %1427 = vset.pattern.permute.xlu0 2
      %1428 = vperm.xlu0 %1427, %v753
      %v1429 = vpop.permute.xlu0 %1428
      %1431 = vset.pattern.permute.xlu0 2
      %1432 = vperm.xlu0 %1431, %v758
      %v1433 = vpop.permute.xlu0 %1432
      %1435 = vset.pattern.permute.xlu0 2
      %1436 = vperm.xlu0 %1435, %v763
      %v1437 = vpop.permute.xlu0 %1436
      %1439 = vset.pattern.permute.xlu0 2
      %1440 = vperm.xlu0 %1439, %v768
      %v1441 = vpop.permute.xlu0 %1440
      %1443 = vset.pattern.permute.xlu0 2
      %1444 = vperm.xlu0 %1443, %v773
      %v1445 = vpop.permute.xlu0 %1444
      %1447 = vset.pattern.permute.xlu0 2
      %1448 = vperm.xlu0 %1447, %v778
      %v1449 = vpop.permute.xlu0 %1448
      %1451 = vset.pattern.permute.xlu0 2
      %1452 = vperm.xlu0 %1451, %v783
      %v1453 = vpop.permute.xlu0 %1452
      %1455 = vset.pattern.permute.xlu0 2
      %1456 = vperm.xlu0 %1455, %v788
      %v1457 = vpop.permute.xlu0 %1456
      %1459 = vset.pattern.permute.xlu0 2
      %1460 = vperm.xlu0 %1459, %v793
      %v1461 = vpop.permute.xlu0 %1460
      %1463 = vset.pattern.permute.xlu0 2
      %1464 = vperm.xlu0 %1463, %v798
      %v1465 = vpop.permute.xlu0 %1464
      %1467 = vset.pattern.permute.xlu0 2
      %1468 = vperm.xlu0 %1467, %v803
      %v1469 = vpop.permute.xlu0 %1468
      %1471 = vset.pattern.permute.xlu0 2
      %1472 = vperm.xlu0 %1471, %v808
      %v1473 = vpop.permute.xlu0 %1472
      %1475 = vset.pattern.permute.xlu0 2
      %1476 = vperm.xlu0 %1475, %v813
      %v1477 = vpop.permute.xlu0 %1476
      %1479 = vset.pattern.permute.xlu0 2
      %1480 = vperm.xlu0 %1479, %v818
      %v1481 = vpop.permute.xlu0 %1480
      %1483 = vset.pattern.permute.xlu0 2
      %1484 = vperm.xlu0 %1483, %v823
      %v1485 = vpop.permute.xlu0 %1484
      %1487 = vset.pattern.permute.xlu0 2
      %1488 = vperm.xlu0 %1487, %v828
      %v1489 = vpop.permute.xlu0 %1488
      %1491 = vset.pattern.permute.xlu0 2
      %1492 = vperm.xlu0 %1491, %v833
      %v1493 = vpop.permute.xlu0 %1492
      %1495 = vset.pattern.permute.xlu0 2
      %1496 = vperm.xlu0 %1495, %v838
      %v1497 = vpop.permute.xlu0 %1496
      %1499 = vset.pattern.permute.xlu0 2
      %1500 = vperm.xlu0 %1499, %v843
      %v1501 = vpop.permute.xlu0 %1500
      %1503 = vset.pattern.permute.xlu0 2
      %1504 = vperm.xlu0 %1503, %v848
      %v1505 = vpop.permute.xlu0 %1504
      %1507 = vset.pattern.permute.xlu0 2
      %1508 = vperm.xlu0 %1507, %v853
      %v1509 = vpop.permute.xlu0 %1508
      %1511 = vset.pattern.permute.xlu0 2
      %1512 = vperm.xlu0 %1511, %v858
      %v1513 = vpop.permute.xlu0 %1512
      %1515 = vset.pattern.permute.xlu0 2
      %1516 = vperm.xlu0 %1515, %v863
      %v1517 = vpop.permute.xlu0 %1516
      %1519 = vset.pattern.permute.xlu0 2
      %1520 = vperm.xlu0 %1519, %v868
      %v1521 = vpop.permute.xlu0 %1520
      %1523 = vset.pattern.permute.xlu0 2
      %1524 = vperm.xlu0 %1523, %v873
      %v1525 = vpop.permute.xlu0 %1524
      %1527 = vset.pattern.permute.xlu0 2
      %1528 = vperm.xlu0 %1527, %v878
      %v1529 = vpop.permute.xlu0 %1528
      %1531 = vset.pattern.permute.xlu0 2
      %1532 = vperm.xlu0 %1531, %v883
      %v1533 = vpop.permute.xlu0 %1532
      %1535 = vset.pattern.permute.xlu0 2
      %1536 = vperm.xlu0 %1535, %v888
      %v1537 = vpop.permute.xlu0 %1536
      %1539 = vset.pattern.permute.xlu0 2
      %1540 = vperm.xlu0 %1539, %v893
      %v1541 = vpop.permute.xlu0 %1540
      %1543 = vset.pattern.permute.xlu0 2
      %1544 = vperm.xlu0 %1543, %v898
      %v1545 = vpop.permute.xlu0 %1544
      %1547 = vset.pattern.permute.xlu0 2
      %1548 = vperm.xlu0 %1547, %v903
      %v1549 = vpop.permute.xlu0 %1548
      %v1551 = vlaneseq
      %v1552 = vshrl.u32 %v1551, 7
      %v1553 = vsub.s32 1, %v1552
      %v1554 = vrot.slane %v906, %v1553
      %v1555 = vmul.f32 %v1297, %v1554
      %v1556 = vmul.f32 %v1301, %v1554
      %v1557 = vmul.f32 %v1305, %v1554
      %v1558 = vmul.f32 %v1309, %v1554
      %v1559 = vmul.f32 %v1313, %v1554
      %v1560 = vmul.f32 %v1317, %v1554
      %v1561 = vmul.f32 %v1321, %v1554
      %v1562 = vmul.f32 %v1325, %v1554
      %v1563 = vmul.f32 %v1329, %v1554
      %v1564 = vmul.f32 %v1333, %v1554
      %v1565 = vmul.f32 %v1337, %v1554
      %v1566 = vmul.f32 %v1341, %v1554
      %v1567 = vmul.f32 %v1345, %v1554
      %v1568 = vmul.f32 %v1349, %v1554
      %v1569 = vmul.f32 %v1353, %v1554
      %v1570 = vmul.f32 %v1357, %v1554
      %v1571 = vmul.f32 %v1361, %v1554
      %v1572 = vmul.f32 %v1365, %v1554
      %v1573 = vmul.f32 %v1369, %v1554
      %v1574 = vmul.f32 %v1373, %v1554
      %v1575 = vmul.f32 %v1377, %v1554
      %v1576 = vmul.f32 %v1381, %v1554
      %v1577 = vmul.f32 %v1385, %v1554
      %v1578 = vmul.f32 %v1389, %v1554
      %v1579 = vmul.f32 %v1393, %v1554
      %v1580 = vmul.f32 %v1397, %v1554
      %v1581 = vmul.f32 %v1401, %v1554
      %v1582 = vmul.f32 %v1405, %v1554
      %v1583 = vmul.f32 %v1409, %v1554
      %v1584 = vmul.f32 %v1413, %v1554
      %v1585 = vmul.f32 %v1417, %v1554
      %v1586 = vmul.f32 %v1421, %v1554
      %v1587 = vmul.f32 %v1425, %v1554
      %v1588 = vmul.f32 %v1429, %v1554
      %v1589 = vmul.f32 %v1433, %v1554
      %v1590 = vmul.f32 %v1437, %v1554
      %v1591 = vmul.f32 %v1441, %v1554
      %v1592 = vmul.f32 %v1445, %v1554
      %v1593 = vmul.f32 %v1449, %v1554
      %v1594 = vmul.f32 %v1453, %v1554
      %v1595 = vmul.f32 %v1457, %v1554
      %v1596 = vmul.f32 %v1461, %v1554
      %v1597 = vmul.f32 %v1465, %v1554
      %v1598 = vmul.f32 %v1469, %v1554
      %v1599 = vmul.f32 %v1473, %v1554
      %v1600 = vmul.f32 %v1477, %v1554
      %v1601 = vmul.f32 %v1481, %v1554
      %v1602 = vmul.f32 %v1485, %v1554
      %v1603 = vmul.f32 %v1489, %v1554
      %v1604 = vmul.f32 %v1493, %v1554
      %v1605 = vmul.f32 %v1497, %v1554
      %v1606 = vmul.f32 %v1501, %v1554
      %v1607 = vmul.f32 %v1505, %v1554
      %v1608 = vmul.f32 %v1509, %v1554
      %v1609 = vmul.f32 %v1513, %v1554
      %v1610 = vmul.f32 %v1517, %v1554
      %v1611 = vmul.f32 %v1521, %v1554
      %v1612 = vmul.f32 %v1525, %v1554
      %v1613 = vmul.f32 %v1529, %v1554
      %v1614 = vmul.f32 %v1533, %v1554
      %v1615 = vmul.f32 %v1537, %v1554
      %v1616 = vmul.f32 %v1541, %v1554
      %v1617 = vmul.f32 %v1545, %v1554
      %v1618 = vmul.f32 %v1549, %v1554
      %v1619 = vadd.f32 %v1231, %v1555
      %v1620 = vadd.f32 %v1232, %v1556
      %v1621 = vadd.f32 %v1233, %v1557
      %v1622 = vadd.f32 %v1234, %v1558
      %v1623 = vadd.f32 %v1235, %v1559
      %v1624 = vadd.f32 %v1236, %v1560
      %v1625 = vadd.f32 %v1237, %v1561
      %v1626 = vadd.f32 %v1238, %v1562
      %v1627 = vadd.f32 %v1239, %v1563
      %v1628 = vadd.f32 %v1240, %v1564
      %v1629 = vadd.f32 %v1241, %v1565
      %v1630 = vadd.f32 %v1242, %v1566
      %v1631 = vadd.f32 %v1243, %v1567
      %v1632 = vadd.f32 %v1244, %v1568
      %v1633 = vadd.f32 %v1245, %v1569
      %v1634 = vadd.f32 %v1246, %v1570
      %v1635 = vadd.f32 %v1247, %v1571
      %v1636 = vadd.f32 %v1248, %v1572
      %v1637 = vadd.f32 %v1249, %v1573
      %v1638 = vadd.f32 %v1250, %v1574
      %v1639 = vadd.f32 %v1251, %v1575
      %v1640 = vadd.f32 %v1252, %v1576
      %v1641 = vadd.f32 %v1253, %v1577
      %v1642 = vadd.f32 %v1254, %v1578
      %v1643 = vadd.f32 %v1255, %v1579
      %v1644 = vadd.f32 %v1256, %v1580
      %v1645 = vadd.f32 %v1257, %v1581
      %v1646 = vadd.f32 %v1258, %v1582
      %v1647 = vadd.f32 %v1259, %v1583
      %v1648 = vadd.f32 %v1260, %v1584
      %v1649 = vadd.f32 %v1261, %v1585
      %v1650 = vadd.f32 %v1262, %v1586
      %v1651 = vadd.f32 %v1263, %v1587
      %v1652 = vadd.f32 %v1264, %v1588
      %v1653 = vadd.f32 %v1265, %v1589
      %v1654 = vadd.f32 %v1266, %v1590
      %v1655 = vadd.f32 %v1267, %v1591
      %v1656 = vadd.f32 %v1268, %v1592
      %v1657 = vadd.f32 %v1269, %v1593
      %v1658 = vadd.f32 %v1270, %v1594
      %v1659 = vadd.f32 %v1271, %v1595
      %v1660 = vadd.f32 %v1272, %v1596
      %v1661 = vadd.f32 %v1273, %v1597
      %v1662 = vadd.f32 %v1274, %v1598
      %v1663 = vadd.f32 %v1275, %v1599
      %v1664 = vadd.f32 %v1276, %v1600
      %v1665 = vadd.f32 %v1277, %v1601
      %v1666 = vadd.f32 %v1278, %v1602
      %v1667 = vadd.f32 %v1279, %v1603
      %v1668 = vadd.f32 %v1280, %v1604
      %v1669 = vadd.f32 %v1281, %v1605
      %v1670 = vadd.f32 %v1282, %v1606
      %v1671 = vadd.f32 %v1283, %v1607
      %v1672 = vadd.f32 %v1284, %v1608
      %v1673 = vadd.f32 %v1285, %v1609
      %v1674 = vadd.f32 %v1286, %v1610
      %v1675 = vadd.f32 %v1287, %v1611
      %v1676 = vadd.f32 %v1288, %v1612
      %v1677 = vadd.f32 %v1289, %v1613
      %v1678 = vadd.f32 %v1290, %v1614
      %v1679 = vadd.f32 %v1291, %v1615
      %v1680 = vadd.f32 %v1292, %v1616
      %v1681 = vadd.f32 %v1293, %v1617
      %v1682 = vadd.f32 %v1294, %v1618
      %v1683 = vlaneseq
      %v1684 = vshrl.u32 %v1683, 7
      %v1685 = vsub.s32 2, %v1684
      %v1686 = vrot.slane %v906, %v1685
      %v1687 = vadd.f32 %v1619, %v1686
      %v1688 = vadd.f32 %v1620, %v1686
      %v1689 = vadd.f32 %v1621, %v1686
      %v1690 = vadd.f32 %v1622, %v1686
      %v1691 = vadd.f32 %v1623, %v1686
      %v1692 = vadd.f32 %v1624, %v1686
      %v1693 = vadd.f32 %v1625, %v1686
      %v1694 = vadd.f32 %v1626, %v1686
      %v1695 = vadd.f32 %v1627, %v1686
      %v1696 = vadd.f32 %v1628, %v1686
      %v1697 = vadd.f32 %v1629, %v1686
      %v1698 = vadd.f32 %v1630, %v1686
      %v1699 = vadd.f32 %v1631, %v1686
      %v1700 = vadd.f32 %v1632, %v1686
      %v1701 = vadd.f32 %v1633, %v1686
      %v1702 = vadd.f32 %v1634, %v1686
      %v1703 = vadd.f32 %v1635, %v1686
      %v1704 = vadd.f32 %v1636, %v1686
      %v1705 = vadd.f32 %v1637, %v1686
      %v1706 = vadd.f32 %v1638, %v1686
      %v1707 = vadd.f32 %v1639, %v1686
      %v1708 = vadd.f32 %v1640, %v1686
      %v1709 = vadd.f32 %v1641, %v1686
      %v1710 = vadd.f32 %v1642, %v1686
      %v1711 = vadd.f32 %v1643, %v1686
      %v1712 = vadd.f32 %v1644, %v1686
      %v1713 = vadd.f32 %v1645, %v1686
      %v1714 = vadd.f32 %v1646, %v1686
      %v1715 = vadd.f32 %v1647, %v1686
      %v1716 = vadd.f32 %v1648, %v1686
      %v1717 = vadd.f32 %v1649, %v1686
      %v1718 = vadd.f32 %v1650, %v1686
      %v1719 = vadd.f32 %v1651, %v1686
      %v1720 = vadd.f32 %v1652, %v1686
      %v1721 = vadd.f32 %v1653, %v1686
      %v1722 = vadd.f32 %v1654, %v1686
      %v1723 = vadd.f32 %v1655, %v1686
      %v1724 = vadd.f32 %v1656, %v1686
      %v1725 = vadd.f32 %v1657, %v1686
      %v1726 = vadd.f32 %v1658, %v1686
      %v1727 = vadd.f32 %v1659, %v1686
      %v1728 = vadd.f32 %v1660, %v1686
      %v1729 = vadd.f32 %v1661, %v1686
      %v1730 = vadd.f32 %v1662, %v1686
      %v1731 = vadd.f32 %v1663, %v1686
      %v1732 = vadd.f32 %v1664, %v1686
      %v1733 = vadd.f32 %v1665, %v1686
      %v1734 = vadd.f32 %v1666, %v1686
      %v1735 = vadd.f32 %v1667, %v1686
      %v1736 = vadd.f32 %v1668, %v1686
      %v1737 = vadd.f32 %v1669, %v1686
      %v1738 = vadd.f32 %v1670, %v1686
      %v1739 = vadd.f32 %v1671, %v1686
      %v1740 = vadd.f32 %v1672, %v1686
      %v1741 = vadd.f32 %v1673, %v1686
      %v1742 = vadd.f32 %v1674, %v1686
      %v1743 = vadd.f32 %v1675, %v1686
      %v1744 = vadd.f32 %v1676, %v1686
      %v1745 = vadd.f32 %v1677, %v1686
      %v1746 = vadd.f32 %v1678, %v1686
      %v1747 = vadd.f32 %v1679, %v1686
      %v1748 = vadd.f32 %v1680, %v1686
      %v1749 = vadd.f32 %v1681, %v1686
      %v1750 = vadd.f32 %v1682, %v1686
      %v1751 = vxor.u32 %v1687, 2147483648
      %v1752 = vxor.u32 %v1688, 2147483648
      %v1753 = vxor.u32 %v1689, 2147483648
      %v1754 = vxor.u32 %v1690, 2147483648
      %v1755 = vxor.u32 %v1691, 2147483648
      %v1756 = vxor.u32 %v1692, 2147483648
      %v1757 = vxor.u32 %v1693, 2147483648
      %v1758 = vxor.u32 %v1694, 2147483648
      %v1759 = vxor.u32 %v1695, 2147483648
      %v1760 = vxor.u32 %v1696, 2147483648
      %v1761 = vxor.u32 %v1697, 2147483648
      %v1762 = vxor.u32 %v1698, 2147483648
      %v1763 = vxor.u32 %v1699, 2147483648
      %v1764 = vxor.u32 %v1700, 2147483648
      %v1765 = vxor.u32 %v1701, 2147483648
      %v1766 = vxor.u32 %v1702, 2147483648
      %v1767 = vxor.u32 %v1703, 2147483648
      %v1768 = vxor.u32 %v1704, 2147483648
      %v1769 = vxor.u32 %v1705, 2147483648
      %v1770 = vxor.u32 %v1706, 2147483648
      %v1771 = vxor.u32 %v1707, 2147483648
      %v1772 = vxor.u32 %v1708, 2147483648
      %v1773 = vxor.u32 %v1709, 2147483648
      %v1774 = vxor.u32 %v1710, 2147483648
      %v1775 = vxor.u32 %v1711, 2147483648
      %v1776 = vxor.u32 %v1712, 2147483648
      %v1777 = vxor.u32 %v1713, 2147483648
      %v1778 = vxor.u32 %v1714, 2147483648
      %v1779 = vxor.u32 %v1715, 2147483648
      %v1780 = vxor.u32 %v1716, 2147483648
      %v1781 = vxor.u32 %v1717, 2147483648
      %v1782 = vxor.u32 %v1718, 2147483648
      %v1783 = vxor.u32 %v1719, 2147483648
      %v1784 = vxor.u32 %v1720, 2147483648
      %v1785 = vxor.u32 %v1721, 2147483648
      %v1786 = vxor.u32 %v1722, 2147483648
      %v1787 = vxor.u32 %v1723, 2147483648
      %v1788 = vxor.u32 %v1724, 2147483648
      %v1789 = vxor.u32 %v1725, 2147483648
      %v1790 = vxor.u32 %v1726, 2147483648
      %v1791 = vxor.u32 %v1727, 2147483648
      %v1792 = vxor.u32 %v1728, 2147483648
      %v1793 = vxor.u32 %v1729, 2147483648
      %v1794 = vxor.u32 %v1730, 2147483648
      %v1795 = vxor.u32 %v1731, 2147483648
      %v1796 = vxor.u32 %v1732, 2147483648
      %v1797 = vxor.u32 %v1733, 2147483648
      %v1798 = vxor.u32 %v1734, 2147483648
      %v1799 = vxor.u32 %v1735, 2147483648
      %v1800 = vxor.u32 %v1736, 2147483648
      %v1801 = vxor.u32 %v1737, 2147483648
      %v1802 = vxor.u32 %v1738, 2147483648
      %v1803 = vxor.u32 %v1739, 2147483648
      %v1804 = vxor.u32 %v1740, 2147483648
      %v1805 = vxor.u32 %v1741, 2147483648
      %v1806 = vxor.u32 %v1742, 2147483648
      %v1807 = vxor.u32 %v1743, 2147483648
      %v1808 = vxor.u32 %v1744, 2147483648
      %v1809 = vxor.u32 %v1745, 2147483648
      %v1810 = vxor.u32 %v1746, 2147483648
      %v1811 = vxor.u32 %v1747, 2147483648
      %v1812 = vxor.u32 %v1748, 2147483648
      %v1813 = vxor.u32 %v1749, 2147483648
      %v1814 = vxor.u32 %v1750, 2147483648
      %v1815 = vmul.f32 %v1751, 1.442695
      %v1816 = vpow.pop %v1815
      %v1817 = vmul.f32 %v1752, 1.442695
      %v1818 = vpow.pop %v1817
      %v1819 = vmul.f32 %v1753, 1.442695
      %v1820 = vpow.pop %v1819
      %v1821 = vmul.f32 %v1754, 1.442695
      %v1822 = vpow.pop %v1821
      %v1823 = vmul.f32 %v1755, 1.442695
      %v1824 = vpow.pop %v1823
      %v1825 = vmul.f32 %v1756, 1.442695
      %v1826 = vpow.pop %v1825
      %v1827 = vmul.f32 %v1757, 1.442695
      %v1828 = vpow.pop %v1827
      %v1829 = vmul.f32 %v1758, 1.442695
      %v1830 = vpow.pop %v1829
      %v1831 = vmul.f32 %v1759, 1.442695
      %v1832 = vpow.pop %v1831
      %v1833 = vmul.f32 %v1760, 1.442695
      %v1834 = vpow.pop %v1833
      %v1835 = vmul.f32 %v1761, 1.442695
      %v1836 = vpow.pop %v1835
      %v1837 = vmul.f32 %v1762, 1.442695
      %v1838 = vpow.pop %v1837
      %v1839 = vmul.f32 %v1763, 1.442695
      %v1840 = vpow.pop %v1839
      %v1841 = vmul.f32 %v1764, 1.442695
      %v1842 = vpow.pop %v1841
      %v1843 = vmul.f32 %v1765, 1.442695
      %v1844 = vpow.pop %v1843
      %v1845 = vmul.f32 %v1766, 1.442695
      %v1846 = vpow.pop %v1845
      %v1847 = vmul.f32 %v1767, 1.442695
      %v1848 = vpow.pop %v1847
      %v1849 = vmul.f32 %v1768, 1.442695
      %v1850 = vpow.pop %v1849
      %v1851 = vmul.f32 %v1769, 1.442695
      %v1852 = vpow.pop %v1851
      %v1853 = vmul.f32 %v1770, 1.442695
      %v1854 = vpow.pop %v1853
      %v1855 = vmul.f32 %v1771, 1.442695
      %v1856 = vpow.pop %v1855
      %v1857 = vmul.f32 %v1772, 1.442695
      %v1858 = vpow.pop %v1857
      %v1859 = vmul.f32 %v1773, 1.442695
      %v1860 = vpow.pop %v1859
      %v1861 = vmul.f32 %v1774, 1.442695
      %v1862 = vpow.pop %v1861
      %v1863 = vmul.f32 %v1775, 1.442695
      %v1864 = vpow.pop %v1863
      %v1865 = vmul.f32 %v1776, 1.442695
      %v1866 = vpow.pop %v1865
      %v1867 = vmul.f32 %v1777, 1.442695
      %v1868 = vpow.pop %v1867
      %v1869 = vmul.f32 %v1778, 1.442695
      %v1870 = vpow.pop %v1869
      %v1871 = vmul.f32 %v1779, 1.442695
      %v1872 = vpow.pop %v1871
      %v1873 = vmul.f32 %v1780, 1.442695
      %v1874 = vpow.pop %v1873
      %v1875 = vmul.f32 %v1781, 1.442695
      %v1876 = vpow.pop %v1875
      %v1877 = vmul.f32 %v1782, 1.442695
      %v1878 = vpow.pop %v1877
      %v1879 = vmul.f32 %v1783, 1.442695
      %v1880 = vpow.pop %v1879
      %v1881 = vmul.f32 %v1784, 1.442695
      %v1882 = vpow.pop %v1881
      %v1883 = vmul.f32 %v1785, 1.442695
      %v1884 = vpow.pop %v1883
      %v1885 = vmul.f32 %v1786, 1.442695
      %v1886 = vpow.pop %v1885
      %v1887 = vmul.f32 %v1787, 1.442695
      %v1888 = vpow.pop %v1887
      %v1889 = vmul.f32 %v1788, 1.442695
      %v1890 = vpow.pop %v1889
      %v1891 = vmul.f32 %v1789, 1.442695
      %v1892 = vpow.pop %v1891
      %v1893 = vmul.f32 %v1790, 1.442695
      %v1894 = vpow.pop %v1893
      %v1895 = vmul.f32 %v1791, 1.442695
      %v1896 = vpow.pop %v1895
      %v1897 = vmul.f32 %v1792, 1.442695
      %v1898 = vpow.pop %v1897
      %v1899 = vmul.f32 %v1793, 1.442695
      %v1900 = vpow.pop %v1899
      %v1901 = vmul.f32 %v1794, 1.442695
      %v1902 = vpow.pop %v1901
      %v1903 = vmul.f32 %v1795, 1.442695
      %v1904 = vpow.pop %v1903
      %v1905 = vmul.f32 %v1796, 1.442695
      %v1906 = vpow.pop %v1905
      %v1907 = vmul.f32 %v1797, 1.442695
      %v1908 = vpow.pop %v1907
      %v1909 = vmul.f32 %v1798, 1.442695
      %v1910 = vpow.pop %v1909
      %v1911 = vmul.f32 %v1799, 1.442695
      %v1912 = vpow.pop %v1911
      %v1913 = vmul.f32 %v1800, 1.442695
      %v1914 = vpow.pop %v1913
      %v1915 = vmul.f32 %v1801, 1.442695
      %v1916 = vpow.pop %v1915
      %v1917 = vmul.f32 %v1802, 1.442695
      %v1918 = vpow.pop %v1917
      %v1919 = vmul.f32 %v1803, 1.442695
      %v1920 = vpow.pop %v1919
      %v1921 = vmul.f32 %v1804, 1.442695
      %v1922 = vpow.pop %v1921
      %v1923 = vmul.f32 %v1805, 1.442695
      %v1924 = vpow.pop %v1923
      %v1925 = vmul.f32 %v1806, 1.442695
      %v1926 = vpow.pop %v1925
      %v1927 = vmul.f32 %v1807, 1.442695
      %v1928 = vpow.pop %v1927
      %v1929 = vmul.f32 %v1808, 1.442695
      %v1930 = vpow.pop %v1929
      %v1931 = vmul.f32 %v1809, 1.442695
      %v1932 = vpow.pop %v1931
      %v1933 = vmul.f32 %v1810, 1.442695
      %v1934 = vpow.pop %v1933
      %v1935 = vmul.f32 %v1811, 1.442695
      %v1936 = vpow.pop %v1935
      %v1937 = vmul.f32 %v1812, 1.442695
      %v1938 = vpow.pop %v1937
      %v1939 = vmul.f32 %v1813, 1.442695
      %v1940 = vpow.pop %v1939
      %v1941 = vmul.f32 %v1814, 1.442695
      %v1942 = vpow.pop %v1941
      %v1943 = vadd.f32 %v1816, 1.0
      %v1944 = vadd.f32 %v1818, 1.0
      %v1945 = vadd.f32 %v1820, 1.0
      %v1946 = vadd.f32 %v1822, 1.0
      %v1947 = vadd.f32 %v1824, 1.0
      %v1948 = vadd.f32 %v1826, 1.0
      %v1949 = vadd.f32 %v1828, 1.0
      %v1950 = vadd.f32 %v1830, 1.0
      %v1951 = vadd.f32 %v1832, 1.0
      %v1952 = vadd.f32 %v1834, 1.0
      %v1953 = vadd.f32 %v1836, 1.0
      %v1954 = vadd.f32 %v1838, 1.0
      %v1955 = vadd.f32 %v1840, 1.0
      %v1956 = vadd.f32 %v1842, 1.0
      %v1957 = vadd.f32 %v1844, 1.0
      %v1958 = vadd.f32 %v1846, 1.0
      %v1959 = vadd.f32 %v1848, 1.0
      %v1960 = vadd.f32 %v1850, 1.0
      %v1961 = vadd.f32 %v1852, 1.0
      %v1962 = vadd.f32 %v1854, 1.0
      %v1963 = vadd.f32 %v1856, 1.0
      %v1964 = vadd.f32 %v1858, 1.0
      %v1965 = vadd.f32 %v1860, 1.0
      %v1966 = vadd.f32 %v1862, 1.0
      %v1967 = vadd.f32 %v1864, 1.0
      %v1968 = vadd.f32 %v1866, 1.0
      %v1969 = vadd.f32 %v1868, 1.0
      %v1970 = vadd.f32 %v1870, 1.0
      %v1971 = vadd.f32 %v1872, 1.0
      %v1972 = vadd.f32 %v1874, 1.0
      %v1973 = vadd.f32 %v1876, 1.0
      %v1974 = vadd.f32 %v1878, 1.0
      %v1975 = vadd.f32 %v1880, 1.0
      %v1976 = vadd.f32 %v1882, 1.0
      %v1977 = vadd.f32 %v1884, 1.0
      %v1978 = vadd.f32 %v1886, 1.0
      %v1979 = vadd.f32 %v1888, 1.0
      %v1980 = vadd.f32 %v1890, 1.0
      %v1981 = vadd.f32 %v1892, 1.0
      %v1982 = vadd.f32 %v1894, 1.0
      %v1983 = vadd.f32 %v1896, 1.0
      %v1984 = vadd.f32 %v1898, 1.0
      %v1985 = vadd.f32 %v1900, 1.0
      %v1986 = vadd.f32 %v1902, 1.0
      %v1987 = vadd.f32 %v1904, 1.0
      %v1988 = vadd.f32 %v1906, 1.0
      %v1989 = vadd.f32 %v1908, 1.0
      %v1990 = vadd.f32 %v1910, 1.0
      %v1991 = vadd.f32 %v1912, 1.0
      %v1992 = vadd.f32 %v1914, 1.0
      %v1993 = vadd.f32 %v1916, 1.0
      %v1994 = vadd.f32 %v1918, 1.0
      %v1995 = vadd.f32 %v1920, 1.0
      %v1996 = vadd.f32 %v1922, 1.0
      %v1997 = vadd.f32 %v1924, 1.0
      %v1998 = vadd.f32 %v1926, 1.0
      %v1999 = vadd.f32 %v1928, 1.0
      %v2000 = vadd.f32 %v1930, 1.0
      %v2001 = vadd.f32 %v1932, 1.0
      %v2002 = vadd.f32 %v1934, 1.0
      %v2003 = vadd.f32 %v1936, 1.0
      %v2004 = vadd.f32 %v1938, 1.0
      %v2005 = vadd.f32 %v1940, 1.0
      %v2006 = vadd.f32 %v1942, 1.0
      %v2007 = vrcp.pop %v1943
      %v2008 = vmul.f32 1.0, %v2007
      %v2009 = vrcp.pop %v1944
      %v2010 = vmul.f32 1.0, %v2009
      %v2011 = vrcp.pop %v1945
      %v2012 = vmul.f32 1.0, %v2011
      %v2013 = vrcp.pop %v1946
      %v2014 = vmul.f32 1.0, %v2013
      %v2015 = vrcp.pop %v1947
      %v2016 = vmul.f32 1.0, %v2015
      %v2017 = vrcp.pop %v1948
      %v2018 = vmul.f32 1.0, %v2017
      %v2019 = vrcp.pop %v1949
      %v2020 = vmul.f32 1.0, %v2019
      %v2021 = vrcp.pop %v1950
      %v2022 = vmul.f32 1.0, %v2021
      %v2023 = vrcp.pop %v1951
      %v2024 = vmul.f32 1.0, %v2023
      %v2025 = vrcp.pop %v1952
      %v2026 = vmul.f32 1.0, %v2025
      %v2027 = vrcp.pop %v1953
      %v2028 = vmul.f32 1.0, %v2027
      %v2029 = vrcp.pop %v1954
      %v2030 = vmul.f32 1.0, %v2029
      %v2031 = vrcp.pop %v1955
      %v2032 = vmul.f32 1.0, %v2031
      %v2033 = vrcp.pop %v1956
      %v2034 = vmul.f32 1.0, %v2033
      %v2035 = vrcp.pop %v1957
      %v2036 = vmul.f32 1.0, %v2035
      %v2037 = vrcp.pop %v1958
      %v2038 = vmul.f32 1.0, %v2037
      %v2039 = vrcp.pop %v1959
      %v2040 = vmul.f32 1.0, %v2039
      %v2041 = vrcp.pop %v1960
      %v2042 = vmul.f32 1.0, %v2041
      %v2043 = vrcp.pop %v1961
      %v2044 = vmul.f32 1.0, %v2043
      %v2045 = vrcp.pop %v1962
      %v2046 = vmul.f32 1.0, %v2045
      %v2047 = vrcp.pop %v1963
      %v2048 = vmul.f32 1.0, %v2047
      %v2049 = vrcp.pop %v1964
      %v2050 = vmul.f32 1.0, %v2049
      %v2051 = vrcp.pop %v1965
      %v2052 = vmul.f32 1.0, %v2051
      %v2053 = vrcp.pop %v1966
      %v2054 = vmul.f32 1.0, %v2053
      %v2055 = vrcp.pop %v1967
      %v2056 = vmul.f32 1.0, %v2055
      %v2057 = vrcp.pop %v1968
      %v2058 = vmul.f32 1.0, %v2057
      %v2059 = vrcp.pop %v1969
      %v2060 = vmul.f32 1.0, %v2059
      %v2061 = vrcp.pop %v1970
      %v2062 = vmul.f32 1.0, %v2061
      %v2063 = vrcp.pop %v1971
      %v2064 = vmul.f32 1.0, %v2063
      %v2065 = vrcp.pop %v1972
      %v2066 = vmul.f32 1.0, %v2065
      %v2067 = vrcp.pop %v1973
      %v2068 = vmul.f32 1.0, %v2067
      %v2069 = vrcp.pop %v1974
      %v2070 = vmul.f32 1.0, %v2069
      %v2071 = vrcp.pop %v1975
      %v2072 = vmul.f32 1.0, %v2071
      %v2073 = vrcp.pop %v1976
      %v2074 = vmul.f32 1.0, %v2073
      %v2075 = vrcp.pop %v1977
      %v2076 = vmul.f32 1.0, %v2075
      %v2077 = vrcp.pop %v1978
      %v2078 = vmul.f32 1.0, %v2077
      %v2079 = vrcp.pop %v1979
      %v2080 = vmul.f32 1.0, %v2079
      %v2081 = vrcp.pop %v1980
      %v2082 = vmul.f32 1.0, %v2081
      %v2083 = vrcp.pop %v1981
      %v2084 = vmul.f32 1.0, %v2083
      %v2085 = vrcp.pop %v1982
      %v2086 = vmul.f32 1.0, %v2085
      %v2087 = vrcp.pop %v1983
      %v2088 = vmul.f32 1.0, %v2087
      %v2089 = vrcp.pop %v1984
      %v2090 = vmul.f32 1.0, %v2089
      %v2091 = vrcp.pop %v1985
      %v2092 = vmul.f32 1.0, %v2091
      %v2093 = vrcp.pop %v1986
      %v2094 = vmul.f32 1.0, %v2093
      %v2095 = vrcp.pop %v1987
      %v2096 = vmul.f32 1.0, %v2095
      %v2097 = vrcp.pop %v1988
      %v2098 = vmul.f32 1.0, %v2097
      %v2099 = vrcp.pop %v1989
      %v2100 = vmul.f32 1.0, %v2099
      %v2101 = vrcp.pop %v1990
      %v2102 = vmul.f32 1.0, %v2101
      %v2103 = vrcp.pop %v1991
      %v2104 = vmul.f32 1.0, %v2103
      %v2105 = vrcp.pop %v1992
      %v2106 = vmul.f32 1.0, %v2105
      %v2107 = vrcp.pop %v1993
      %v2108 = vmul.f32 1.0, %v2107
      %v2109 = vrcp.pop %v1994
      %v2110 = vmul.f32 1.0, %v2109
      %v2111 = vrcp.pop %v1995
      %v2112 = vmul.f32 1.0, %v2111
      %v2113 = vrcp.pop %v1996
      %v2114 = vmul.f32 1.0, %v2113
      %v2115 = vrcp.pop %v1997
      %v2116 = vmul.f32 1.0, %v2115
      %v2117 = vrcp.pop %v1998
      %v2118 = vmul.f32 1.0, %v2117
      %v2119 = vrcp.pop %v1999
      %v2120 = vmul.f32 1.0, %v2119
      %v2121 = vrcp.pop %v2000
      %v2122 = vmul.f32 1.0, %v2121
      %v2123 = vrcp.pop %v2001
      %v2124 = vmul.f32 1.0, %v2123
      %v2125 = vrcp.pop %v2002
      %v2126 = vmul.f32 1.0, %v2125
      %v2127 = vrcp.pop %v2003
      %v2128 = vmul.f32 1.0, %v2127
      %v2129 = vrcp.pop %v2004
      %v2130 = vmul.f32 1.0, %v2129
      %v2131 = vrcp.pop %v2005
      %v2132 = vmul.f32 1.0, %v2131
      %v2133 = vrcp.pop %v2006
      %v2134 = vmul.f32 1.0, %v2133
      %v2135 = vld [vmem:[%s2 + $0x20] sm:$0xff]
      %v2136 = vld [vmem:[%s2 + $0x28] sm:$0xff]
      %v2137 = vld [vmem:[%s2 + $0x30] sm:$0xff]
      %v2138 = vld [vmem:[%s2 + $0x38] sm:$0xff]
      %v2139 = vld [vmem:[%s2 + $0x40] sm:$0xff]
      %v2140 = vld [vmem:[%s2 + $0x48] sm:$0xff]
      %v2141 = vld [vmem:[%s2 + $0x50] sm:$0xff]
      %v2142 = vld [vmem:[%s2 + $0x58] sm:$0xff]
      %v2143 = vld [vmem:[%s2 + $0x60] sm:$0xff]
      %v2144 = vld [vmem:[%s2 + $0x68] sm:$0xff]
      %v2145 = vld [vmem:[%s2 + $0x70] sm:$0xff]
      %v2146 = vld [vmem:[%s2 + $0x78] sm:$0xff]
      %v2147 = vld [vmem:[%s2 + $0x80] sm:$0xff]
      %v2148 = vld [vmem:[%s2 + $0x88] sm:$0xff]
      %v2149 = vld [vmem:[%s2 + $0x90] sm:$0xff]
      %v2150 = vld [vmem:[%s2 + $0x98] sm:$0xff]
      %v2151 = vlaneseq
      %v2152 = vshrl.u32 %v2151, 7
      %v2153 = vsub.s32 3, %v2152
      %v2154 = vrot.slane %v906, %v2153
      %2155 = vmatprep.subr.mxu0 0.0
      %2156 = vmatpush1.msra.mxu0 %v2135
      %2157 = vmatprep.subr.mxu0 0.0
      %2158 = vmatpush1.msra.mxu0 %v2136
      %2159 = vmatprep.subr.mxu0 0.0
      %2160 = vmatpush1.msra.mxu0 %v2137
      %2161 = vmatprep.subr.mxu0 0.0
      %2162 = vmatpush1.msra.mxu0 %v2138
      %2163 = vmatprep.subr.mxu0 0.0
      %2164 = vmatpush1.msra.mxu0 %v2139
      %2165 = vmatprep.subr.mxu0 0.0
      %2166 = vmatpush1.msra.mxu0 %v2140
      %2167 = vmatprep.subr.mxu0 0.0
      %2168 = vmatpush1.msra.mxu0 %v2141
      %2169 = vmatprep.subr.mxu0 0.0
      %2170 = vmatpush1.msra.mxu0 %v2142
      %2171 = vmatprep.subr.mxu0 0.0
      %2172 = vmatpush1.msra.mxu0 %v2143
      %2173 = vmatprep.subr.mxu0 0.0
      %2174 = vmatpush1.msra.mxu0 %v2144
      %2175 = vmatprep.subr.mxu0 0.0
      %2176 = vmatpush1.msra.mxu0 %v2145
      %2177 = vmatprep.subr.mxu0 0.0
      %2178 = vmatpush1.msra.mxu0 %v2146
      %2179 = vmatprep.subr.mxu0 0.0
      %2180 = vmatpush1.msra.mxu0 %v2147
      %2181 = vmatprep.subr.mxu0 0.0
      %2182 = vmatpush1.msra.mxu0 %v2148
      %2183 = vmatprep.subr.mxu0 0.0
      %2184 = vmatpush1.msra.mxu0 %v2149
      %2185 = vmatprep.subr.mxu0 0.0
      %2186 = vmatpush1.msra.mxu0 %v2150
      %2187 = vmatprep.subr.mxu0 0.0
      %2188 = vmatpush1.msra.mxu0 0.0
      %2189 = vmatprep.subr.mxu0 0.0
      %2190 = vmatpush1.msra.mxu0 0.0
      %2191 = vmatprep.subr.mxu0 0.0
      %2192 = vmatpush1.msra.mxu0 0.0
      %2193 = vmatprep.subr.mxu0 0.0
      %2194 = vmatpush1.msra.mxu0 0.0
      %2195 = vmatprep.subr.mxu0 0.0
      %2196 = vmatpush1.msra.mxu0 0.0
      %2197 = vmatprep.subr.mxu0 0.0
      %2198 = vmatpush1.msra.mxu0 0.0
      %2199 = vmatprep.subr.mxu0 0.0
      %2200 = vmatpush1.msra.mxu0 0.0
      %2201 = vmatprep.subr.mxu0 0.0
      %2202 = vmatpush1.msra.mxu0 0.0
      %2203 = vmatprep.subr.mxu0 0.0
      %2204 = vmatpush1.msra.mxu0 0.0
      %2205 = vmatprep.subr.mxu0 0.0
      %2206 = vmatpush1.msra.mxu0 0.0
      %2207 = vmatprep.subr.mxu0 0.0
      %2208 = vmatpush1.msra.mxu0 0.0
      %2209 = vmatprep.subr.mxu0 0.0
      %2210 = vmatpush1.msra.mxu0 0.0
      %2211 = vmatprep.subr.mxu0 0.0
      %2212 = vmatpush1.msra.mxu0 0.0
      %2213 = vmatprep.subr.mxu0 0.0
      %2214 = vmatpush1.msra.mxu0 0.0
      %2215 = vmatprep.subr.mxu0 0.0
      %2216 = vmatpush1.msra.mxu0 0.0
      %2217 = vmatprep.subr.mxu0 0.0
      %2218 = vmatpush1.msra.mxu0 0.0
      %2219 = vmatprep.mubr.f32.mxu0 0.0
      %2220 = vmatmul.mubr.f32.gmra.mrb[0].mxu0 %v2008
      %v2221 = vpop.f32.mrb[0].mxu0
      %v2222 = vadd.f32 %v2154, %v2221
      %v2223 = vpop.f32.mrb[0].mxu0
      %2224 = vmatprep.mubr.f32.mxu0 0.0
      %2225 = vmatmul.mubr.f32.gmra.mrb[0].mxu0 %v2010
      %v2226 = vpop.f32.mrb[0].mxu0
      %v2227 = vadd.f32 %v2154, %v2226
      %v2228 = vpop.f32.mrb[0].mxu0
      %2229 = vmatprep.mubr.f32.mxu0 0.0
      %2230 = vmatmul.mubr.f32.gmra.mrb[0].mxu0 %v2012
      %v2231 = vpop.f32.mrb[0].mxu0
      %v2232 = vadd.f32 %v2154, %v2231
      %v2233 = vpop.f32.mrb[0].mxu0
      %2234 = vmatprep.mubr.f32.mxu0 0.0
      %2235 = vmatmul.mubr.f32.gmra.mrb[0].mxu0 %v2014
      %v2236 = vpop.f32.mrb[0].mxu0
      %v2237 = vadd.f32 %v2154, %v2236
      %v2238 = vpop.f32.mrb[0].mxu0
      %2239 = vmatprep.mubr.f32.mxu0 0.0
      %2240 = vmatmul.mubr.f32.gmra.mrb[0].mxu0 %v2016
      %v2241 = vpop.f32.mrb[0].mxu0
      %v2242 = vadd.f32 %v2154, %v2241
      %v2243 = vpop.f32.mrb[0].mxu0
      %2244 = vmatprep.mubr.f32.mxu0 0.0
      %2245 = vmatmul.mubr.f32.gmra.mrb[0].mxu0 %v2018
      %v2246 = vpop.f32.mrb[0].mxu0
      %v2247 = vadd.f32 %v2154, %v2246
      %v2248 = vpop.f32.mrb[0].mxu0
      %2249 = vmatprep.mubr.f32.mxu0 0.0
      %2250 = vmatmul.mubr.f32.gmra.mrb[0].mxu0 %v2020
      %v2251 = vpop.f32.mrb[0].mxu0
      %v2252 = vadd.f32 %v2154, %v2251
      %v2253 = vpop.f32.mrb[0].mxu0
      %2254 = vmatprep.mubr.f32.mxu0 0.0
      %2255 = vmatmul.mubr.f32.gmra.mrb[0].mxu0 %v2022
      %v2256 = vpop.f32.mrb[0].mxu0
      %v2257 = vadd.f32 %v2154, %v2256
      %v2258 = vpop.f32.mrb[0].mxu0
      %2259 = vmatprep.mubr.f32.mxu0 0.0
      %2260 = vmatmul.mubr.f32.gmra.mrb[0].mxu0 %v2024
      %v2261 = vpop.f32.mrb[0].mxu0
      %v2262 = vadd.f32 %v2154, %v2261
      %v2263 = vpop.f32.mrb[0].mxu0
      %2264 = vmatprep.mubr.f32.mxu0 0.0
      %2265 = vmatmul.mubr.f32.gmra.mrb[0].mxu0 %v2026
      %v2266 = vpop.f32.mrb[0].mxu0
      %v2267 = vadd.f32 %v2154, %v2266
      %v2268 = vpop.f32.mrb[0].mxu0
      %2269 = vmatprep.mubr.f32.mxu0 0.0
      %2270 = vmatmul.mubr.f32.gmra.mrb[0].mxu0 %v2028
      %v2271 = vpop.f32.mrb[0].mxu0
      %v2272 = vadd.f32 %v2154, %v2271
      %v2273 = vpop.f32.mrb[0].mxu0
      %2274 = vmatprep.mubr.f32.mxu0 0.0
      %2275 = vmatmul.mubr.f32.gmra.mrb[0].mxu0 %v2030
      %v2276 = vpop.f32.mrb[0].mxu0
      %v2277 = vadd.f32 %v2154, %v2276
      %v2278 = vpop.f32.mrb[0].mxu0
      %2279 = vmatprep.mubr.f32.mxu0 0.0
      %2280 = vmatmul.mubr.f32.gmra.mrb[0].mxu0 %v2032
      %v2281 = vpop.f32.mrb[0].mxu0
      %v2282 = vadd.f32 %v2154, %v2281
      %v2283 = vpop.f32.mrb[0].mxu0
      %2284 = vmatprep.mubr.f32.mxu0 0.0
      %2285 = vmatmul.mubr.f32.gmra.mrb[0].mxu0 %v2034
      %v2286 = vpop.f32.mrb[0].mxu0
      %v2287 = vadd.f32 %v2154, %v2286
      %v2288 = vpop.f32.mrb[0].mxu0
      %2289 = vmatprep.mubr.f32.mxu0 0.0
      %2290 = vmatmul.mubr.f32.gmra.mrb[0].mxu0 %v2036
      %v2291 = vpop.f32.mrb[0].mxu0
      %v2292 = vadd.f32 %v2154, %v2291
      %v2293 = vpop.f32.mrb[0].mxu0
      %2294 = vmatprep.mubr.f32.mxu0 0.0
      %2295 = vmatmul.mubr.f32.gmra.mrb[0].mxu0 %v2038
      %v2296 = vpop.f32.mrb[0].mxu0
      %v2297 = vadd.f32 %v2154, %v2296
      %v2298 = vpop.f32.mrb[0].mxu0
      %2299 = vmatprep.mubr.f32.mxu0 0.0
      %2300 = vmatmul.mubr.f32.gmra.mrb[0].mxu0 %v2040
      %v2301 = vpop.f32.mrb[0].mxu0
      %v2302 = vadd.f32 %v2154, %v2301
      %v2303 = vpop.f32.mrb[0].mxu0
      %2304 = vmatprep.mubr.f32.mxu0 0.0
      %2305 = vmatmul.mubr.f32.gmra.mrb[0].mxu0 %v2042
      %v2306 = vpop.f32.mrb[0].mxu0
      %v2307 = vadd.f32 %v2154, %v2306
      %v2308 = vpop.f32.mrb[0].mxu0
      %2309 = vmatprep.mubr.f32.mxu0 0.0
      %2310 = vmatmul.mubr.f32.gmra.mrb[0].mxu0 %v2044
      %v2311 = vpop.f32.mrb[0].mxu0
      %v2312 = vadd.f32 %v2154, %v2311
      %v2313 = vpop.f32.mrb[0].mxu0
      %2314 = vmatprep.mubr.f32.mxu0 0.0
      %2315 = vmatmul.mubr.f32.gmra.mrb[0].mxu0 %v2046
      %v2316 = vpop.f32.mrb[0].mxu0
      %v2317 = vadd.f32 %v2154, %v2316
      %v2318 = vpop.f32.mrb[0].mxu0
      %2319 = vmatprep.mubr.f32.mxu0 0.0
      %2320 = vmatmul.mubr.f32.gmra.mrb[0].mxu0 %v2048
      %v2321 = vpop.f32.mrb[0].mxu0
      %v2322 = vadd.f32 %v2154, %v2321
      %v2323 = vpop.f32.mrb[0].mxu0
      %2324 = vmatprep.mubr.f32.mxu0 0.0
      %2325 = vmatmul.mubr.f32.gmra.mrb[0].mxu0 %v2050
      %v2326 = vpop.f32.mrb[0].mxu0
      %v2327 = vadd.f32 %v2154, %v2326
      %v2328 = vpop.f32.mrb[0].mxu0
      %2329 = vmatprep.mubr.f32.mxu0 0.0
      %2330 = vmatmul.mubr.f32.gmra.mrb[0].mxu0 %v2052
      %v2331 = vpop.f32.mrb[0].mxu0
      %v2332 = vadd.f32 %v2154, %v2331
      %v2333 = vpop.f32.mrb[0].mxu0
      %2334 = vmatprep.mubr.f32.mxu0 0.0
      %2335 = vmatmul.mubr.f32.gmra.mrb[0].mxu0 %v2054
      %v2336 = vpop.f32.mrb[0].mxu0
      %v2337 = vadd.f32 %v2154, %v2336
      %v2338 = vpop.f32.mrb[0].mxu0
      %2339 = vmatprep.mubr.f32.mxu0 0.0
      %2340 = vmatmul.mubr.f32.gmra.mrb[0].mxu0 %v2056
      %v2341 = vpop.f32.mrb[0].mxu0
      %v2342 = vadd.f32 %v2154, %v2341
      %v2343 = vpop.f32.mrb[0].mxu0
      %2344 = vmatprep.mubr.f32.mxu0 0.0
      %2345 = vmatmul.mubr.f32.gmra.mrb[0].mxu0 %v2058
      %v2346 = vpop.f32.mrb[0].mxu0
      %v2347 = vadd.f32 %v2154, %v2346
      %v2348 = vpop.f32.mrb[0].mxu0
      %2349 = vmatprep.mubr.f32.mxu0 0.0
      %2350 = vmatmul.mubr.f32.gmra.mrb[0].mxu0 %v2060
      %v2351 = vpop.f32.mrb[0].mxu0
      %v2352 = vadd.f32 %v2154, %v2351
      %v2353 = vpop.f32.mrb[0].mxu0
      %2354 = vmatprep.mubr.f32.mxu0 0.0
      %2355 = vmatmul.mubr.f32.gmra.mrb[0].mxu0 %v2062
      %v2356 = vpop.f32.mrb[0].mxu0
      %v2357 = vadd.f32 %v2154, %v2356
      %v2358 = vpop.f32.mrb[0].mxu0
      %2359 = vmatprep.mubr.f32.mxu0 0.0
      %2360 = vmatmul.mubr.f32.gmra.mrb[0].mxu0 %v2064
      %v2361 = vpop.f32.mrb[0].mxu0
      %v2362 = vadd.f32 %v2154, %v2361
      %v2363 = vpop.f32.mrb[0].mxu0
      %2364 = vmatprep.mubr.f32.mxu0 0.0
      %2365 = vmatmul.mubr.f32.gmra.mrb[0].mxu0 %v2066
      %v2366 = vpop.f32.mrb[0].mxu0
      %v2367 = vadd.f32 %v2154, %v2366
      %v2368 = vpop.f32.mrb[0].mxu0
      %2369 = vmatprep.mubr.f32.mxu0 0.0
      %2370 = vmatmul.mubr.f32.gmra.mrb[0].mxu0 %v2068
      %v2371 = vpop.f32.mrb[0].mxu0
      %v2372 = vadd.f32 %v2154, %v2371
      %v2373 = vpop.f32.mrb[0].mxu0
      %2374 = vmatprep.mubr.f32.mxu0 0.0
      %2375 = vmatmul.mubr.f32.gmra.mrb[0].mxu0 %v2070
      %v2376 = vpop.f32.mrb[0].mxu0
      %v2377 = vadd.f32 %v2154, %v2376
      %v2378 = vpop.f32.mrb[0].mxu0
      %2379 = vmatprep.mubr.f32.mxu0 0.0
      %2380 = vmatmul.mubr.f32.gmra.mrb[0].mxu0 %v2072
      %v2381 = vpop.f32.mrb[0].mxu0
      %v2382 = vadd.f32 %v2154, %v2381
      %v2383 = vpop.f32.mrb[0].mxu0
      %2384 = vmatprep.mubr.f32.mxu0 0.0
      %2385 = vmatmul.mubr.f32.gmra.mrb[0].mxu0 %v2074
      %v2386 = vpop.f32.mrb[0].mxu0
      %v2387 = vadd.f32 %v2154, %v2386
      %v2388 = vpop.f32.mrb[0].mxu0
      %2389 = vmatprep.mubr.f32.mxu0 0.0
      %2390 = vmatmul.mubr.f32.gmra.mrb[0].mxu0 %v2076
      %v2391 = vpop.f32.mrb[0].mxu0
      %v2392 = vadd.f32 %v2154, %v2391
      %v2393 = vpop.f32.mrb[0].mxu0
      %2394 = vmatprep.mubr.f32.mxu0 0.0
      %2395 = vmatmul.mubr.f32.gmra.mrb[0].mxu0 %v2078
      %v2396 = vpop.f32.mrb[0].mxu0
      %v2397 = vadd.f32 %v2154, %v2396
      %v2398 = vpop.f32.mrb[0].mxu0
      %2399 = vmatprep.mubr.f32.mxu0 0.0
      %2400 = vmatmul.mubr.f32.gmra.mrb[0].mxu0 %v2080
      %v2401 = vpop.f32.mrb[0].mxu0
      %v2402 = vadd.f32 %v2154, %v2401
      %v2403 = vpop.f32.mrb[0].mxu0
      %2404 = vmatprep.mubr.f32.mxu0 0.0
      %2405 = vmatmul.mubr.f32.gmra.mrb[0].mxu0 %v2082
      %v2406 = vpop.f32.mrb[0].mxu0
      %v2407 = vadd.f32 %v2154, %v2406
      %v2408 = vpop.f32.mrb[0].mxu0
      %2409 = vmatprep.mubr.f32.mxu0 0.0
      %2410 = vmatmul.mubr.f32.gmra.mrb[0].mxu0 %v2084
      %v2411 = vpop.f32.mrb[0].mxu0
      %v2412 = vadd.f32 %v2154, %v2411
      %v2413 = vpop.f32.mrb[0].mxu0
      %2414 = vmatprep.mubr.f32.mxu0 0.0
      %2415 = vmatmul.mubr.f32.gmra.mrb[0].mxu0 %v2086
      %v2416 = vpop.f32.mrb[0].mxu0
      %v2417 = vadd.f32 %v2154, %v2416
      %v2418 = vpop.f32.mrb[0].mxu0
      %2419 = vmatprep.mubr.f32.mxu0 0.0
      %2420 = vmatmul.mubr.f32.gmra.mrb[0].mxu0 %v2088
      %v2421 = vpop.f32.mrb[0].mxu0
      %v2422 = vadd.f32 %v2154, %v2421
      %v2423 = vpop.f32.mrb[0].mxu0
      %2424 = vmatprep.mubr.f32.mxu0 0.0
      %2425 = vmatmul.mubr.f32.gmra.mrb[0].mxu0 %v2090
      %v2426 = vpop.f32.mrb[0].mxu0
      %v2427 = vadd.f32 %v2154, %v2426
      %v2428 = vpop.f32.mrb[0].mxu0
      %2429 = vmatprep.mubr.f32.mxu0 0.0
      %2430 = vmatmul.mubr.f32.gmra.mrb[0].mxu0 %v2092
      %v2431 = vpop.f32.mrb[0].mxu0
      %v2432 = vadd.f32 %v2154, %v2431
      %v2433 = vpop.f32.mrb[0].mxu0
      %2434 = vmatprep.mubr.f32.mxu0 0.0
      %2435 = vmatmul.mubr.f32.gmra.mrb[0].mxu0 %v2094
      %v2436 = vpop.f32.mrb[0].mxu0
      %v2437 = vadd.f32 %v2154, %v2436
      %v2438 = vpop.f32.mrb[0].mxu0
      %2439 = vmatprep.mubr.f32.mxu0 0.0
      %2440 = vmatmul.mubr.f32.gmra.mrb[0].mxu0 %v2096
      %v2441 = vpop.f32.mrb[0].mxu0
      %v2442 = vadd.f32 %v2154, %v2441
      %v2443 = vpop.f32.mrb[0].mxu0
      %2444 = vmatprep.mubr.f32.mxu0 0.0
      %2445 = vmatmul.mubr.f32.gmra.mrb[0].mxu0 %v2098
      %v2446 = vpop.f32.mrb[0].mxu0
      %v2447 = vadd.f32 %v2154, %v2446
      %v2448 = vpop.f32.mrb[0].mxu0
      %2449 = vmatprep.mubr.f32.mxu0 0.0
      %2450 = vmatmul.mubr.f32.gmra.mrb[0].mxu0 %v2100
      %v2451 = vpop.f32.mrb[0].mxu0
      %v2452 = vadd.f32 %v2154, %v2451
      %v2453 = vpop.f32.mrb[0].mxu0
      %2454 = vmatprep.mubr.f32.mxu0 0.0
      %2455 = vmatmul.mubr.f32.gmra.mrb[0].mxu0 %v2102
      %v2456 = vpop.f32.mrb[0].mxu0
      %v2457 = vadd.f32 %v2154, %v2456
      %v2458 = vpop.f32.mrb[0].mxu0
      %2459 = vmatprep.mubr.f32.mxu0 0.0
      %2460 = vmatmul.mubr.f32.gmra.mrb[0].mxu0 %v2104
      %v2461 = vpop.f32.mrb[0].mxu0
      %v2462 = vadd.f32 %v2154, %v2461
      %v2463 = vpop.f32.mrb[0].mxu0
      %2464 = vmatprep.mubr.f32.mxu0 0.0
      %2465 = vmatmul.mubr.f32.gmra.mrb[0].mxu0 %v2106
      %v2466 = vpop.f32.mrb[0].mxu0
      %v2467 = vadd.f32 %v2154, %v2466
      %v2468 = vpop.f32.mrb[0].mxu0
      %2469 = vmatprep.mubr.f32.mxu0 0.0
      %2470 = vmatmul.mubr.f32.gmra.mrb[0].mxu0 %v2108
      %v2471 = vpop.f32.mrb[0].mxu0
      %v2472 = vadd.f32 %v2154, %v2471
      %v2473 = vpop.f32.mrb[0].mxu0
      %2474 = vmatprep.mubr.f32.mxu0 0.0
      %2475 = vmatmul.mubr.f32.gmra.mrb[0].mxu0 %v2110
      %v2476 = vpop.f32.mrb[0].mxu0
      %v2477 = vadd.f32 %v2154, %v2476
      %v2478 = vpop.f32.mrb[0].mxu0
      %2479 = vmatprep.mubr.f32.mxu0 0.0
      %2480 = vmatmul.mubr.f32.gmra.mrb[0].mxu0 %v2112
      %v2481 = vpop.f32.mrb[0].mxu0
      %v2482 = vadd.f32 %v2154, %v2481
      %v2483 = vpop.f32.mrb[0].mxu0
      %2484 = vmatprep.mubr.f32.mxu0 0.0
      %2485 = vmatmul.mubr.f32.gmra.mrb[0].mxu0 %v2114
      %v2486 = vpop.f32.mrb[0].mxu0
      %v2487 = vadd.f32 %v2154, %v2486
      %v2488 = vpop.f32.mrb[0].mxu0
      %2489 = vmatprep.mubr.f32.mxu0 0.0
      %2490 = vmatmul.mubr.f32.gmra.mrb[0].mxu0 %v2116
      %v2491 = vpop.f32.mrb[0].mxu0
      %v2492 = vadd.f32 %v2154, %v2491
      %v2493 = vpop.f32.mrb[0].mxu0
      %2494 = vmatprep.mubr.f32.mxu0 0.0
      %2495 = vmatmul.mubr.f32.gmra.mrb[0].mxu0 %v2118
      %v2496 = vpop.f32.mrb[0].mxu0
      %v2497 = vadd.f32 %v2154, %v2496
      %v2498 = vpop.f32.mrb[0].mxu0
      %2499 = vmatprep.mubr.f32.mxu0 0.0
      %2500 = vmatmul.mubr.f32.gmra.mrb[0].mxu0 %v2120
      %v2501 = vpop.f32.mrb[0].mxu0
      %v2502 = vadd.f32 %v2154, %v2501
      %v2503 = vpop.f32.mrb[0].mxu0
      %2504 = vmatprep.mubr.f32.mxu0 0.0
      %2505 = vmatmul.mubr.f32.gmra.mrb[0].mxu0 %v2122
      %v2506 = vpop.f32.mrb[0].mxu0
      %v2507 = vadd.f32 %v2154, %v2506
      %v2508 = vpop.f32.mrb[0].mxu0
      %2509 = vmatprep.mubr.f32.mxu0 0.0
      %2510 = vmatmul.mubr.f32.gmra.mrb[0].mxu0 %v2124
      %v2511 = vpop.f32.mrb[0].mxu0
      %v2512 = vadd.f32 %v2154, %v2511
      %v2513 = vpop.f32.mrb[0].mxu0
      %2514 = vmatprep.mubr.f32.mxu0 0.0
      %2515 = vmatmul.mubr.f32.gmra.mrb[0].mxu0 %v2126
      %v2516 = vpop.f32.mrb[0].mxu0
      %v2517 = vadd.f32 %v2154, %v2516
      %v2518 = vpop.f32.mrb[0].mxu0
      %2519 = vmatprep.mubr.f32.mxu0 0.0
      %2520 = vmatmul.mubr.f32.gmra.mrb[0].mxu0 %v2128
      %v2521 = vpop.f32.mrb[0].mxu0
      %v2522 = vadd.f32 %v2154, %v2521
      %v2523 = vpop.f32.mrb[0].mxu0
      %2524 = vmatprep.mubr.f32.mxu0 0.0
      %2525 = vmatmul.mubr.f32.gmra.mrb[0].mxu0 %v2130
      %v2526 = vpop.f32.mrb[0].mxu0
      %v2527 = vadd.f32 %v2154, %v2526
      %v2528 = vpop.f32.mrb[0].mxu0
      %2529 = vmatprep.mubr.f32.mxu0 0.0
      %2530 = vmatmul.mubr.f32.gmra.mrb[0].mxu0 %v2132
      %v2531 = vpop.f32.mrb[0].mxu0
      %v2532 = vadd.f32 %v2154, %v2531
      %v2533 = vpop.f32.mrb[0].mxu0
      %2534 = vmatprep.mubr.f32.mxu0 0.0
      %2535 = vmatmul.mubr.f32.gmra.mrb[0].mxu0 %v2134
      %v2536 = vpop.f32.mrb[0].mxu0
      %v2537 = vadd.f32 %v2154, %v2536
      %v2538 = vpop.f32.mrb[0].mxu0
      %2539 = vdwg.mxu0
      %v2540 = vxor.u32 %v2222, 2147483648
      %v2541 = vxor.u32 %v2227, 2147483648
      %v2542 = vxor.u32 %v2232, 2147483648
      %v2543 = vxor.u32 %v2237, 2147483648
      %v2544 = vxor.u32 %v2242, 2147483648
      %v2545 = vxor.u32 %v2247, 2147483648
      %v2546 = vxor.u32 %v2252, 2147483648
      %v2547 = vxor.u32 %v2257, 2147483648
      %v2548 = vxor.u32 %v2262, 2147483648
      %v2549 = vxor.u32 %v2267, 2147483648
      %v2550 = vxor.u32 %v2272, 2147483648
      %v2551 = vxor.u32 %v2277, 2147483648
      %v2552 = vxor.u32 %v2282, 2147483648
      %v2553 = vxor.u32 %v2287, 2147483648
      %v2554 = vxor.u32 %v2292, 2147483648
      %v2555 = vxor.u32 %v2297, 2147483648
      %v2556 = vxor.u32 %v2302, 2147483648
      %v2557 = vxor.u32 %v2307, 2147483648
      %v2558 = vxor.u32 %v2312, 2147483648
      %v2559 = vxor.u32 %v2317, 2147483648
      %v2560 = vxor.u32 %v2322, 2147483648
      %v2561 = vxor.u32 %v2327, 2147483648
      %v2562 = vxor.u32 %v2332, 2147483648
      %v2563 = vxor.u32 %v2337, 2147483648
      %v2564 = vxor.u32 %v2342, 2147483648
      %v2565 = vxor.u32 %v2347, 2147483648
      %v2566 = vxor.u32 %v2352, 2147483648
      %v2567 = vxor.u32 %v2357, 2147483648
      %v2568 = vxor.u32 %v2362, 2147483648
      %v2569 = vxor.u32 %v2367, 2147483648
      %v2570 = vxor.u32 %v2372, 2147483648
      %v2571 = vxor.u32 %v2377, 2147483648
      %v2572 = vxor.u32 %v2382, 2147483648
      %v2573 = vxor.u32 %v2387, 2147483648
      %v2574 = vxor.u32 %v2392, 2147483648
      %v2575 = vxor.u32 %v2397, 2147483648
      %v2576 = vxor.u32 %v2402, 2147483648
      %v2577 = vxor.u32 %v2407, 2147483648
      %v2578 = vxor.u32 %v2412, 2147483648
      %v2579 = vxor.u32 %v2417, 2147483648
      %v2580 = vxor.u32 %v2422, 2147483648
      %v2581 = vxor.u32 %v2427, 2147483648
      %v2582 = vxor.u32 %v2432, 2147483648
      %v2583 = vxor.u32 %v2437, 2147483648
      %v2584 = vxor.u32 %v2442, 2147483648
      %v2585 = vxor.u32 %v2447, 2147483648
      %v2586 = vxor.u32 %v2452, 2147483648
      %v2587 = vxor.u32 %v2457, 2147483648
      %v2588 = vxor.u32 %v2462, 2147483648
      %v2589 = vxor.u32 %v2467, 2147483648
      %v2590 = vxor.u32 %v2472, 2147483648
      %v2591 = vxor.u32 %v2477, 2147483648
      %v2592 = vxor.u32 %v2482, 2147483648
      %v2593 = vxor.u32 %v2487, 2147483648
      %v2594 = vxor.u32 %v2492, 2147483648
      %v2595 = vxor.u32 %v2497, 2147483648
      %v2596 = vxor.u32 %v2502, 2147483648
      %v2597 = vxor.u32 %v2507, 2147483648
      %v2598 = vxor.u32 %v2512, 2147483648
      %v2599 = vxor.u32 %v2517, 2147483648
      %v2600 = vxor.u32 %v2522, 2147483648
      %v2601 = vxor.u32 %v2527, 2147483648
      %v2602 = vxor.u32 %v2532, 2147483648
      %v2603 = vxor.u32 %v2537, 2147483648
      %v2604 = vmul.f32 %v2540, 1.442695
      %v2605 = vpow.pop %v2604
      %v2606 = vmul.f32 %v2541, 1.442695
      %v2607 = vpow.pop %v2606
      %v2608 = vmul.f32 %v2542, 1.442695
      %v2609 = vpow.pop %v2608
      %v2610 = vmul.f32 %v2543, 1.442695
      %v2611 = vpow.pop %v2610
      %v2612 = vmul.f32 %v2544, 1.442695
      %v2613 = vpow.pop %v2612
      %v2614 = vmul.f32 %v2545, 1.442695
      %v2615 = vpow.pop %v2614
      %v2616 = vmul.f32 %v2546, 1.442695
      %v2617 = vpow.pop %v2616
      %v2618 = vmul.f32 %v2547, 1.442695
      %v2619 = vpow.pop %v2618
      %v2620 = vmul.f32 %v2548, 1.442695
      %v2621 = vpow.pop %v2620
      %v2622 = vmul.f32 %v2549, 1.442695
      %v2623 = vpow.pop %v2622
      %v2624 = vmul.f32 %v2550, 1.442695
      %v2625 = vpow.pop %v2624
      %v2626 = vmul.f32 %v2551, 1.442695
      %v2627 = vpow.pop %v2626
      %v2628 = vmul.f32 %v2552, 1.442695
      %v2629 = vpow.pop %v2628
      %v2630 = vmul.f32 %v2553, 1.442695
      %v2631 = vpow.pop %v2630
      %v2632 = vmul.f32 %v2554, 1.442695
      %v2633 = vpow.pop %v2632
      %v2634 = vmul.f32 %v2555, 1.442695
      %v2635 = vpow.pop %v2634
      %v2636 = vmul.f32 %v2556, 1.442695
      %v2637 = vpow.pop %v2636
      %v2638 = vmul.f32 %v2557, 1.442695
      %v2639 = vpow.pop %v2638
      %v2640 = vmul.f32 %v2558, 1.442695
      %v2641 = vpow.pop %v2640
      %v2642 = vmul.f32 %v2559, 1.442695
      %v2643 = vpow.pop %v2642
      %v2644 = vmul.f32 %v2560, 1.442695
      %v2645 = vpow.pop %v2644
      %v2646 = vmul.f32 %v2561, 1.442695
      %v2647 = vpow.pop %v2646
      %v2648 = vmul.f32 %v2562, 1.442695
      %v2649 = vpow.pop %v2648
      %v2650 = vmul.f32 %v2563, 1.442695
      %v2651 = vpow.pop %v2650
      %v2652 = vmul.f32 %v2564, 1.442695
      %v2653 = vpow.pop %v2652
      %v2654 = vmul.f32 %v2565, 1.442695
      %v2655 = vpow.pop %v2654
      %v2656 = vmul.f32 %v2566, 1.442695
      %v2657 = vpow.pop %v2656
      %v2658 = vmul.f32 %v2567, 1.442695
      %v2659 = vpow.pop %v2658
      %v2660 = vmul.f32 %v2568, 1.442695
      %v2661 = vpow.pop %v2660
      %v2662 = vmul.f32 %v2569, 1.442695
      %v2663 = vpow.pop %v2662
      %v2664 = vmul.f32 %v2570, 1.442695
      %v2665 = vpow.pop %v2664
      %v2666 = vmul.f32 %v2571, 1.442695
      %v2667 = vpow.pop %v2666
      %v2668 = vmul.f32 %v2572, 1.442695
      %v2669 = vpow.pop %v2668
      %v2670 = vmul.f32 %v2573, 1.442695
      %v2671 = vpow.pop %v2670
      %v2672 = vmul.f32 %v2574, 1.442695
      %v2673 = vpow.pop %v2672
      %v2674 = vmul.f32 %v2575, 1.442695
      %v2675 = vpow.pop %v2674
      %v2676 = vmul.f32 %v2576, 1.442695
      %v2677 = vpow.pop %v2676
      %v2678 = vmul.f32 %v2577, 1.442695
      %v2679 = vpow.pop %v2678
      %v2680 = vmul.f32 %v2578, 1.442695
      %v2681 = vpow.pop %v2680
      %v2682 = vmul.f32 %v2579, 1.442695
      %v2683 = vpow.pop %v2682
      %v2684 = vmul.f32 %v2580, 1.442695
      %v2685 = vpow.pop %v2684
      %v2686 = vmul.f32 %v2581, 1.442695
      %v2687 = vpow.pop %v2686
      %v2688 = vmul.f32 %v2582, 1.442695
      %v2689 = vpow.pop %v2688
      %v2690 = vmul.f32 %v2583, 1.442695
      %v2691 = vpow.pop %v2690
      %v2692 = vmul.f32 %v2584, 1.442695
      %v2693 = vpow.pop %v2692
      %v2694 = vmul.f32 %v2585, 1.442695
      %v2695 = vpow.pop %v2694
      %v2696 = vmul.f32 %v2586, 1.442695
      %v2697 = vpow.pop %v2696
      %v2698 = vmul.f32 %v2587, 1.442695
      %v2699 = vpow.pop %v2698
      %v2700 = vmul.f32 %v2588, 1.442695
      %v2701 = vpow.pop %v2700
      %v2702 = vmul.f32 %v2589, 1.442695
      %v2703 = vpow.pop %v2702
      %v2704 = vmul.f32 %v2590, 1.442695
      %v2705 = vpow.pop %v2704
      %v2706 = vmul.f32 %v2591, 1.442695
      %v2707 = vpow.pop %v2706
      %v2708 = vmul.f32 %v2592, 1.442695
      %v2709 = vpow.pop %v2708
      %v2710 = vmul.f32 %v2593, 1.442695
      %v2711 = vpow.pop %v2710
      %v2712 = vmul.f32 %v2594, 1.442695
      %v2713 = vpow.pop %v2712
      %v2714 = vmul.f32 %v2595, 1.442695
      %v2715 = vpow.pop %v2714
      %v2716 = vmul.f32 %v2596, 1.442695
      %v2717 = vpow.pop %v2716
      %v2718 = vmul.f32 %v2597, 1.442695
      %v2719 = vpow.pop %v2718
      %v2720 = vmul.f32 %v2598, 1.442695
      %v2721 = vpow.pop %v2720
      %v2722 = vmul.f32 %v2599, 1.442695
      %v2723 = vpow.pop %v2722
      %v2724 = vmul.f32 %v2600, 1.442695
      %v2725 = vpow.pop %v2724
      %v2726 = vmul.f32 %v2601, 1.442695
      %v2727 = vpow.pop %v2726
      %v2728 = vmul.f32 %v2602, 1.442695
      %v2729 = vpow.pop %v2728
      %v2730 = vmul.f32 %v2603, 1.442695
      %v2731 = vpow.pop %v2730
      %v2732 = vadd.f32 %v2605, 1.0
      %v2733 = vadd.f32 %v2607, 1.0
      %v2734 = vadd.f32 %v2609, 1.0
      %v2735 = vadd.f32 %v2611, 1.0
      %v2736 = vadd.f32 %v2613, 1.0
      %v2737 = vadd.f32 %v2615, 1.0
      %v2738 = vadd.f32 %v2617, 1.0
      %v2739 = vadd.f32 %v2619, 1.0
      %v2740 = vadd.f32 %v2621, 1.0
      %v2741 = vadd.f32 %v2623, 1.0
      %v2742 = vadd.f32 %v2625, 1.0
      %v2743 = vadd.f32 %v2627, 1.0
      %v2744 = vadd.f32 %v2629, 1.0
      %v2745 = vadd.f32 %v2631, 1.0
      %v2746 = vadd.f32 %v2633, 1.0
      %v2747 = vadd.f32 %v2635, 1.0
      %v2748 = vadd.f32 %v2637, 1.0
      %v2749 = vadd.f32 %v2639, 1.0
      %v2750 = vadd.f32 %v2641, 1.0
      %v2751 = vadd.f32 %v2643, 1.0
      %v2752 = vadd.f32 %v2645, 1.0
      %v2753 = vadd.f32 %v2647, 1.0
      %v2754 = vadd.f32 %v2649, 1.0
      %v2755 = vadd.f32 %v2651, 1.0
      %v2756 = vadd.f32 %v2653, 1.0
      %v2757 = vadd.f32 %v2655, 1.0
      %v2758 = vadd.f32 %v2657, 1.0
      %v2759 = vadd.f32 %v2659, 1.0
      %v2760 = vadd.f32 %v2661, 1.0
      %v2761 = vadd.f32 %v2663, 1.0
      %v2762 = vadd.f32 %v2665, 1.0
      %v2763 = vadd.f32 %v2667, 1.0
      %v2764 = vadd.f32 %v2669, 1.0
      %v2765 = vadd.f32 %v2671, 1.0
      %v2766 = vadd.f32 %v2673, 1.0
      %v2767 = vadd.f32 %v2675, 1.0
      %v2768 = vadd.f32 %v2677, 1.0
      %v2769 = vadd.f32 %v2679, 1.0
      %v2770 = vadd.f32 %v2681, 1.0
      %v2771 = vadd.f32 %v2683, 1.0
      %v2772 = vadd.f32 %v2685, 1.0
      %v2773 = vadd.f32 %v2687, 1.0
      %v2774 = vadd.f32 %v2689, 1.0
      %v2775 = vadd.f32 %v2691, 1.0
      %v2776 = vadd.f32 %v2693, 1.0
      %v2777 = vadd.f32 %v2695, 1.0
      %v2778 = vadd.f32 %v2697, 1.0
      %v2779 = vadd.f32 %v2699, 1.0
      %v2780 = vadd.f32 %v2701, 1.0
      %v2781 = vadd.f32 %v2703, 1.0
      %v2782 = vadd.f32 %v2705, 1.0
      %v2783 = vadd.f32 %v2707, 1.0
      %v2784 = vadd.f32 %v2709, 1.0
      %v2785 = vadd.f32 %v2711, 1.0
      %v2786 = vadd.f32 %v2713, 1.0
      %v2787 = vadd.f32 %v2715, 1.0
      %v2788 = vadd.f32 %v2717, 1.0
      %v2789 = vadd.f32 %v2719, 1.0
      %v2790 = vadd.f32 %v2721, 1.0
      %v2791 = vadd.f32 %v2723, 1.0
      %v2792 = vadd.f32 %v2725, 1.0
      %v2793 = vadd.f32 %v2727, 1.0
      %v2794 = vadd.f32 %v2729, 1.0
      %v2795 = vadd.f32 %v2731, 1.0
      %v2796 = vrcp.pop %v2732
      %v2797 = vmul.f32 1.0, %v2796
      %v2798 = vrcp.pop %v2733
      %v2799 = vmul.f32 1.0, %v2798
      %v2800 = vrcp.pop %v2734
      %v2801 = vmul.f32 1.0, %v2800
      %v2802 = vrcp.pop %v2735
      %v2803 = vmul.f32 1.0, %v2802
      %v2804 = vrcp.pop %v2736
      %v2805 = vmul.f32 1.0, %v2804
      %v2806 = vrcp.pop %v2737
      %v2807 = vmul.f32 1.0, %v2806
      %v2808 = vrcp.pop %v2738
      %v2809 = vmul.f32 1.0, %v2808
      %v2810 = vrcp.pop %v2739
      %v2811 = vmul.f32 1.0, %v2810
      %v2812 = vrcp.pop %v2740
      %v2813 = vmul.f32 1.0, %v2812
      %v2814 = vrcp.pop %v2741
      %v2815 = vmul.f32 1.0, %v2814
      %v2816 = vrcp.pop %v2742
      %v2817 = vmul.f32 1.0, %v2816
      %v2818 = vrcp.pop %v2743
      %v2819 = vmul.f32 1.0, %v2818
      %v2820 = vrcp.pop %v2744
      %v2821 = vmul.f32 1.0, %v2820
      %v2822 = vrcp.pop %v2745
      %v2823 = vmul.f32 1.0, %v2822
      %v2824 = vrcp.pop %v2746
      %v2825 = vmul.f32 1.0, %v2824
      %v2826 = vrcp.pop %v2747
      %v2827 = vmul.f32 1.0, %v2826
      %v2828 = vrcp.pop %v2748
      %v2829 = vmul.f32 1.0, %v2828
      %v2830 = vrcp.pop %v2749
      %v2831 = vmul.f32 1.0, %v2830
      %v2832 = vrcp.pop %v2750
      %v2833 = vmul.f32 1.0, %v2832
      %v2834 = vrcp.pop %v2751
      %v2835 = vmul.f32 1.0, %v2834
      %v2836 = vrcp.pop %v2752
      %v2837 = vmul.f32 1.0, %v2836
      %v2838 = vrcp.pop %v2753
      %v2839 = vmul.f32 1.0, %v2838
      %v2840 = vrcp.pop %v2754
      %v2841 = vmul.f32 1.0, %v2840
      %v2842 = vrcp.pop %v2755
      %v2843 = vmul.f32 1.0, %v2842
      %v2844 = vrcp.pop %v2756
      %v2845 = vmul.f32 1.0, %v2844
      %v2846 = vrcp.pop %v2757
      %v2847 = vmul.f32 1.0, %v2846
      %v2848 = vrcp.pop %v2758
      %v2849 = vmul.f32 1.0, %v2848
      %v2850 = vrcp.pop %v2759
      %v2851 = vmul.f32 1.0, %v2850
      %v2852 = vrcp.pop %v2760
      %v2853 = vmul.f32 1.0, %v2852
      %v2854 = vrcp.pop %v2761
      %v2855 = vmul.f32 1.0, %v2854
      %v2856 = vrcp.pop %v2762
      %v2857 = vmul.f32 1.0, %v2856
      %v2858 = vrcp.pop %v2763
      %v2859 = vmul.f32 1.0, %v2858
      %v2860 = vrcp.pop %v2764
      %v2861 = vmul.f32 1.0, %v2860
      %v2862 = vrcp.pop %v2765
      %v2863 = vmul.f32 1.0, %v2862
      %v2864 = vrcp.pop %v2766
      %v2865 = vmul.f32 1.0, %v2864
      %v2866 = vrcp.pop %v2767
      %v2867 = vmul.f32 1.0, %v2866
      %v2868 = vrcp.pop %v2768
      %v2869 = vmul.f32 1.0, %v2868
      %v2870 = vrcp.pop %v2769
      %v2871 = vmul.f32 1.0, %v2870
      %v2872 = vrcp.pop %v2770
      %v2873 = vmul.f32 1.0, %v2872
      %v2874 = vrcp.pop %v2771
      %v2875 = vmul.f32 1.0, %v2874
      %v2876 = vrcp.pop %v2772
      %v2877 = vmul.f32 1.0, %v2876
      %v2878 = vrcp.pop %v2773
      %v2879 = vmul.f32 1.0, %v2878
      %v2880 = vrcp.pop %v2774
      %v2881 = vmul.f32 1.0, %v2880
      %v2882 = vrcp.pop %v2775
      %v2883 = vmul.f32 1.0, %v2882
      %v2884 = vrcp.pop %v2776
      %v2885 = vmul.f32 1.0, %v2884
      %v2886 = vrcp.pop %v2777
      %v2887 = vmul.f32 1.0, %v2886
      %v2888 = vrcp.pop %v2778
      %v2889 = vmul.f32 1.0, %v2888
      %v2890 = vrcp.pop %v2779
      %v2891 = vmul.f32 1.0, %v2890
      %v2892 = vrcp.pop %v2780
      %v2893 = vmul.f32 1.0, %v2892
      %v2894 = vrcp.pop %v2781
      %v2895 = vmul.f32 1.0, %v2894
      %v2896 = vrcp.pop %v2782
      %v2897 = vmul.f32 1.0, %v2896
      %v2898 = vrcp.pop %v2783
      %v2899 = vmul.f32 1.0, %v2898
      %v2900 = vrcp.pop %v2784
      %v2901 = vmul.f32 1.0, %v2900
      %v2902 = vrcp.pop %v2785
      %v2903 = vmul.f32 1.0, %v2902
      %v2904 = vrcp.pop %v2786
      %v2905 = vmul.f32 1.0, %v2904
      %v2906 = vrcp.pop %v2787
      %v2907 = vmul.f32 1.0, %v2906
      %v2908 = vrcp.pop %v2788
      %v2909 = vmul.f32 1.0, %v2908
      %v2910 = vrcp.pop %v2789
      %v2911 = vmul.f32 1.0, %v2910
      %v2912 = vrcp.pop %v2790
      %v2913 = vmul.f32 1.0, %v2912
      %v2914 = vrcp.pop %v2791
      %v2915 = vmul.f32 1.0, %v2914
      %v2916 = vrcp.pop %v2792
      %v2917 = vmul.f32 1.0, %v2916
      %v2918 = vrcp.pop %v2793
      %v2919 = vmul.f32 1.0, %v2918
      %v2920 = vrcp.pop %v2794
      %v2921 = vmul.f32 1.0, %v2920
      %v2922 = vrcp.pop %v2795
      %v2923 = vmul.f32 1.0, %v2922
      %v2924 = vlaneseq
      %v2925 = vshrl.u32 %v2924, 7
      %v2926 = vsub.s32 4, %v2925
      %v2927 = vrot.slane %v906, %v2926
      %v2928 = vmul.f32 %v2797, %v2927
      %v2929 = vmul.f32 %v2799, %v2927
      %v2930 = vmul.f32 %v2801, %v2927
      %v2931 = vmul.f32 %v2803, %v2927
      %v2932 = vmul.f32 %v2805, %v2927
      %v2933 = vmul.f32 %v2807, %v2927
      %v2934 = vmul.f32 %v2809, %v2927
      %v2935 = vmul.f32 %v2811, %v2927
      %v2936 = vmul.f32 %v2813, %v2927
      %v2937 = vmul.f32 %v2815, %v2927
      %v2938 = vmul.f32 %v2817, %v2927
      %v2939 = vmul.f32 %v2819, %v2927
      %v2940 = vmul.f32 %v2821, %v2927
      %v2941 = vmul.f32 %v2823, %v2927
      %v2942 = vmul.f32 %v2825, %v2927
      %v2943 = vmul.f32 %v2827, %v2927
      %v2944 = vmul.f32 %v2829, %v2927
      %v2945 = vmul.f32 %v2831, %v2927
      %v2946 = vmul.f32 %v2833, %v2927
      %v2947 = vmul.f32 %v2835, %v2927
      %v2948 = vmul.f32 %v2837, %v2927
      %v2949 = vmul.f32 %v2839, %v2927
      %v2950 = vmul.f32 %v2841, %v2927
      %v2951 = vmul.f32 %v2843, %v2927
      %v2952 = vmul.f32 %v2845, %v2927
      %v2953 = vmul.f32 %v2847, %v2927
      %v2954 = vmul.f32 %v2849, %v2927
      %v2955 = vmul.f32 %v2851, %v2927
      %v2956 = vmul.f32 %v2853, %v2927
      %v2957 = vmul.f32 %v2855, %v2927
      %v2958 = vmul.f32 %v2857, %v2927
      %v2959 = vmul.f32 %v2859, %v2927
      %v2960 = vmul.f32 %v2861, %v2927
      %v2961 = vmul.f32 %v2863, %v2927
      %v2962 = vmul.f32 %v2865, %v2927
      %v2963 = vmul.f32 %v2867, %v2927
      %v2964 = vmul.f32 %v2869, %v2927
      %v2965 = vmul.f32 %v2871, %v2927
      %v2966 = vmul.f32 %v2873, %v2927
      %v2967 = vmul.f32 %v2875, %v2927
      %v2968 = vmul.f32 %v2877, %v2927
      %v2969 = vmul.f32 %v2879, %v2927
      %v2970 = vmul.f32 %v2881, %v2927
      %v2971 = vmul.f32 %v2883, %v2927
      %v2972 = vmul.f32 %v2885, %v2927
      %v2973 = vmul.f32 %v2887, %v2927
      %v2974 = vmul.f32 %v2889, %v2927
      %v2975 = vmul.f32 %v2891, %v2927
      %v2976 = vmul.f32 %v2893, %v2927
      %v2977 = vmul.f32 %v2895, %v2927
      %v2978 = vmul.f32 %v2897, %v2927
      %v2979 = vmul.f32 %v2899, %v2927
      %v2980 = vmul.f32 %v2901, %v2927
      %v2981 = vmul.f32 %v2903, %v2927
      %v2982 = vmul.f32 %v2905, %v2927
      %v2983 = vmul.f32 %v2907, %v2927
      %v2984 = vmul.f32 %v2909, %v2927
      %v2985 = vmul.f32 %v2911, %v2927
      %v2986 = vmul.f32 %v2913, %v2927
      %v2987 = vmul.f32 %v2915, %v2927
      %v2988 = vmul.f32 %v2917, %v2927
      %v2989 = vmul.f32 %v2919, %v2927
      %v2990 = vmul.f32 %v2921, %v2927
      %v2991 = vmul.f32 %v2923, %v2927
      %2992 = vadd.xlane.f32.xlu0 %v2928
      %v2993 = vpop.xlane.xlu0 %2992
      %2994 = vadd.xlane.f32.xlu0 %v2929
      %v2995 = vpop.xlane.xlu0 %2994
      %2996 = vadd.xlane.f32.xlu0 %v2930
      %v2997 = vpop.xlane.xlu0 %2996
      %2998 = vadd.xlane.f32.xlu0 %v2931
      %v2999 = vpop.xlane.xlu0 %2998
      %3000 = vadd.xlane.f32.xlu0 %v2932
      %v3001 = vpop.xlane.xlu0 %3000
      %3002 = vadd.xlane.f32.xlu0 %v2933
      %v3003 = vpop.xlane.xlu0 %3002
      %3004 = vadd.xlane.f32.xlu0 %v2934
      %v3005 = vpop.xlane.xlu0 %3004
      %3006 = vadd.xlane.f32.xlu0 %v2935
      %v3007 = vpop.xlane.xlu0 %3006
      %3008 = vadd.xlane.f32.xlu0 %v2936
      %v3009 = vpop.xlane.xlu0 %3008
      %3010 = vadd.xlane.f32.xlu0 %v2937
      %v3011 = vpop.xlane.xlu0 %3010
      %3012 = vadd.xlane.f32.xlu0 %v2938
      %v3013 = vpop.xlane.xlu0 %3012
      %3014 = vadd.xlane.f32.xlu0 %v2939
      %v3015 = vpop.xlane.xlu0 %3014
      %3016 = vadd.xlane.f32.xlu0 %v2940
      %v3017 = vpop.xlane.xlu0 %3016
      %3018 = vadd.xlane.f32.xlu0 %v2941
      %v3019 = vpop.xlane.xlu0 %3018
      %3020 = vadd.xlane.f32.xlu0 %v2942
      %v3021 = vpop.xlane.xlu0 %3020
      %3022 = vadd.xlane.f32.xlu0 %v2943
      %v3023 = vpop.xlane.xlu0 %3022
      %3024 = vadd.xlane.f32.xlu0 %v2944
      %v3025 = vpop.xlane.xlu0 %3024
      %3026 = vadd.xlane.f32.xlu0 %v2945
      %v3027 = vpop.xlane.xlu0 %3026
      %3028 = vadd.xlane.f32.xlu0 %v2946
      %v3029 = vpop.xlane.xlu0 %3028
      %3030 = vadd.xlane.f32.xlu0 %v2947
      %v3031 = vpop.xlane.xlu0 %3030
      %3032 = vadd.xlane.f32.xlu0 %v2948
      %v3033 = vpop.xlane.xlu0 %3032
      %3034 = vadd.xlane.f32.xlu0 %v2949
      %v3035 = vpop.xlane.xlu0 %3034
      %3036 = vadd.xlane.f32.xlu0 %v2950
      %v3037 = vpop.xlane.xlu0 %3036
      %3038 = vadd.xlane.f32.xlu0 %v2951
      %v3039 = vpop.xlane.xlu0 %3038
      %3040 = vadd.xlane.f32.xlu0 %v2952
      %v3041 = vpop.xlane.xlu0 %3040
      %3042 = vadd.xlane.f32.xlu0 %v2953
      %v3043 = vpop.xlane.xlu0 %3042
      %3044 = vadd.xlane.f32.xlu0 %v2954
      %v3045 = vpop.xlane.xlu0 %3044
      %3046 = vadd.xlane.f32.xlu0 %v2955
      %v3047 = vpop.xlane.xlu0 %3046
      %3048 = vadd.xlane.f32.xlu0 %v2956
      %v3049 = vpop.xlane.xlu0 %3048
      %3050 = vadd.xlane.f32.xlu0 %v2957
      %v3051 = vpop.xlane.xlu0 %3050
      %3052 = vadd.xlane.f32.xlu0 %v2958
      %v3053 = vpop.xlane.xlu0 %3052
      %3054 = vadd.xlane.f32.xlu0 %v2959
      %v3055 = vpop.xlane.xlu0 %3054
      %3056 = vadd.xlane.f32.xlu0 %v2960
      %v3057 = vpop.xlane.xlu0 %3056
      %3058 = vadd.xlane.f32.xlu0 %v2961
      %v3059 = vpop.xlane.xlu0 %3058
      %3060 = vadd.xlane.f32.xlu0 %v2962
      %v3061 = vpop.xlane.xlu0 %3060
      %3062 = vadd.xlane.f32.xlu0 %v2963
      %v3063 = vpop.xlane.xlu0 %3062
      %3064 = vadd.xlane.f32.xlu0 %v2964
      %v3065 = vpop.xlane.xlu0 %3064
      %3066 = vadd.xlane.f32.xlu0 %v2965
      %v3067 = vpop.xlane.xlu0 %3066
      %3068 = vadd.xlane.f32.xlu0 %v2966
      %v3069 = vpop.xlane.xlu0 %3068
      %3070 = vadd.xlane.f32.xlu0 %v2967
      %v3071 = vpop.xlane.xlu0 %3070
      %3072 = vadd.xlane.f32.xlu0 %v2968
      %v3073 = vpop.xlane.xlu0 %3072
      %3074 = vadd.xlane.f32.xlu0 %v2969
      %v3075 = vpop.xlane.xlu0 %3074
      %3076 = vadd.xlane.f32.xlu0 %v2970
      %v3077 = vpop.xlane.xlu0 %3076
      %3078 = vadd.xlane.f32.xlu0 %v2971
      %v3079 = vpop.xlane.xlu0 %3078
      %3080 = vadd.xlane.f32.xlu0 %v2972
      %v3081 = vpop.xlane.xlu0 %3080
      %3082 = vadd.xlane.f32.xlu0 %v2973
      %v3083 = vpop.xlane.xlu0 %3082
      %3084 = vadd.xlane.f32.xlu0 %v2974
      %v3085 = vpop.xlane.xlu0 %3084
      %3086 = vadd.xlane.f32.xlu0 %v2975
      %v3087 = vpop.xlane.xlu0 %3086
      %3088 = vadd.xlane.f32.xlu0 %v2976
      %v3089 = vpop.xlane.xlu0 %3088
      %3090 = vadd.xlane.f32.xlu0 %v2977
      %v3091 = vpop.xlane.xlu0 %3090
      %3092 = vadd.xlane.f32.xlu0 %v2978
      %v3093 = vpop.xlane.xlu0 %3092
      %3094 = vadd.xlane.f32.xlu0 %v2979
      %v3095 = vpop.xlane.xlu0 %3094
      %3096 = vadd.xlane.f32.xlu0 %v2980
      %v3097 = vpop.xlane.xlu0 %3096
      %3098 = vadd.xlane.f32.xlu0 %v2981
      %v3099 = vpop.xlane.xlu0 %3098
      %3100 = vadd.xlane.f32.xlu0 %v2982
      %v3101 = vpop.xlane.xlu0 %3100
      %3102 = vadd.xlane.f32.xlu0 %v2983
      %v3103 = vpop.xlane.xlu0 %3102
      %3104 = vadd.xlane.f32.xlu0 %v2984
      %v3105 = vpop.xlane.xlu0 %3104
      %3106 = vadd.xlane.f32.xlu0 %v2985
      %v3107 = vpop.xlane.xlu0 %3106
      %3108 = vadd.xlane.f32.xlu0 %v2986
      %v3109 = vpop.xlane.xlu0 %3108
      %3110 = vadd.xlane.f32.xlu0 %v2987
      %v3111 = vpop.xlane.xlu0 %3110
      %3112 = vadd.xlane.f32.xlu0 %v2988
      %v3113 = vpop.xlane.xlu0 %3112
      %3114 = vadd.xlane.f32.xlu0 %v2989
      %v3115 = vpop.xlane.xlu0 %3114
      %3116 = vadd.xlane.f32.xlu0 %v2990
      %v3117 = vpop.xlane.xlu0 %3116
      %3118 = vadd.xlane.f32.xlu0 %v2991
      %v3119 = vpop.xlane.xlu0 %3118
      %v3120 = vlaneseq
      %v3121 = vshrl.u32 %v3120, 7
      %v3122 = vsub.s32 5, %v3121
      %v3123 = vrot.slane %v906, %v3122
      %v3124 = vadd.f32 %v2993, %v3123
      %v3125 = vadd.f32 %v2995, %v3123
      %v3126 = vadd.f32 %v2997, %v3123
      %v3127 = vadd.f32 %v2999, %v3123
      %v3128 = vadd.f32 %v3001, %v3123
      %v3129 = vadd.f32 %v3003, %v3123
      %v3130 = vadd.f32 %v3005, %v3123
      %v3131 = vadd.f32 %v3007, %v3123
      %v3132 = vadd.f32 %v3009, %v3123
      %v3133 = vadd.f32 %v3011, %v3123
      %v3134 = vadd.f32 %v3013, %v3123
      %v3135 = vadd.f32 %v3015, %v3123
      %v3136 = vadd.f32 %v3017, %v3123
      %v3137 = vadd.f32 %v3019, %v3123
      %v3138 = vadd.f32 %v3021, %v3123
      %v3139 = vadd.f32 %v3023, %v3123
      %v3140 = vadd.f32 %v3025, %v3123
      %v3141 = vadd.f32 %v3027, %v3123
      %v3142 = vadd.f32 %v3029, %v3123
      %v3143 = vadd.f32 %v3031, %v3123
      %v3144 = vadd.f32 %v3033, %v3123
      %v3145 = vadd.f32 %v3035, %v3123
      %v3146 = vadd.f32 %v3037, %v3123
      %v3147 = vadd.f32 %v3039, %v3123
      %v3148 = vadd.f32 %v3041, %v3123
      %v3149 = vadd.f32 %v3043, %v3123
      %v3150 = vadd.f32 %v3045, %v3123
      %v3151 = vadd.f32 %v3047, %v3123
      %v3152 = vadd.f32 %v3049, %v3123
      %v3153 = vadd.f32 %v3051, %v3123
      %v3154 = vadd.f32 %v3053, %v3123
      %v3155 = vadd.f32 %v3055, %v3123
      %v3156 = vadd.f32 %v3057, %v3123
      %v3157 = vadd.f32 %v3059, %v3123
      %v3158 = vadd.f32 %v3061, %v3123
      %v3159 = vadd.f32 %v3063, %v3123
      %v3160 = vadd.f32 %v3065, %v3123
      %v3161 = vadd.f32 %v3067, %v3123
      %v3162 = vadd.f32 %v3069, %v3123
      %v3163 = vadd.f32 %v3071, %v3123
      %v3164 = vadd.f32 %v3073, %v3123
      %v3165 = vadd.f32 %v3075, %v3123
      %v3166 = vadd.f32 %v3077, %v3123
      %v3167 = vadd.f32 %v3079, %v3123
      %v3168 = vadd.f32 %v3081, %v3123
      %v3169 = vadd.f32 %v3083, %v3123
      %v3170 = vadd.f32 %v3085, %v3123
      %v3171 = vadd.f32 %v3087, %v3123
      %v3172 = vadd.f32 %v3089, %v3123
      %v3173 = vadd.f32 %v3091, %v3123
      %v3174 = vadd.f32 %v3093, %v3123
      %v3175 = vadd.f32 %v3095, %v3123
      %v3176 = vadd.f32 %v3097, %v3123
      %v3177 = vadd.f32 %v3099, %v3123
      %v3178 = vadd.f32 %v3101, %v3123
      %v3179 = vadd.f32 %v3103, %v3123
      %v3180 = vadd.f32 %v3105, %v3123
      %v3181 = vadd.f32 %v3107, %v3123
      %v3182 = vadd.f32 %v3109, %v3123
      %v3183 = vadd.f32 %v3111, %v3123
      %v3184 = vadd.f32 %v3113, %v3123
      %v3185 = vadd.f32 %v3115, %v3123
      %v3186 = vadd.f32 %v3117, %v3123
      %v3187 = vadd.f32 %v3119, %v3123
      %v3188 = vxor.u32 %v3124, 2147483648
      %v3189 = vxor.u32 %v3125, 2147483648
      %v3190 = vxor.u32 %v3126, 2147483648
      %v3191 = vxor.u32 %v3127, 2147483648
      %v3192 = vxor.u32 %v3128, 2147483648
      %v3193 = vxor.u32 %v3129, 2147483648
      %v3194 = vxor.u32 %v3130, 2147483648
      %v3195 = vxor.u32 %v3131, 2147483648
      %v3196 = vxor.u32 %v3132, 2147483648
      %v3197 = vxor.u32 %v3133, 2147483648
      %v3198 = vxor.u32 %v3134, 2147483648
      %v3199 = vxor.u32 %v3135, 2147483648
      %v3200 = vxor.u32 %v3136, 2147483648
      %v3201 = vxor.u32 %v3137, 2147483648
      %v3202 = vxor.u32 %v3138, 2147483648
      %v3203 = vxor.u32 %v3139, 2147483648
      %v3204 = vxor.u32 %v3140, 2147483648
      %v3205 = vxor.u32 %v3141, 2147483648
      %v3206 = vxor.u32 %v3142, 2147483648
      %v3207 = vxor.u32 %v3143, 2147483648
      %v3208 = vxor.u32 %v3144, 2147483648
      %v3209 = vxor.u32 %v3145, 2147483648
      %v3210 = vxor.u32 %v3146, 2147483648
      %v3211 = vxor.u32 %v3147, 2147483648
      %v3212 = vxor.u32 %v3148, 2147483648
      %v3213 = vxor.u32 %v3149, 2147483648
      %v3214 = vxor.u32 %v3150, 2147483648
      %v3215 = vxor.u32 %v3151, 2147483648
      %v3216 = vxor.u32 %v3152, 2147483648
      %v3217 = vxor.u32 %v3153, 2147483648
      %v3218 = vxor.u32 %v3154, 2147483648
      %v3219 = vxor.u32 %v3155, 2147483648
      %v3220 = vxor.u32 %v3156, 2147483648
      %v3221 = vxor.u32 %v3157, 2147483648
      %v3222 = vxor.u32 %v3158, 2147483648
      %v3223 = vxor.u32 %v3159, 2147483648
      %v3224 = vxor.u32 %v3160, 2147483648
      %v3225 = vxor.u32 %v3161, 2147483648
      %v3226 = vxor.u32 %v3162, 2147483648
      %v3227 = vxor.u32 %v3163, 2147483648
      %v3228 = vxor.u32 %v3164, 2147483648
      %v3229 = vxor.u32 %v3165, 2147483648
      %v3230 = vxor.u32 %v3166, 2147483648
      %v3231 = vxor.u32 %v3167, 2147483648
      %v3232 = vxor.u32 %v3168, 2147483648
      %v3233 = vxor.u32 %v3169, 2147483648
      %v3234 = vxor.u32 %v3170, 2147483648
      %v3235 = vxor.u32 %v3171, 2147483648
      %v3236 = vxor.u32 %v3172, 2147483648
      %v3237 = vxor.u32 %v3173, 2147483648
      %v3238 = vxor.u32 %v3174, 2147483648
      %v3239 = vxor.u32 %v3175, 2147483648
      %v3240 = vxor.u32 %v3176, 2147483648
      %v3241 = vxor.u32 %v3177, 2147483648
      %v3242 = vxor.u32 %v3178, 2147483648
      %v3243 = vxor.u32 %v3179, 2147483648
      %v3244 = vxor.u32 %v3180, 2147483648
      %v3245 = vxor.u32 %v3181, 2147483648
      %v3246 = vxor.u32 %v3182, 2147483648
      %v3247 = vxor.u32 %v3183, 2147483648
      %v3248 = vxor.u32 %v3184, 2147483648
      %v3249 = vxor.u32 %v3185, 2147483648
      %v3250 = vxor.u32 %v3186, 2147483648
      %v3251 = vxor.u32 %v3187, 2147483648
      %v3252 = vmul.f32 %v3188, 1.442695
      %v3253 = vpow.pop %v3252
      %v3254 = vmul.f32 %v3189, 1.442695
      %v3255 = vpow.pop %v3254
      %v3256 = vmul.f32 %v3190, 1.442695
      %v3257 = vpow.pop %v3256
      %v3258 = vmul.f32 %v3191, 1.442695
      %v3259 = vpow.pop %v3258
      %v3260 = vmul.f32 %v3192, 1.442695
      %v3261 = vpow.pop %v3260
      %v3262 = vmul.f32 %v3193, 1.442695
      %v3263 = vpow.pop %v3262
      %v3264 = vmul.f32 %v3194, 1.442695
      %v3265 = vpow.pop %v3264
      %v3266 = vmul.f32 %v3195, 1.442695
      %v3267 = vpow.pop %v3266
      %v3268 = vmul.f32 %v3196, 1.442695
      %v3269 = vpow.pop %v3268
      %v3270 = vmul.f32 %v3197, 1.442695
      %v3271 = vpow.pop %v3270
      %v3272 = vmul.f32 %v3198, 1.442695
      %v3273 = vpow.pop %v3272
      %v3274 = vmul.f32 %v3199, 1.442695
      %v3275 = vpow.pop %v3274
      %v3276 = vmul.f32 %v3200, 1.442695
      %v3277 = vpow.pop %v3276
      %v3278 = vmul.f32 %v3201, 1.442695
      %v3279 = vpow.pop %v3278
      %v3280 = vmul.f32 %v3202, 1.442695
      %v3281 = vpow.pop %v3280
      %v3282 = vmul.f32 %v3203, 1.442695
      %v3283 = vpow.pop %v3282
      %v3284 = vmul.f32 %v3204, 1.442695
      %v3285 = vpow.pop %v3284
      %v3286 = vmul.f32 %v3205, 1.442695
      %v3287 = vpow.pop %v3286
      %v3288 = vmul.f32 %v3206, 1.442695
      %v3289 = vpow.pop %v3288
      %v3290 = vmul.f32 %v3207, 1.442695
      %v3291 = vpow.pop %v3290
      %v3292 = vmul.f32 %v3208, 1.442695
      %v3293 = vpow.pop %v3292
      %v3294 = vmul.f32 %v3209, 1.442695
      %v3295 = vpow.pop %v3294
      %v3296 = vmul.f32 %v3210, 1.442695
      %v3297 = vpow.pop %v3296
      %v3298 = vmul.f32 %v3211, 1.442695
      %v3299 = vpow.pop %v3298
      %v3300 = vmul.f32 %v3212, 1.442695
      %v3301 = vpow.pop %v3300
      %v3302 = vmul.f32 %v3213, 1.442695
      %v3303 = vpow.pop %v3302
      %v3304 = vmul.f32 %v3214, 1.442695
      %v3305 = vpow.pop %v3304
      %v3306 = vmul.f32 %v3215, 1.442695
      %v3307 = vpow.pop %v3306
      %v3308 = vmul.f32 %v3216, 1.442695
      %v3309 = vpow.pop %v3308
      %v3310 = vmul.f32 %v3217, 1.442695
      %v3311 = vpow.pop %v3310
      %v3312 = vmul.f32 %v3218, 1.442695
      %v3313 = vpow.pop %v3312
      %v3314 = vmul.f32 %v3219, 1.442695
      %v3315 = vpow.pop %v3314
      %v3316 = vmul.f32 %v3220, 1.442695
      %v3317 = vpow.pop %v3316
      %v3318 = vmul.f32 %v3221, 1.442695
      %v3319 = vpow.pop %v3318
      %v3320 = vmul.f32 %v3222, 1.442695
      %v3321 = vpow.pop %v3320
      %v3322 = vmul.f32 %v3223, 1.442695
      %v3323 = vpow.pop %v3322
      %v3324 = vmul.f32 %v3224, 1.442695
      %v3325 = vpow.pop %v3324
      %v3326 = vmul.f32 %v3225, 1.442695
      %v3327 = vpow.pop %v3326
      %v3328 = vmul.f32 %v3226, 1.442695
      %v3329 = vpow.pop %v3328
      %v3330 = vmul.f32 %v3227, 1.442695
      %v3331 = vpow.pop %v3330
      %v3332 = vmul.f32 %v3228, 1.442695
      %v3333 = vpow.pop %v3332
      %v3334 = vmul.f32 %v3229, 1.442695
      %v3335 = vpow.pop %v3334
      %v3336 = vmul.f32 %v3230, 1.442695
      %v3337 = vpow.pop %v3336
      %v3338 = vmul.f32 %v3231, 1.442695
      %v3339 = vpow.pop %v3338
      %v3340 = vmul.f32 %v3232, 1.442695
      %v3341 = vpow.pop %v3340
      %v3342 = vmul.f32 %v3233, 1.442695
      %v3343 = vpow.pop %v3342
      %v3344 = vmul.f32 %v3234, 1.442695
      %v3345 = vpow.pop %v3344
      %v3346 = vmul.f32 %v3235, 1.442695
      %v3347 = vpow.pop %v3346
      %v3348 = vmul.f32 %v3236, 1.442695
      %v3349 = vpow.pop %v3348
      %v3350 = vmul.f32 %v3237, 1.442695
      %v3351 = vpow.pop %v3350
      %v3352 = vmul.f32 %v3238, 1.442695
      %v3353 = vpow.pop %v3352
      %v3354 = vmul.f32 %v3239, 1.442695
      %v3355 = vpow.pop %v3354
      %v3356 = vmul.f32 %v3240, 1.442695
      %v3357 = vpow.pop %v3356
      %v3358 = vmul.f32 %v3241, 1.442695
      %v3359 = vpow.pop %v3358
      %v3360 = vmul.f32 %v3242, 1.442695
      %v3361 = vpow.pop %v3360
      %v3362 = vmul.f32 %v3243, 1.442695
      %v3363 = vpow.pop %v3362
      %v3364 = vmul.f32 %v3244, 1.442695
      %v3365 = vpow.pop %v3364
      %v3366 = vmul.f32 %v3245, 1.442695
      %v3367 = vpow.pop %v3366
      %v3368 = vmul.f32 %v3246, 1.442695
      %v3369 = vpow.pop %v3368
      %v3370 = vmul.f32 %v3247, 1.442695
      %v3371 = vpow.pop %v3370
      %v3372 = vmul.f32 %v3248, 1.442695
      %v3373 = vpow.pop %v3372
      %v3374 = vmul.f32 %v3249, 1.442695
      %v3375 = vpow.pop %v3374
      %v3376 = vmul.f32 %v3250, 1.442695
      %v3377 = vpow.pop %v3376
      %v3378 = vmul.f32 %v3251, 1.442695
      %v3379 = vpow.pop %v3378
      %v3380 = vadd.f32 %v3253, 1.0
      %v3381 = vadd.f32 %v3255, 1.0
      %v3382 = vadd.f32 %v3257, 1.0
      %v3383 = vadd.f32 %v3259, 1.0
      %v3384 = vadd.f32 %v3261, 1.0
      %v3385 = vadd.f32 %v3263, 1.0
      %v3386 = vadd.f32 %v3265, 1.0
      %v3387 = vadd.f32 %v3267, 1.0
      %v3388 = vadd.f32 %v3269, 1.0
      %v3389 = vadd.f32 %v3271, 1.0
      %v3390 = vadd.f32 %v3273, 1.0
      %v3391 = vadd.f32 %v3275, 1.0
      %v3392 = vadd.f32 %v3277, 1.0
      %v3393 = vadd.f32 %v3279, 1.0
      %v3394 = vadd.f32 %v3281, 1.0
      %v3395 = vadd.f32 %v3283, 1.0
      %v3396 = vadd.f32 %v3285, 1.0
      %v3397 = vadd.f32 %v3287, 1.0
      %v3398 = vadd.f32 %v3289, 1.0
      %v3399 = vadd.f32 %v3291, 1.0
      %v3400 = vadd.f32 %v3293, 1.0
      %v3401 = vadd.f32 %v3295, 1.0
      %v3402 = vadd.f32 %v3297, 1.0
      %v3403 = vadd.f32 %v3299, 1.0
      %v3404 = vadd.f32 %v3301, 1.0
      %v3405 = vadd.f32 %v3303, 1.0
      %v3406 = vadd.f32 %v3305, 1.0
      %v3407 = vadd.f32 %v3307, 1.0
      %v3408 = vadd.f32 %v3309, 1.0
      %v3409 = vadd.f32 %v3311, 1.0
      %v3410 = vadd.f32 %v3313, 1.0
      %v3411 = vadd.f32 %v3315, 1.0
      %v3412 = vadd.f32 %v3317, 1.0
      %v3413 = vadd.f32 %v3319, 1.0
      %v3414 = vadd.f32 %v3321, 1.0
      %v3415 = vadd.f32 %v3323, 1.0
      %v3416 = vadd.f32 %v3325, 1.0
      %v3417 = vadd.f32 %v3327, 1.0
      %v3418 = vadd.f32 %v3329, 1.0
      %v3419 = vadd.f32 %v3331, 1.0
      %v3420 = vadd.f32 %v3333, 1.0
      %v3421 = vadd.f32 %v3335, 1.0
      %v3422 = vadd.f32 %v3337, 1.0
      %v3423 = vadd.f32 %v3339, 1.0
      %v3424 = vadd.f32 %v3341, 1.0
      %v3425 = vadd.f32 %v3343, 1.0
      %v3426 = vadd.f32 %v3345, 1.0
      %v3427 = vadd.f32 %v3347, 1.0
      %v3428 = vadd.f32 %v3349, 1.0
      %v3429 = vadd.f32 %v3351, 1.0
      %v3430 = vadd.f32 %v3353, 1.0
      %v3431 = vadd.f32 %v3355, 1.0
      %v3432 = vadd.f32 %v3357, 1.0
      %v3433 = vadd.f32 %v3359, 1.0
      %v3434 = vadd.f32 %v3361, 1.0
      %v3435 = vadd.f32 %v3363, 1.0
      %v3436 = vadd.f32 %v3365, 1.0
      %v3437 = vadd.f32 %v3367, 1.0
      %v3438 = vadd.f32 %v3369, 1.0
      %v3439 = vadd.f32 %v3371, 1.0
      %v3440 = vadd.f32 %v3373, 1.0
      %v3441 = vadd.f32 %v3375, 1.0
      %v3442 = vadd.f32 %v3377, 1.0
      %v3443 = vadd.f32 %v3379, 1.0
      %v3444 = vrcp.pop %v3380
      %v3445 = vmul.f32 1.0, %v3444
      %v3446 = vrcp.pop %v3381
      %v3447 = vmul.f32 1.0, %v3446
      %v3448 = vrcp.pop %v3382
      %v3449 = vmul.f32 1.0, %v3448
      %v3450 = vrcp.pop %v3383
      %v3451 = vmul.f32 1.0, %v3450
      %v3452 = vrcp.pop %v3384
      %v3453 = vmul.f32 1.0, %v3452
      %v3454 = vrcp.pop %v3385
      %v3455 = vmul.f32 1.0, %v3454
      %v3456 = vrcp.pop %v3386
      %v3457 = vmul.f32 1.0, %v3456
      %v3458 = vrcp.pop %v3387
      %v3459 = vmul.f32 1.0, %v3458
      %v3460 = vrcp.pop %v3388
      %v3461 = vmul.f32 1.0, %v3460
      %v3462 = vrcp.pop %v3389
      %v3463 = vmul.f32 1.0, %v3462
      %v3464 = vrcp.pop %v3390
      %v3465 = vmul.f32 1.0, %v3464
      %v3466 = vrcp.pop %v3391
      %v3467 = vmul.f32 1.0, %v3466
      %v3468 = vrcp.pop %v3392
      %v3469 = vmul.f32 1.0, %v3468
      %v3470 = vrcp.pop %v3393
      %v3471 = vmul.f32 1.0, %v3470
      %v3472 = vrcp.pop %v3394
      %v3473 = vmul.f32 1.0, %v3472
      %v3474 = vrcp.pop %v3395
      %v3475 = vmul.f32 1.0, %v3474
      %v3476 = vrcp.pop %v3396
      %v3477 = vmul.f32 1.0, %v3476
      %v3478 = vrcp.pop %v3397
      %v3479 = vmul.f32 1.0, %v3478
      %v3480 = vrcp.pop %v3398
      %v3481 = vmul.f32 1.0, %v3480
      %v3482 = vrcp.pop %v3399
      %v3483 = vmul.f32 1.0, %v3482
      %v3484 = vrcp.pop %v3400
      %v3485 = vmul.f32 1.0, %v3484
      %v3486 = vrcp.pop %v3401
      %v3487 = vmul.f32 1.0, %v3486
      %v3488 = vrcp.pop %v3402
      %v3489 = vmul.f32 1.0, %v3488
      %v3490 = vrcp.pop %v3403
      %v3491 = vmul.f32 1.0, %v3490
      %v3492 = vrcp.pop %v3404
      %v3493 = vmul.f32 1.0, %v3492
      %v3494 = vrcp.pop %v3405
      %v3495 = vmul.f32 1.0, %v3494
      %v3496 = vrcp.pop %v3406
      %v3497 = vmul.f32 1.0, %v3496
      %v3498 = vrcp.pop %v3407
      %v3499 = vmul.f32 1.0, %v3498
      %v3500 = vrcp.pop %v3408
      %v3501 = vmul.f32 1.0, %v3500
      %v3502 = vrcp.pop %v3409
      %v3503 = vmul.f32 1.0, %v3502
      %v3504 = vrcp.pop %v3410
      %v3505 = vmul.f32 1.0, %v3504
      %v3506 = vrcp.pop %v3411
      %v3507 = vmul.f32 1.0, %v3506
      %v3508 = vrcp.pop %v3412
      %v3509 = vmul.f32 1.0, %v3508
      %v3510 = vrcp.pop %v3413
      %v3511 = vmul.f32 1.0, %v3510
      %v3512 = vrcp.pop %v3414
      %v3513 = vmul.f32 1.0, %v3512
      %v3514 = vrcp.pop %v3415
      %v3515 = vmul.f32 1.0, %v3514
      %v3516 = vrcp.pop %v3416
      %v3517 = vmul.f32 1.0, %v3516
      %v3518 = vrcp.pop %v3417
      %v3519 = vmul.f32 1.0, %v3518
      %v3520 = vrcp.pop %v3418
      %v3521 = vmul.f32 1.0, %v3520
      %v3522 = vrcp.pop %v3419
      %v3523 = vmul.f32 1.0, %v3522
      %v3524 = vrcp.pop %v3420
      %v3525 = vmul.f32 1.0, %v3524
      %v3526 = vrcp.pop %v3421
      %v3527 = vmul.f32 1.0, %v3526
      %v3528 = vrcp.pop %v3422
      %v3529 = vmul.f32 1.0, %v3528
      %v3530 = vrcp.pop %v3423
      %v3531 = vmul.f32 1.0, %v3530
      %v3532 = vrcp.pop %v3424
      %v3533 = vmul.f32 1.0, %v3532
      %v3534 = vrcp.pop %v3425
      %v3535 = vmul.f32 1.0, %v3534
      %v3536 = vrcp.pop %v3426
      %v3537 = vmul.f32 1.0, %v3536
      %v3538 = vrcp.pop %v3427
      %v3539 = vmul.f32 1.0, %v3538
      %v3540 = vrcp.pop %v3428
      %v3541 = vmul.f32 1.0, %v3540
      %v3542 = vrcp.pop %v3429
      %v3543 = vmul.f32 1.0, %v3542
      %v3544 = vrcp.pop %v3430
      %v3545 = vmul.f32 1.0, %v3544
      %v3546 = vrcp.pop %v3431
      %v3547 = vmul.f32 1.0, %v3546
      %v3548 = vrcp.pop %v3432
      %v3549 = vmul.f32 1.0, %v3548
      %v3550 = vrcp.pop %v3433
      %v3551 = vmul.f32 1.0, %v3550
      %v3552 = vrcp.pop %v3434
      %v3553 = vmul.f32 1.0, %v3552
      %v3554 = vrcp.pop %v3435
      %v3555 = vmul.f32 1.0, %v3554
      %v3556 = vrcp.pop %v3436
      %v3557 = vmul.f32 1.0, %v3556
      %v3558 = vrcp.pop %v3437
      %v3559 = vmul.f32 1.0, %v3558
      %v3560 = vrcp.pop %v3438
      %v3561 = vmul.f32 1.0, %v3560
      %v3562 = vrcp.pop %v3439
      %v3563 = vmul.f32 1.0, %v3562
      %v3564 = vrcp.pop %v3440
      %v3565 = vmul.f32 1.0, %v3564
      %v3566 = vrcp.pop %v3441
      %v3567 = vmul.f32 1.0, %v3566
      %v3568 = vrcp.pop %v3442
      %v3569 = vmul.f32 1.0, %v3568
      %v3570 = vrcp.pop %v3443
      %v3571 = vmul.f32 1.0, %v3570
      %3572 = vrot.lane.b32.xlu0 %v588, 1
      %v3573 = vpop.permute.xlu0 %3572
      %3574 = vrot.lane.b32.xlu0 %v593, 1
      %v3575 = vpop.permute.xlu0 %3574
      %3576 = vrot.lane.b32.xlu0 %v598, 1
      %v3577 = vpop.permute.xlu0 %3576
      %3578 = vrot.lane.b32.xlu0 %v603, 1
      %v3579 = vpop.permute.xlu0 %3578
      %3580 = vrot.lane.b32.xlu0 %v608, 1
      %v3581 = vpop.permute.xlu0 %3580
      %3582 = vrot.lane.b32.xlu0 %v613, 1
      %v3583 = vpop.permute.xlu0 %3582
      %3584 = vrot.lane.b32.xlu0 %v618, 1
      %v3585 = vpop.permute.xlu0 %3584
      %3586 = vrot.lane.b32.xlu0 %v623, 1
      %v3587 = vpop.permute.xlu0 %3586
      %3588 = vrot.lane.b32.xlu0 %v628, 1
      %v3589 = vpop.permute.xlu0 %3588
      %3590 = vrot.lane.b32.xlu0 %v633, 1
      %v3591 = vpop.permute.xlu0 %3590
      %3592 = vrot.lane.b32.xlu0 %v638, 1
      %v3593 = vpop.permute.xlu0 %3592
      %3594 = vrot.lane.b32.xlu0 %v643, 1
      %v3595 = vpop.permute.xlu0 %3594
      %3596 = vrot.lane.b32.xlu0 %v648, 1
      %v3597 = vpop.permute.xlu0 %3596
      %3598 = vrot.lane.b32.xlu0 %v653, 1
      %v3599 = vpop.permute.xlu0 %3598
      %3600 = vrot.lane.b32.xlu0 %v658, 1
      %v3601 = vpop.permute.xlu0 %3600
      %3602 = vrot.lane.b32.xlu0 %v663, 1
      %v3603 = vpop.permute.xlu0 %3602
      %3604 = vrot.lane.b32.xlu0 %v668, 1
      %v3605 = vpop.permute.xlu0 %3604
      %3606 = vrot.lane.b32.xlu0 %v673, 1
      %v3607 = vpop.permute.xlu0 %3606
      %3608 = vrot.lane.b32.xlu0 %v678, 1
      %v3609 = vpop.permute.xlu0 %3608
      %3610 = vrot.lane.b32.xlu0 %v683, 1
      %v3611 = vpop.permute.xlu0 %3610
      %3612 = vrot.lane.b32.xlu0 %v688, 1
      %v3613 = vpop.permute.xlu0 %3612
      %3614 = vrot.lane.b32.xlu0 %v693, 1
      %v3615 = vpop.permute.xlu0 %3614
      %3616 = vrot.lane.b32.xlu0 %v698, 1
      %v3617 = vpop.permute.xlu0 %3616
      %3618 = vrot.lane.b32.xlu0 %v703, 1
      %v3619 = vpop.permute.xlu0 %3618
      %3620 = vrot.lane.b32.xlu0 %v708, 1
      %v3621 = vpop.permute.xlu0 %3620
      %3622 = vrot.lane.b32.xlu0 %v713, 1
      %v3623 = vpop.permute.xlu0 %3622
      %3624 = vrot.lane.b32.xlu0 %v718, 1
      %v3625 = vpop.permute.xlu0 %3624
      %3626 = vrot.lane.b32.xlu0 %v723, 1
      %v3627 = vpop.permute.xlu0 %3626
      %3628 = vrot.lane.b32.xlu0 %v728, 1
      %v3629 = vpop.permute.xlu0 %3628
      %3630 = vrot.lane.b32.xlu0 %v733, 1
      %v3631 = vpop.permute.xlu0 %3630
      %3632 = vrot.lane.b32.xlu0 %v738, 1
      %v3633 = vpop.permute.xlu0 %3632
      %3634 = vrot.lane.b32.xlu0 %v743, 1
      %v3635 = vpop.permute.xlu0 %3634
      %3636 = vrot.lane.b32.xlu0 %v748, 1
      %v3637 = vpop.permute.xlu0 %3636
      %3638 = vrot.lane.b32.xlu0 %v753, 1
      %v3639 = vpop.permute.xlu0 %3638
      %3640 = vrot.lane.b32.xlu0 %v758, 1
      %v3641 = vpop.permute.xlu0 %3640
      %3642 = vrot.lane.b32.xlu0 %v763, 1
      %v3643 = vpop.permute.xlu0 %3642
      %3644 = vrot.lane.b32.xlu0 %v768, 1
      %v3645 = vpop.permute.xlu0 %3644
      %3646 = vrot.lane.b32.xlu0 %v773, 1
      %v3647 = vpop.permute.xlu0 %3646
      %3648 = vrot.lane.b32.xlu0 %v778, 1
      %v3649 = vpop.permute.xlu0 %3648
      %3650 = vrot.lane.b32.xlu0 %v783, 1
      %v3651 = vpop.permute.xlu0 %3650
      %3652 = vrot.lane.b32.xlu0 %v788, 1
      %v3653 = vpop.permute.xlu0 %3652
      %3654 = vrot.lane.b32.xlu0 %v793, 1
      %v3655 = vpop.permute.xlu0 %3654
      %3656 = vrot.lane.b32.xlu0 %v798, 1
      %v3657 = vpop.permute.xlu0 %3656
      %3658 = vrot.lane.b32.xlu0 %v803, 1
      %v3659 = vpop.permute.xlu0 %3658
      %3660 = vrot.lane.b32.xlu0 %v808, 1
      %v3661 = vpop.permute.xlu0 %3660
      %3662 = vrot.lane.b32.xlu0 %v813, 1
      %v3663 = vpop.permute.xlu0 %3662
      %3664 = vrot.lane.b32.xlu0 %v818, 1
      %v3665 = vpop.permute.xlu0 %3664
      %3666 = vrot.lane.b32.xlu0 %v823, 1
      %v3667 = vpop.permute.xlu0 %3666
      %3668 = vrot.lane.b32.xlu0 %v828, 1
      %v3669 = vpop.permute.xlu0 %3668
      %3670 = vrot.lane.b32.xlu0 %v833, 1
      %v3671 = vpop.permute.xlu0 %3670
      %3672 = vrot.lane.b32.xlu0 %v838, 1
      %v3673 = vpop.permute.xlu0 %3672
      %3674 = vrot.lane.b32.xlu0 %v843, 1
      %v3675 = vpop.permute.xlu0 %3674
      %3676 = vrot.lane.b32.xlu0 %v848, 1
      %v3677 = vpop.permute.xlu0 %3676
      %3678 = vrot.lane.b32.xlu0 %v853, 1
      %v3679 = vpop.permute.xlu0 %3678
      %3680 = vrot.lane.b32.xlu0 %v858, 1
      %v3681 = vpop.permute.xlu0 %3680
      %3682 = vrot.lane.b32.xlu0 %v863, 1
      %v3683 = vpop.permute.xlu0 %3682
      %3684 = vrot.lane.b32.xlu0 %v868, 1
      %v3685 = vpop.permute.xlu0 %3684
      %3686 = vrot.lane.b32.xlu0 %v873, 1
      %v3687 = vpop.permute.xlu0 %3686
      %3688 = vrot.lane.b32.xlu0 %v878, 1
      %v3689 = vpop.permute.xlu0 %3688
      %3690 = vrot.lane.b32.xlu0 %v883, 1
      %v3691 = vpop.permute.xlu0 %3690
      %3692 = vrot.lane.b32.xlu0 %v888, 1
      %v3693 = vpop.permute.xlu0 %3692
      %3694 = vrot.lane.b32.xlu0 %v893, 1
      %v3695 = vpop.permute.xlu0 %3694
      %3696 = vrot.lane.b32.xlu0 %v898, 1
      %v3697 = vpop.permute.xlu0 %3696
      %3698 = vrot.lane.b32.xlu0 %v903, 1
      %v3699 = vpop.permute.xlu0 %3698
      %v3764 = vmul.f32 %v3123, %v3573
      %v3765 = vmul.f32 %v3123, %v3575
      %v3766 = vmul.f32 %v3123, %v3577
      %v3767 = vmul.f32 %v3123, %v3579
      %v3768 = vmul.f32 %v3123, %v3581
      %v3769 = vmul.f32 %v3123, %v3583
      %v3770 = vmul.f32 %v3123, %v3585
      %v3771 = vmul.f32 %v3123, %v3587
      %v3772 = vmul.f32 %v3123, %v3589
      %v3773 = vmul.f32 %v3123, %v3591
      %v3774 = vmul.f32 %v3123, %v3593
      %v3775 = vmul.f32 %v3123, %v3595
      %v3776 = vmul.f32 %v3123, %v3597
      %v3777 = vmul.f32 %v3123, %v3599
      %v3778 = vmul.f32 %v3123, %v3601
      %v3779 = vmul.f32 %v3123, %v3603
      %v3780 = vmul.f32 %v3123, %v3605
      %v3781 = vmul.f32 %v3123, %v3607
      %v3782 = vmul.f32 %v3123, %v3609
      %v3783 = vmul.f32 %v3123, %v3611
      %v3784 = vmul.f32 %v3123, %v3613
      %v3785 = vmul.f32 %v3123, %v3615
      %v3786 = vmul.f32 %v3123, %v3617
      %v3787 = vmul.f32 %v3123, %v3619
      %v3788 = vmul.f32 %v3123, %v3621
      %v3789 = vmul.f32 %v3123, %v3623
      %v3790 = vmul.f32 %v3123, %v3625
      %v3791 = vmul.f32 %v3123, %v3627
      %v3792 = vmul.f32 %v3123, %v3629
      %v3793 = vmul.f32 %v3123, %v3631
      %v3794 = vmul.f32 %v3123, %v3633
      %v3795 = vmul.f32 %v3123, %v3635
      %v3796 = vmul.f32 %v3123, %v3637
      %v3797 = vmul.f32 %v3123, %v3639
      %v3798 = vmul.f32 %v3123, %v3641
      %v3799 = vmul.f32 %v3123, %v3643
      %v3800 = vmul.f32 %v3123, %v3645
      %v3801 = vmul.f32 %v3123, %v3647
      %v3802 = vmul.f32 %v3123, %v3649
      %v3803 = vmul.f32 %v3123, %v3651
      %v3804 = vmul.f32 %v3123, %v3653
      %v3805 = vmul.f32 %v3123, %v3655
      %v3806 = vmul.f32 %v3123, %v3657
      %v3807 = vmul.f32 %v3123, %v3659
      %v3808 = vmul.f32 %v3123, %v3661
      %v3809 = vmul.f32 %v3123, %v3663
      %v3810 = vmul.f32 %v3123, %v3665
      %v3811 = vmul.f32 %v3123, %v3667
      %v3812 = vmul.f32 %v3123, %v3669
      %v3813 = vmul.f32 %v3123, %v3671
      %v3814 = vmul.f32 %v3123, %v3673
      %v3815 = vmul.f32 %v3123, %v3675
      %v3816 = vmul.f32 %v3123, %v3677
      %v3817 = vmul.f32 %v3123, %v3679
      %v3818 = vmul.f32 %v3123, %v3681
      %v3819 = vmul.f32 %v3123, %v3683
      %v3820 = vmul.f32 %v3123, %v3685
      %v3821 = vmul.f32 %v3123, %v3687
      %v3822 = vmul.f32 %v3123, %v3689
      %v3823 = vmul.f32 %v3123, %v3691
      %v3824 = vmul.f32 %v3123, %v3693
      %v3825 = vmul.f32 %v3123, %v3695
      %v3826 = vmul.f32 %v3123, %v3697
      %v3827 = vmul.f32 %v3123, %v3699
      %3829 = vrot.lane.b32.xlu0 %v3123, 127
      %v3830 = vpop.permute.xlu0 %3829
      %v3832 = vadd.f32 %v3764, %v3830
      %v3833 = vadd.f32 %v3765, %v3830
      %v3834 = vadd.f32 %v3766, %v3830
      %v3835 = vadd.f32 %v3767, %v3830
      %v3836 = vadd.f32 %v3768, %v3830
      %v3837 = vadd.f32 %v3769, %v3830
      %v3838 = vadd.f32 %v3770, %v3830
      %v3839 = vadd.f32 %v3771, %v3830
      %v3840 = vadd.f32 %v3772, %v3830
      %v3841 = vadd.f32 %v3773, %v3830
      %v3842 = vadd.f32 %v3774, %v3830
      %v3843 = vadd.f32 %v3775, %v3830
      %v3844 = vadd.f32 %v3776, %v3830
      %v3845 = vadd.f32 %v3777, %v3830
      %v3846 = vadd.f32 %v3778, %v3830
      %v3847 = vadd.f32 %v3779, %v3830
      %v3848 = vadd.f32 %v3780, %v3830
      %v3849 = vadd.f32 %v3781, %v3830
      %v3850 = vadd.f32 %v3782, %v3830
      %v3851 = vadd.f32 %v3783, %v3830
      %v3852 = vadd.f32 %v3784, %v3830
      %v3853 = vadd.f32 %v3785, %v3830
      %v3854 = vadd.f32 %v3786, %v3830
      %v3855 = vadd.f32 %v3787, %v3830
      %v3856 = vadd.f32 %v3788, %v3830
      %v3857 = vadd.f32 %v3789, %v3830
      %v3858 = vadd.f32 %v3790, %v3830
      %v3859 = vadd.f32 %v3791, %v3830
      %v3860 = vadd.f32 %v3792, %v3830
      %v3861 = vadd.f32 %v3793, %v3830
      %v3862 = vadd.f32 %v3794, %v3830
      %v3863 = vadd.f32 %v3795, %v3830
      %v3864 = vadd.f32 %v3796, %v3830
      %v3865 = vadd.f32 %v3797, %v3830
      %v3866 = vadd.f32 %v3798, %v3830
      %v3867 = vadd.f32 %v3799, %v3830
      %v3868 = vadd.f32 %v3800, %v3830
      %v3869 = vadd.f32 %v3801, %v3830
      %v3870 = vadd.f32 %v3802, %v3830
      %v3871 = vadd.f32 %v3803, %v3830
      %v3872 = vadd.f32 %v3804, %v3830
      %v3873 = vadd.f32 %v3805, %v3830
      %v3874 = vadd.f32 %v3806, %v3830
      %v3875 = vadd.f32 %v3807, %v3830
      %v3876 = vadd.f32 %v3808, %v3830
      %v3877 = vadd.f32 %v3809, %v3830
      %v3878 = vadd.f32 %v3810, %v3830
      %v3879 = vadd.f32 %v3811, %v3830
      %v3880 = vadd.f32 %v3812, %v3830
      %v3881 = vadd.f32 %v3813, %v3830
      %v3882 = vadd.f32 %v3814, %v3830
      %v3883 = vadd.f32 %v3815, %v3830
      %v3884 = vadd.f32 %v3816, %v3830
      %v3885 = vadd.f32 %v3817, %v3830
      %v3886 = vadd.f32 %v3818, %v3830
      %v3887 = vadd.f32 %v3819, %v3830
      %v3888 = vadd.f32 %v3820, %v3830
      %v3889 = vadd.f32 %v3821, %v3830
      %v3890 = vadd.f32 %v3822, %v3830
      %v3891 = vadd.f32 %v3823, %v3830
      %v3892 = vadd.f32 %v3824, %v3830
      %v3893 = vadd.f32 %v3825, %v3830
      %v3894 = vadd.f32 %v3826, %v3830
      %v3895 = vadd.f32 %v3827, %v3830
      %3960 = vrot.lane.b32.xlu0 %v260, 1
      %v3961 = vpop.permute.xlu0 %3960
      %3962 = vrot.lane.b32.xlu0 %v261, 1
      %v3963 = vpop.permute.xlu0 %3962
      %3964 = vrot.lane.b32.xlu0 %v262, 1
      %v3965 = vpop.permute.xlu0 %3964
      %3966 = vrot.lane.b32.xlu0 %v263, 1
      %v3967 = vpop.permute.xlu0 %3966
      %3968 = vrot.lane.b32.xlu0 %v264, 1
      %v3969 = vpop.permute.xlu0 %3968
      %3970 = vrot.lane.b32.xlu0 %v265, 1
      %v3971 = vpop.permute.xlu0 %3970
      %3972 = vrot.lane.b32.xlu0 %v266, 1
      %v3973 = vpop.permute.xlu0 %3972
      %3974 = vrot.lane.b32.xlu0 %v267, 1
      %v3975 = vpop.permute.xlu0 %3974
      %3976 = vrot.lane.b32.xlu0 %v268, 1
      %v3977 = vpop.permute.xlu0 %3976
      %3978 = vrot.lane.b32.xlu0 %v269, 1
      %v3979 = vpop.permute.xlu0 %3978
      %3980 = vrot.lane.b32.xlu0 %v270, 1
      %v3981 = vpop.permute.xlu0 %3980
      %3982 = vrot.lane.b32.xlu0 %v271, 1
      %v3983 = vpop.permute.xlu0 %3982
      %3984 = vrot.lane.b32.xlu0 %v272, 1
      %v3985 = vpop.permute.xlu0 %3984
      %3986 = vrot.lane.b32.xlu0 %v273, 1
      %v3987 = vpop.permute.xlu0 %3986
      %3988 = vrot.lane.b32.xlu0 %v274, 1
      %v3989 = vpop.permute.xlu0 %3988
      %3990 = vrot.lane.b32.xlu0 %v275, 1
      %v3991 = vpop.permute.xlu0 %3990
      %3992 = vrot.lane.b32.xlu0 %v276, 1
      %v3993 = vpop.permute.xlu0 %3992
      %3994 = vrot.lane.b32.xlu0 %v277, 1
      %v3995 = vpop.permute.xlu0 %3994
      %3996 = vrot.lane.b32.xlu0 %v278, 1
      %v3997 = vpop.permute.xlu0 %3996
      %3998 = vrot.lane.b32.xlu0 %v279, 1
      %v3999 = vpop.permute.xlu0 %3998
      %4000 = vrot.lane.b32.xlu0 %v280, 1
      %v4001 = vpop.permute.xlu0 %4000
      %4002 = vrot.lane.b32.xlu0 %v281, 1
      %v4003 = vpop.permute.xlu0 %4002
      %4004 = vrot.lane.b32.xlu0 %v282, 1
      %v4005 = vpop.permute.xlu0 %4004
      %4006 = vrot.lane.b32.xlu0 %v283, 1
      %v4007 = vpop.permute.xlu0 %4006
      %4008 = vrot.lane.b32.xlu0 %v284, 1
      %v4009 = vpop.permute.xlu0 %4008
      %4010 = vrot.lane.b32.xlu0 %v285, 1
      %v4011 = vpop.permute.xlu0 %4010
      %4012 = vrot.lane.b32.xlu0 %v286, 1
      %v4013 = vpop.permute.xlu0 %4012
      %4014 = vrot.lane.b32.xlu0 %v287, 1
      %v4015 = vpop.permute.xlu0 %4014
      %4016 = vrot.lane.b32.xlu0 %v288, 1
      %v4017 = vpop.permute.xlu0 %4016
      %4018 = vrot.lane.b32.xlu0 %v289, 1
      %v4019 = vpop.permute.xlu0 %4018
      %4020 = vrot.lane.b32.xlu0 %v290, 1
      %v4021 = vpop.permute.xlu0 %4020
      %4022 = vrot.lane.b32.xlu0 %v291, 1
      %v4023 = vpop.permute.xlu0 %4022
      %4024 = vrot.lane.b32.xlu0 %v292, 1
      %v4025 = vpop.permute.xlu0 %4024
      %4026 = vrot.lane.b32.xlu0 %v293, 1
      %v4027 = vpop.permute.xlu0 %4026
      %4028 = vrot.lane.b32.xlu0 %v294, 1
      %v4029 = vpop.permute.xlu0 %4028
      %4030 = vrot.lane.b32.xlu0 %v295, 1
      %v4031 = vpop.permute.xlu0 %4030
      %4032 = vrot.lane.b32.xlu0 %v296, 1
      %v4033 = vpop.permute.xlu0 %4032
      %4034 = vrot.lane.b32.xlu0 %v297, 1
      %v4035 = vpop.permute.xlu0 %4034
      %4036 = vrot.lane.b32.xlu0 %v298, 1
      %v4037 = vpop.permute.xlu0 %4036
      %4038 = vrot.lane.b32.xlu0 %v299, 1
      %v4039 = vpop.permute.xlu0 %4038
      %4040 = vrot.lane.b32.xlu0 %v300, 1
      %v4041 = vpop.permute.xlu0 %4040
      %4042 = vrot.lane.b32.xlu0 %v301, 1
      %v4043 = vpop.permute.xlu0 %4042
      %4044 = vrot.lane.b32.xlu0 %v302, 1
      %v4045 = vpop.permute.xlu0 %4044
      %4046 = vrot.lane.b32.xlu0 %v303, 1
      %v4047 = vpop.permute.xlu0 %4046
      %4048 = vrot.lane.b32.xlu0 %v304, 1
      %v4049 = vpop.permute.xlu0 %4048
      %4050 = vrot.lane.b32.xlu0 %v305, 1
      %v4051 = vpop.permute.xlu0 %4050
      %4052 = vrot.lane.b32.xlu0 %v306, 1
      %v4053 = vpop.permute.xlu0 %4052
      %4054 = vrot.lane.b32.xlu0 %v307, 1
      %v4055 = vpop.permute.xlu0 %4054
      %4056 = vrot.lane.b32.xlu0 %v308, 1
      %v4057 = vpop.permute.xlu0 %4056
      %4058 = vrot.lane.b32.xlu0 %v309, 1
      %v4059 = vpop.permute.xlu0 %4058
      %4060 = vrot.lane.b32.xlu0 %v310, 1
      %v4061 = vpop.permute.xlu0 %4060
      %4062 = vrot.lane.b32.xlu0 %v311, 1
      %v4063 = vpop.permute.xlu0 %4062
      %4064 = vrot.lane.b32.xlu0 %v312, 1
      %v4065 = vpop.permute.xlu0 %4064
      %4066 = vrot.lane.b32.xlu0 %v313, 1
      %v4067 = vpop.permute.xlu0 %4066
      %4068 = vrot.lane.b32.xlu0 %v314, 1
      %v4069 = vpop.permute.xlu0 %4068
      %4070 = vrot.lane.b32.xlu0 %v315, 1
      %v4071 = vpop.permute.xlu0 %4070
      %4072 = vrot.lane.b32.xlu0 %v316, 1
      %v4073 = vpop.permute.xlu0 %4072
      %4074 = vrot.lane.b32.xlu0 %v317, 1
      %v4075 = vpop.permute.xlu0 %4074
      %4076 = vrot.lane.b32.xlu0 %v318, 1
      %v4077 = vpop.permute.xlu0 %4076
      %4078 = vrot.lane.b32.xlu0 %v319, 1
      %v4079 = vpop.permute.xlu0 %4078
      %4080 = vrot.lane.b32.xlu0 %v320, 1
      %v4081 = vpop.permute.xlu0 %4080
      %4082 = vrot.lane.b32.xlu0 %v321, 1
      %v4083 = vpop.permute.xlu0 %4082
      %4084 = vrot.lane.b32.xlu0 %v322, 1
      %v4085 = vpop.permute.xlu0 %4084
      %4086 = vrot.lane.b32.xlu0 %v323, 1
      %v4087 = vpop.permute.xlu0 %4086
      %v4152 = vmul.f32 %v3832, %v3961
      %v4153 = vmul.f32 %v3833, %v3963
      %v4154 = vmul.f32 %v3834, %v3965
      %v4155 = vmul.f32 %v3835, %v3967
      %v4156 = vmul.f32 %v3836, %v3969
      %v4157 = vmul.f32 %v3837, %v3971
      %v4158 = vmul.f32 %v3838, %v3973
      %v4159 = vmul.f32 %v3839, %v3975
      %v4160 = vmul.f32 %v3840, %v3977
      %v4161 = vmul.f32 %v3841, %v3979
      %v4162 = vmul.f32 %v3842, %v3981
      %v4163 = vmul.f32 %v3843, %v3983
      %v4164 = vmul.f32 %v3844, %v3985
      %v4165 = vmul.f32 %v3845, %v3987
      %v4166 = vmul.f32 %v3846, %v3989
      %v4167 = vmul.f32 %v3847, %v3991
      %v4168 = vmul.f32 %v3848, %v3993
      %v4169 = vmul.f32 %v3849, %v3995
      %v4170 = vmul.f32 %v3850, %v3997
      %v4171 = vmul.f32 %v3851, %v3999
      %v4172 = vmul.f32 %v3852, %v4001
      %v4173 = vmul.f32 %v3853, %v4003
      %v4174 = vmul.f32 %v3854, %v4005
      %v4175 = vmul.f32 %v3855, %v4007
      %v4176 = vmul.f32 %v3856, %v4009
      %v4177 = vmul.f32 %v3857, %v4011
      %v4178 = vmul.f32 %v3858, %v4013
      %v4179 = vmul.f32 %v3859, %v4015
      %v4180 = vmul.f32 %v3860, %v4017
      %v4181 = vmul.f32 %v3861, %v4019
      %v4182 = vmul.f32 %v3862, %v4021
      %v4183 = vmul.f32 %v3863, %v4023
      %v4184 = vmul.f32 %v3864, %v4025
      %v4185 = vmul.f32 %v3865, %v4027
      %v4186 = vmul.f32 %v3866, %v4029
      %v4187 = vmul.f32 %v3867, %v4031
      %v4188 = vmul.f32 %v3868, %v4033
      %v4189 = vmul.f32 %v3869, %v4035
      %v4190 = vmul.f32 %v3870, %v4037
      %v4191 = vmul.f32 %v3871, %v4039
      %v4192 = vmul.f32 %v3872, %v4041
      %v4193 = vmul.f32 %v3873, %v4043
      %v4194 = vmul.f32 %v3874, %v4045
      %v4195 = vmul.f32 %v3875, %v4047
      %v4196 = vmul.f32 %v3876, %v4049
      %v4197 = vmul.f32 %v3877, %v4051
      %v4198 = vmul.f32 %v3878, %v4053
      %v4199 = vmul.f32 %v3879, %v4055
      %v4200 = vmul.f32 %v3880, %v4057
      %v4201 = vmul.f32 %v3881, %v4059
      %v4202 = vmul.f32 %v3882, %v4061
      %v4203 = vmul.f32 %v3883, %v4063
      %v4204 = vmul.f32 %v3884, %v4065
      %v4205 = vmul.f32 %v3885, %v4067
      %v4206 = vmul.f32 %v3886, %v4069
      %v4207 = vmul.f32 %v3887, %v4071
      %v4208 = vmul.f32 %v3888, %v4073
      %v4209 = vmul.f32 %v3889, %v4075
      %v4210 = vmul.f32 %v3890, %v4077
      %v4211 = vmul.f32 %v3891, %v4079
      %v4212 = vmul.f32 %v3892, %v4081
      %v4213 = vmul.f32 %v3893, %v4083
      %v4214 = vmul.f32 %v3894, %v4085
      %v4215 = vmul.f32 %v3895, %v4087
      %4280 = vrot.lane.b32.xlu0 %v3445, 3
      %v4281 = vpop.permute.xlu0 %4280
      %4282 = vrot.lane.b32.xlu0 %v3447, 3
      %v4283 = vpop.permute.xlu0 %4282
      %4284 = vrot.lane.b32.xlu0 %v3449, 3
      %v4285 = vpop.permute.xlu0 %4284
      %4286 = vrot.lane.b32.xlu0 %v3451, 3
      %v4287 = vpop.permute.xlu0 %4286
      %4288 = vrot.lane.b32.xlu0 %v3453, 3
      %v4289 = vpop.permute.xlu0 %4288
      %4290 = vrot.lane.b32.xlu0 %v3455, 3
      %v4291 = vpop.permute.xlu0 %4290
      %4292 = vrot.lane.b32.xlu0 %v3457, 3
      %v4293 = vpop.permute.xlu0 %4292
      %4294 = vrot.lane.b32.xlu0 %v3459, 3
      %v4295 = vpop.permute.xlu0 %4294
      %4296 = vrot.lane.b32.xlu0 %v3461, 3
      %v4297 = vpop.permute.xlu0 %4296
      %4298 = vrot.lane.b32.xlu0 %v3463, 3
      %v4299 = vpop.permute.xlu0 %4298
      %4300 = vrot.lane.b32.xlu0 %v3465, 3
      %v4301 = vpop.permute.xlu0 %4300
      %4302 = vrot.lane.b32.xlu0 %v3467, 3
      %v4303 = vpop.permute.xlu0 %4302
      %4304 = vrot.lane.b32.xlu0 %v3469, 3
      %v4305 = vpop.permute.xlu0 %4304
      %4306 = vrot.lane.b32.xlu0 %v3471, 3
      %v4307 = vpop.permute.xlu0 %4306
      %4308 = vrot.lane.b32.xlu0 %v3473, 3
      %v4309 = vpop.permute.xlu0 %4308
      %4310 = vrot.lane.b32.xlu0 %v3475, 3
      %v4311 = vpop.permute.xlu0 %4310
      %4312 = vrot.lane.b32.xlu0 %v3477, 3
      %v4313 = vpop.permute.xlu0 %4312
      %4314 = vrot.lane.b32.xlu0 %v3479, 3
      %v4315 = vpop.permute.xlu0 %4314
      %4316 = vrot.lane.b32.xlu0 %v3481, 3
      %v4317 = vpop.permute.xlu0 %4316
      %4318 = vrot.lane.b32.xlu0 %v3483, 3
      %v4319 = vpop.permute.xlu0 %4318
      %4320 = vrot.lane.b32.xlu0 %v3485, 3
      %v4321 = vpop.permute.xlu0 %4320
      %4322 = vrot.lane.b32.xlu0 %v3487, 3
      %v4323 = vpop.permute.xlu0 %4322
      %4324 = vrot.lane.b32.xlu0 %v3489, 3
      %v4325 = vpop.permute.xlu0 %4324
      %4326 = vrot.lane.b32.xlu0 %v3491, 3
      %v4327 = vpop.permute.xlu0 %4326
      %4328 = vrot.lane.b32.xlu0 %v3493, 3
      %v4329 = vpop.permute.xlu0 %4328
      %4330 = vrot.lane.b32.xlu0 %v3495, 3
      %v4331 = vpop.permute.xlu0 %4330
      %4332 = vrot.lane.b32.xlu0 %v3497, 3
      %v4333 = vpop.permute.xlu0 %4332
      %4334 = vrot.lane.b32.xlu0 %v3499, 3
      %v4335 = vpop.permute.xlu0 %4334
      %4336 = vrot.lane.b32.xlu0 %v3501, 3
      %v4337 = vpop.permute.xlu0 %4336
      %4338 = vrot.lane.b32.xlu0 %v3503, 3
      %v4339 = vpop.permute.xlu0 %4338
      %4340 = vrot.lane.b32.xlu0 %v3505, 3
      %v4341 = vpop.permute.xlu0 %4340
      %4342 = vrot.lane.b32.xlu0 %v3507, 3
      %v4343 = vpop.permute.xlu0 %4342
      %4344 = vrot.lane.b32.xlu0 %v3509, 3
      %v4345 = vpop.permute.xlu0 %4344
      %4346 = vrot.lane.b32.xlu0 %v3511, 3
      %v4347 = vpop.permute.xlu0 %4346
      %4348 = vrot.lane.b32.xlu0 %v3513, 3
      %v4349 = vpop.permute.xlu0 %4348
      %4350 = vrot.lane.b32.xlu0 %v3515, 3
      %v4351 = vpop.permute.xlu0 %4350
      %4352 = vrot.lane.b32.xlu0 %v3517, 3
      %v4353 = vpop.permute.xlu0 %4352
      %4354 = vrot.lane.b32.xlu0 %v3519, 3
      %v4355 = vpop.permute.xlu0 %4354
      %4356 = vrot.lane.b32.xlu0 %v3521, 3
      %v4357 = vpop.permute.xlu0 %4356
      %4358 = vrot.lane.b32.xlu0 %v3523, 3
      %v4359 = vpop.permute.xlu0 %4358
      %4360 = vrot.lane.b32.xlu0 %v3525, 3
      %v4361 = vpop.permute.xlu0 %4360
      %4362 = vrot.lane.b32.xlu0 %v3527, 3
      %v4363 = vpop.permute.xlu0 %4362
      %4364 = vrot.lane.b32.xlu0 %v3529, 3
      %v4365 = vpop.permute.xlu0 %4364
      %4366 = vrot.lane.b32.xlu0 %v3531, 3
      %v4367 = vpop.permute.xlu0 %4366
      %4368 = vrot.lane.b32.xlu0 %v3533, 3
      %v4369 = vpop.permute.xlu0 %4368
      %4370 = vrot.lane.b32.xlu0 %v3535, 3
      %v4371 = vpop.permute.xlu0 %4370
      %4372 = vrot.lane.b32.xlu0 %v3537, 3
      %v4373 = vpop.permute.xlu0 %4372
      %4374 = vrot.lane.b32.xlu0 %v3539, 3
      %v4375 = vpop.permute.xlu0 %4374
      %4376 = vrot.lane.b32.xlu0 %v3541, 3
      %v4377 = vpop.permute.xlu0 %4376
      %4378 = vrot.lane.b32.xlu0 %v3543, 3
      %v4379 = vpop.permute.xlu0 %4378
      %4380 = vrot.lane.b32.xlu0 %v3545, 3
      %v4381 = vpop.permute.xlu0 %4380
      %4382 = vrot.lane.b32.xlu0 %v3547, 3
      %v4383 = vpop.permute.xlu0 %4382
      %4384 = vrot.lane.b32.xlu0 %v3549, 3
      %v4385 = vpop.permute.xlu0 %4384
      %4386 = vrot.lane.b32.xlu0 %v3551, 3
      %v4387 = vpop.permute.xlu0 %4386
      %4388 = vrot.lane.b32.xlu0 %v3553, 3
      %v4389 = vpop.permute.xlu0 %4388
      %4390 = vrot.lane.b32.xlu0 %v3555, 3
      %v4391 = vpop.permute.xlu0 %4390
      %4392 = vrot.lane.b32.xlu0 %v3557, 3
      %v4393 = vpop.permute.xlu0 %4392
      %4394 = vrot.lane.b32.xlu0 %v3559, 3
      %v4395 = vpop.permute.xlu0 %4394
      %4396 = vrot.lane.b32.xlu0 %v3561, 3
      %v4397 = vpop.permute.xlu0 %4396
      %4398 = vrot.lane.b32.xlu0 %v3563, 3
      %v4399 = vpop.permute.xlu0 %4398
      %4400 = vrot.lane.b32.xlu0 %v3565, 3
      %v4401 = vpop.permute.xlu0 %4400
      %4402 = vrot.lane.b32.xlu0 %v3567, 3
      %v4403 = vpop.permute.xlu0 %4402
      %4404 = vrot.lane.b32.xlu0 %v3569, 3
      %v4405 = vpop.permute.xlu0 %4404
      %4406 = vrot.lane.b32.xlu0 %v3571, 3
      %v4407 = vpop.permute.xlu0 %4406
      %v4472 = vmul.f32 %v3123, %v4281
      %v4473 = vmul.f32 %v3123, %v4283
      %v4474 = vmul.f32 %v3123, %v4285
      %v4475 = vmul.f32 %v3123, %v4287
      %v4476 = vmul.f32 %v3123, %v4289
      %v4477 = vmul.f32 %v3123, %v4291
      %v4478 = vmul.f32 %v3123, %v4293
      %v4479 = vmul.f32 %v3123, %v4295
      %v4480 = vmul.f32 %v3123, %v4297
      %v4481 = vmul.f32 %v3123, %v4299
      %v4482 = vmul.f32 %v3123, %v4301
      %v4483 = vmul.f32 %v3123, %v4303
      %v4484 = vmul.f32 %v3123, %v4305
      %v4485 = vmul.f32 %v3123, %v4307
      %v4486 = vmul.f32 %v3123, %v4309
      %v4487 = vmul.f32 %v3123, %v4311
      %v4488 = vmul.f32 %v3123, %v4313
      %v4489 = vmul.f32 %v3123, %v4315
      %v4490 = vmul.f32 %v3123, %v4317
      %v4491 = vmul.f32 %v3123, %v4319
      %v4492 = vmul.f32 %v3123, %v4321
      %v4493 = vmul.f32 %v3123, %v4323
      %v4494 = vmul.f32 %v3123, %v4325
      %v4495 = vmul.f32 %v3123, %v4327
      %v4496 = vmul.f32 %v3123, %v4329
      %v4497 = vmul.f32 %v3123, %v4331
      %v4498 = vmul.f32 %v3123, %v4333
      %v4499 = vmul.f32 %v3123, %v4335
      %v4500 = vmul.f32 %v3123, %v4337
      %v4501 = vmul.f32 %v3123, %v4339
      %v4502 = vmul.f32 %v3123, %v4341
      %v4503 = vmul.f32 %v3123, %v4343
      %v4504 = vmul.f32 %v3123, %v4345
      %v4505 = vmul.f32 %v3123, %v4347
      %v4506 = vmul.f32 %v3123, %v4349
      %v4507 = vmul.f32 %v3123, %v4351
      %v4508 = vmul.f32 %v3123, %v4353
      %v4509 = vmul.f32 %v3123, %v4355
      %v4510 = vmul.f32 %v3123, %v4357
      %v4511 = vmul.f32 %v3123, %v4359
      %v4512 = vmul.f32 %v3123, %v4361
      %v4513 = vmul.f32 %v3123, %v4363
      %v4514 = vmul.f32 %v3123, %v4365
      %v4515 = vmul.f32 %v3123, %v4367
      %v4516 = vmul.f32 %v3123, %v4369
      %v4517 = vmul.f32 %v3123, %v4371
      %v4518 = vmul.f32 %v3123, %v4373
      %v4519 = vmul.f32 %v3123, %v4375
      %v4520 = vmul.f32 %v3123, %v4377
      %v4521 = vmul.f32 %v3123, %v4379
      %v4522 = vmul.f32 %v3123, %v4381
      %v4523 = vmul.f32 %v3123, %v4383
      %v4524 = vmul.f32 %v3123, %v4385
      %v4525 = vmul.f32 %v3123, %v4387
      %v4526 = vmul.f32 %v3123, %v4389
      %v4527 = vmul.f32 %v3123, %v4391
      %v4528 = vmul.f32 %v3123, %v4393
      %v4529 = vmul.f32 %v3123, %v4395
      %v4530 = vmul.f32 %v3123, %v4397
      %v4531 = vmul.f32 %v3123, %v4399
      %v4532 = vmul.f32 %v3123, %v4401
      %v4533 = vmul.f32 %v3123, %v4403
      %v4534 = vmul.f32 %v3123, %v4405
      %v4535 = vmul.f32 %v3123, %v4407
      %v4536 = vadd.f32 %v4472, %v3830
      %v4537 = vadd.f32 %v4473, %v3830
      %v4538 = vadd.f32 %v4474, %v3830
      %v4539 = vadd.f32 %v4475, %v3830
      %v4540 = vadd.f32 %v4476, %v3830
      %v4541 = vadd.f32 %v4477, %v3830
      %v4542 = vadd.f32 %v4478, %v3830
      %v4543 = vadd.f32 %v4479, %v3830
      %v4544 = vadd.f32 %v4480, %v3830
      %v4545 = vadd.f32 %v4481, %v3830
      %v4546 = vadd.f32 %v4482, %v3830
      %v4547 = vadd.f32 %v4483, %v3830
      %v4548 = vadd.f32 %v4484, %v3830
      %v4549 = vadd.f32 %v4485, %v3830
      %v4550 = vadd.f32 %v4486, %v3830
      %v4551 = vadd.f32 %v4487, %v3830
      %v4552 = vadd.f32 %v4488, %v3830
      %v4553 = vadd.f32 %v4489, %v3830
      %v4554 = vadd.f32 %v4490, %v3830
      %v4555 = vadd.f32 %v4491, %v3830
      %v4556 = vadd.f32 %v4492, %v3830
      %v4557 = vadd.f32 %v4493, %v3830
      %v4558 = vadd.f32 %v4494, %v3830
      %v4559 = vadd.f32 %v4495, %v3830
      %v4560 = vadd.f32 %v4496, %v3830
      %v4561 = vadd.f32 %v4497, %v3830
      %v4562 = vadd.f32 %v4498, %v3830
      %v4563 = vadd.f32 %v4499, %v3830
      %v4564 = vadd.f32 %v4500, %v3830
      %v4565 = vadd.f32 %v4501, %v3830
      %v4566 = vadd.f32 %v4502, %v3830
      %v4567 = vadd.f32 %v4503, %v3830
      %v4568 = vadd.f32 %v4504, %v3830
      %v4569 = vadd.f32 %v4505, %v3830
      %v4570 = vadd.f32 %v4506, %v3830
      %v4571 = vadd.f32 %v4507, %v3830
      %v4572 = vadd.f32 %v4508, %v3830
      %v4573 = vadd.f32 %v4509, %v3830
      %v4574 = vadd.f32 %v4510, %v3830
      %v4575 = vadd.f32 %v4511, %v3830
      %v4576 = vadd.f32 %v4512, %v3830
      %v4577 = vadd.f32 %v4513, %v3830
      %v4578 = vadd.f32 %v4514, %v3830
      %v4579 = vadd.f32 %v4515, %v3830
      %v4580 = vadd.f32 %v4516, %v3830
      %v4581 = vadd.f32 %v4517, %v3830
      %v4582 = vadd.f32 %v4518, %v3830
      %v4583 = vadd.f32 %v4519, %v3830
      %v4584 = vadd.f32 %v4520, %v3830
      %v4585 = vadd.f32 %v4521, %v3830
      %v4586 = vadd.f32 %v4522, %v3830
      %v4587 = vadd.f32 %v4523, %v3830
      %v4588 = vadd.f32 %v4524, %v3830
      %v4589 = vadd.f32 %v4525, %v3830
      %v4590 = vadd.f32 %v4526, %v3830
      %v4591 = vadd.f32 %v4527, %v3830
      %v4592 = vadd.f32 %v4528, %v3830
      %v4593 = vadd.f32 %v4529, %v3830
      %v4594 = vadd.f32 %v4530, %v3830
      %v4595 = vadd.f32 %v4531, %v3830
      %v4596 = vadd.f32 %v4532, %v3830
      %v4597 = vadd.f32 %v4533, %v3830
      %v4598 = vadd.f32 %v4534, %v3830
      %v4599 = vadd.f32 %v4535, %v3830
      %4600 = vrot.lane.b32.xlu0 %v260, 2
      %v4601 = vpop.permute.xlu0 %4600
      %4602 = vrot.lane.b32.xlu0 %v261, 2
      %v4603 = vpop.permute.xlu0 %4602
      %4604 = vrot.lane.b32.xlu0 %v262, 2
      %v4605 = vpop.permute.xlu0 %4604
      %4606 = vrot.lane.b32.xlu0 %v263, 2
      %v4607 = vpop.permute.xlu0 %4606
      %4608 = vrot.lane.b32.xlu0 %v264, 2
      %v4609 = vpop.permute.xlu0 %4608
      %4610 = vrot.lane.b32.xlu0 %v265, 2
      %v4611 = vpop.permute.xlu0 %4610
      %4612 = vrot.lane.b32.xlu0 %v266, 2
      %v4613 = vpop.permute.xlu0 %4612
      %4614 = vrot.lane.b32.xlu0 %v267, 2
      %v4615 = vpop.permute.xlu0 %4614
      %4616 = vrot.lane.b32.xlu0 %v268, 2
      %v4617 = vpop.permute.xlu0 %4616
      %4618 = vrot.lane.b32.xlu0 %v269, 2
      %v4619 = vpop.permute.xlu0 %4618
      %4620 = vrot.lane.b32.xlu0 %v270, 2
      %v4621 = vpop.permute.xlu0 %4620
      %4622 = vrot.lane.b32.xlu0 %v271, 2
      %v4623 = vpop.permute.xlu0 %4622
      %4624 = vrot.lane.b32.xlu0 %v272, 2
      %v4625 = vpop.permute.xlu0 %4624
      %4626 = vrot.lane.b32.xlu0 %v273, 2
      %v4627 = vpop.permute.xlu0 %4626
      %4628 = vrot.lane.b32.xlu0 %v274, 2
      %v4629 = vpop.permute.xlu0 %4628
      %4630 = vrot.lane.b32.xlu0 %v275, 2
      %v4631 = vpop.permute.xlu0 %4630
      %4632 = vrot.lane.b32.xlu0 %v276, 2
      %v4633 = vpop.permute.xlu0 %4632
      %4634 = vrot.lane.b32.xlu0 %v277, 2
      %v4635 = vpop.permute.xlu0 %4634
      %4636 = vrot.lane.b32.xlu0 %v278, 2
      %v4637 = vpop.permute.xlu0 %4636
      %4638 = vrot.lane.b32.xlu0 %v279, 2
      %v4639 = vpop.permute.xlu0 %4638
      %4640 = vrot.lane.b32.xlu0 %v280, 2
      %v4641 = vpop.permute.xlu0 %4640
      %4642 = vrot.lane.b32.xlu0 %v281, 2
      %v4643 = vpop.permute.xlu0 %4642
      %4644 = vrot.lane.b32.xlu0 %v282, 2
      %v4645 = vpop.permute.xlu0 %4644
      %4646 = vrot.lane.b32.xlu0 %v283, 2
      %v4647 = vpop.permute.xlu0 %4646
      %4648 = vrot.lane.b32.xlu0 %v284, 2
      %v4649 = vpop.permute.xlu0 %4648
      %4650 = vrot.lane.b32.xlu0 %v285, 2
      %v4651 = vpop.permute.xlu0 %4650
      %4652 = vrot.lane.b32.xlu0 %v286, 2
      %v4653 = vpop.permute.xlu0 %4652
      %4654 = vrot.lane.b32.xlu0 %v287, 2
      %v4655 = vpop.permute.xlu0 %4654
      %4656 = vrot.lane.b32.xlu0 %v288, 2
      %v4657 = vpop.permute.xlu0 %4656
      %4658 = vrot.lane.b32.xlu0 %v289, 2
      %v4659 = vpop.permute.xlu0 %4658
      %4660 = vrot.lane.b32.xlu0 %v290, 2
      %v4661 = vpop.permute.xlu0 %4660
      %4662 = vrot.lane.b32.xlu0 %v291, 2
      %v4663 = vpop.permute.xlu0 %4662
      %4664 = vrot.lane.b32.xlu0 %v292, 2
      %v4665 = vpop.permute.xlu0 %4664
      %4666 = vrot.lane.b32.xlu0 %v293, 2
      %v4667 = vpop.permute.xlu0 %4666
      %4668 = vrot.lane.b32.xlu0 %v294, 2
      %v4669 = vpop.permute.xlu0 %4668
      %4670 = vrot.lane.b32.xlu0 %v295, 2
      %v4671 = vpop.permute.xlu0 %4670
      %4672 = vrot.lane.b32.xlu0 %v296, 2
      %v4673 = vpop.permute.xlu0 %4672
      %4674 = vrot.lane.b32.xlu0 %v297, 2
      %v4675 = vpop.permute.xlu0 %4674
      %4676 = vrot.lane.b32.xlu0 %v298, 2
      %v4677 = vpop.permute.xlu0 %4676
      %4678 = vrot.lane.b32.xlu0 %v299, 2
      %v4679 = vpop.permute.xlu0 %4678
      %4680 = vrot.lane.b32.xlu0 %v300, 2
      %v4681 = vpop.permute.xlu0 %4680
      %4682 = vrot.lane.b32.xlu0 %v301, 2
      %v4683 = vpop.permute.xlu0 %4682
      %4684 = vrot.lane.b32.xlu0 %v302, 2
      %v4685 = vpop.permute.xlu0 %4684
      %4686 = vrot.lane.b32.xlu0 %v303, 2
      %v4687 = vpop.permute.xlu0 %4686
      %4688 = vrot.lane.b32.xlu0 %v304, 2
      %v4689 = vpop.permute.xlu0 %4688
      %4690 = vrot.lane.b32.xlu0 %v305, 2
      %v4691 = vpop.permute.xlu0 %4690
      %4692 = vrot.lane.b32.xlu0 %v306, 2
      %v4693 = vpop.permute.xlu0 %4692
      %4694 = vrot.lane.b32.xlu0 %v307, 2
      %v4695 = vpop.permute.xlu0 %4694
      %4696 = vrot.lane.b32.xlu0 %v308, 2
      %v4697 = vpop.permute.xlu0 %4696
      %4698 = vrot.lane.b32.xlu0 %v309, 2
      %v4699 = vpop.permute.xlu0 %4698
      %4700 = vrot.lane.b32.xlu0 %v310, 2
      %v4701 = vpop.permute.xlu0 %4700
      %4702 = vrot.lane.b32.xlu0 %v311, 2
      %v4703 = vpop.permute.xlu0 %4702
      %4704 = vrot.lane.b32.xlu0 %v312, 2
      %v4705 = vpop.permute.xlu0 %4704
      %4706 = vrot.lane.b32.xlu0 %v313, 2
      %v4707 = vpop.permute.xlu0 %4706
      %4708 = vrot.lane.b32.xlu0 %v314, 2
      %v4709 = vpop.permute.xlu0 %4708
      %4710 = vrot.lane.b32.xlu0 %v315, 2
      %v4711 = vpop.permute.xlu0 %4710
      %4712 = vrot.lane.b32.xlu0 %v316, 2
      %v4713 = vpop.permute.xlu0 %4712
      %4714 = vrot.lane.b32.xlu0 %v317, 2
      %v4715 = vpop.permute.xlu0 %4714
      %4716 = vrot.lane.b32.xlu0 %v318, 2
      %v4717 = vpop.permute.xlu0 %4716
      %4718 = vrot.lane.b32.xlu0 %v319, 2
      %v4719 = vpop.permute.xlu0 %4718
      %4720 = vrot.lane.b32.xlu0 %v320, 2
      %v4721 = vpop.permute.xlu0 %4720
      %4722 = vrot.lane.b32.xlu0 %v321, 2
      %v4723 = vpop.permute.xlu0 %4722
      %4724 = vrot.lane.b32.xlu0 %v322, 2
      %v4725 = vpop.permute.xlu0 %4724
      %4726 = vrot.lane.b32.xlu0 %v323, 2
      %v4727 = vpop.permute.xlu0 %4726
      %v4792 = vmul.f32 %v4536, %v4601
      %v4793 = vmul.f32 %v4537, %v4603
      %v4794 = vmul.f32 %v4538, %v4605
      %v4795 = vmul.f32 %v4539, %v4607
      %v4796 = vmul.f32 %v4540, %v4609
      %v4797 = vmul.f32 %v4541, %v4611
      %v4798 = vmul.f32 %v4542, %v4613
      %v4799 = vmul.f32 %v4543, %v4615
      %v4800 = vmul.f32 %v4544, %v4617
      %v4801 = vmul.f32 %v4545, %v4619
      %v4802 = vmul.f32 %v4546, %v4621
      %v4803 = vmul.f32 %v4547, %v4623
      %v4804 = vmul.f32 %v4548, %v4625
      %v4805 = vmul.f32 %v4549, %v4627
      %v4806 = vmul.f32 %v4550, %v4629
      %v4807 = vmul.f32 %v4551, %v4631
      %v4808 = vmul.f32 %v4552, %v4633
      %v4809 = vmul.f32 %v4553, %v4635
      %v4810 = vmul.f32 %v4554, %v4637
      %v4811 = vmul.f32 %v4555, %v4639
      %v4812 = vmul.f32 %v4556, %v4641
      %v4813 = vmul.f32 %v4557, %v4643
      %v4814 = vmul.f32 %v4558, %v4645
      %v4815 = vmul.f32 %v4559, %v4647
      %v4816 = vmul.f32 %v4560, %v4649
      %v4817 = vmul.f32 %v4561, %v4651
      %v4818 = vmul.f32 %v4562, %v4653
      %v4819 = vmul.f32 %v4563, %v4655
      %v4820 = vmul.f32 %v4564, %v4657
      %v4821 = vmul.f32 %v4565, %v4659
      %v4822 = vmul.f32 %v4566, %v4661
      %v4823 = vmul.f32 %v4567, %v4663
      %v4824 = vmul.f32 %v4568, %v4665
      %v4825 = vmul.f32 %v4569, %v4667
      %v4826 = vmul.f32 %v4570, %v4669
      %v4827 = vmul.f32 %v4571, %v4671
      %v4828 = vmul.f32 %v4572, %v4673
      %v4829 = vmul.f32 %v4573, %v4675
      %v4830 = vmul.f32 %v4574, %v4677
      %v4831 = vmul.f32 %v4575, %v4679
      %v4832 = vmul.f32 %v4576, %v4681
      %v4833 = vmul.f32 %v4577, %v4683
      %v4834 = vmul.f32 %v4578, %v4685
      %v4835 = vmul.f32 %v4579, %v4687
      %v4836 = vmul.f32 %v4580, %v4689
      %v4837 = vmul.f32 %v4581, %v4691
      %v4838 = vmul.f32 %v4582, %v4693
      %v4839 = vmul.f32 %v4583, %v4695
      %v4840 = vmul.f32 %v4584, %v4697
      %v4841 = vmul.f32 %v4585, %v4699
      %v4842 = vmul.f32 %v4586, %v4701
      %v4843 = vmul.f32 %v4587, %v4703
      %v4844 = vmul.f32 %v4588, %v4705
      %v4845 = vmul.f32 %v4589, %v4707
      %v4846 = vmul.f32 %v4590, %v4709
      %v4847 = vmul.f32 %v4591, %v4711
      %v4848 = vmul.f32 %v4592, %v4713
      %v4849 = vmul.f32 %v4593, %v4715
      %v4850 = vmul.f32 %v4594, %v4717
      %v4851 = vmul.f32 %v4595, %v4719
      %v4852 = vmul.f32 %v4596, %v4721
      %v4853 = vmul.f32 %v4597, %v4723
      %v4854 = vmul.f32 %v4598, %v4725
      %v4855 = vmul.f32 %v4599, %v4727
      %4920 = vrot.lane.b32.xlu0 %v4792, 126
      %v4921 = vpop.permute.xlu0 %4920
      %4922 = vrot.lane.b32.xlu0 %v4793, 126
      %v4923 = vpop.permute.xlu0 %4922
      %4924 = vrot.lane.b32.xlu0 %v4794, 126
      %v4925 = vpop.permute.xlu0 %4924
      %4926 = vrot.lane.b32.xlu0 %v4795, 126
      %v4927 = vpop.permute.xlu0 %4926
      %4928 = vrot.lane.b32.xlu0 %v4796, 126
      %v4929 = vpop.permute.xlu0 %4928
      %4930 = vrot.lane.b32.xlu0 %v4797, 126
      %v4931 = vpop.permute.xlu0 %4930
      %4932 = vrot.lane.b32.xlu0 %v4798, 126
      %v4933 = vpop.permute.xlu0 %4932
      %4934 = vrot.lane.b32.xlu0 %v4799, 126
      %v4935 = vpop.permute.xlu0 %4934
      %4936 = vrot.lane.b32.xlu0 %v4800, 126
      %v4937 = vpop.permute.xlu0 %4936
      %4938 = vrot.lane.b32.xlu0 %v4801, 126
      %v4939 = vpop.permute.xlu0 %4938
      %4940 = vrot.lane.b32.xlu0 %v4802, 126
      %v4941 = vpop.permute.xlu0 %4940
      %4942 = vrot.lane.b32.xlu0 %v4803, 126
      %v4943 = vpop.permute.xlu0 %4942
      %4944 = vrot.lane.b32.xlu0 %v4804, 126
      %v4945 = vpop.permute.xlu0 %4944
      %4946 = vrot.lane.b32.xlu0 %v4805, 126
      %v4947 = vpop.permute.xlu0 %4946
      %4948 = vrot.lane.b32.xlu0 %v4806, 126
      %v4949 = vpop.permute.xlu0 %4948
      %4950 = vrot.lane.b32.xlu0 %v4807, 126
      %v4951 = vpop.permute.xlu0 %4950
      %4952 = vrot.lane.b32.xlu0 %v4808, 126
      %v4953 = vpop.permute.xlu0 %4952
      %4954 = vrot.lane.b32.xlu0 %v4809, 126
      %v4955 = vpop.permute.xlu0 %4954
      %4956 = vrot.lane.b32.xlu0 %v4810, 126
      %v4957 = vpop.permute.xlu0 %4956
      %4958 = vrot.lane.b32.xlu0 %v4811, 126
      %v4959 = vpop.permute.xlu0 %4958
      %4960 = vrot.lane.b32.xlu0 %v4812, 126
      %v4961 = vpop.permute.xlu0 %4960
      %4962 = vrot.lane.b32.xlu0 %v4813, 126
      %v4963 = vpop.permute.xlu0 %4962
      %4964 = vrot.lane.b32.xlu0 %v4814, 126
      %v4965 = vpop.permute.xlu0 %4964
      %4966 = vrot.lane.b32.xlu0 %v4815, 126
      %v4967 = vpop.permute.xlu0 %4966
      %4968 = vrot.lane.b32.xlu0 %v4816, 126
      %v4969 = vpop.permute.xlu0 %4968
      %4970 = vrot.lane.b32.xlu0 %v4817, 126
      %v4971 = vpop.permute.xlu0 %4970
      %4972 = vrot.lane.b32.xlu0 %v4818, 126
      %v4973 = vpop.permute.xlu0 %4972
      %4974 = vrot.lane.b32.xlu0 %v4819, 126
      %v4975 = vpop.permute.xlu0 %4974
      %4976 = vrot.lane.b32.xlu0 %v4820, 126
      %v4977 = vpop.permute.xlu0 %4976
      %4978 = vrot.lane.b32.xlu0 %v4821, 126
      %v4979 = vpop.permute.xlu0 %4978
      %4980 = vrot.lane.b32.xlu0 %v4822, 126
      %v4981 = vpop.permute.xlu0 %4980
      %4982 = vrot.lane.b32.xlu0 %v4823, 126
      %v4983 = vpop.permute.xlu0 %4982
      %4984 = vrot.lane.b32.xlu0 %v4824, 126
      %v4985 = vpop.permute.xlu0 %4984
      %4986 = vrot.lane.b32.xlu0 %v4825, 126
      %v4987 = vpop.permute.xlu0 %4986
      %4988 = vrot.lane.b32.xlu0 %v4826, 126
      %v4989 = vpop.permute.xlu0 %4988
      %4990 = vrot.lane.b32.xlu0 %v4827, 126
      %v4991 = vpop.permute.xlu0 %4990
      %4992 = vrot.lane.b32.xlu0 %v4828, 126
      %v4993 = vpop.permute.xlu0 %4992
      %4994 = vrot.lane.b32.xlu0 %v4829, 126
      %v4995 = vpop.permute.xlu0 %4994
      %4996 = vrot.lane.b32.xlu0 %v4830, 126
      %v4997 = vpop.permute.xlu0 %4996
      %4998 = vrot.lane.b32.xlu0 %v4831, 126
      %v4999 = vpop.permute.xlu0 %4998
      %5000 = vrot.lane.b32.xlu0 %v4832, 126
      %v5001 = vpop.permute.xlu0 %5000
      %5002 = vrot.lane.b32.xlu0 %v4833, 126
      %v5003 = vpop.permute.xlu0 %5002
      %5004 = vrot.lane.b32.xlu0 %v4834, 126
      %v5005 = vpop.permute.xlu0 %5004
      %5006 = vrot.lane.b32.xlu0 %v4835, 126
      %v5007 = vpop.permute.xlu0 %5006
      %5008 = vrot.lane.b32.xlu0 %v4836, 126
      %v5009 = vpop.permute.xlu0 %5008
      %5010 = vrot.lane.b32.xlu0 %v4837, 126
      %v5011 = vpop.permute.xlu0 %5010
      %5012 = vrot.lane.b32.xlu0 %v4838, 126
      %v5013 = vpop.permute.xlu0 %5012
      %5014 = vrot.lane.b32.xlu0 %v4839, 126
      %v5015 = vpop.permute.xlu0 %5014
      %5016 = vrot.lane.b32.xlu0 %v4840, 126
      %v5017 = vpop.permute.xlu0 %5016
      %5018 = vrot.lane.b32.xlu0 %v4841, 126
      %v5019 = vpop.permute.xlu0 %5018
      %5020 = vrot.lane.b32.xlu0 %v4842, 126
      %v5021 = vpop.permute.xlu0 %5020
      %5022 = vrot.lane.b32.xlu0 %v4843, 126
      %v5023 = vpop.permute.xlu0 %5022
      %5024 = vrot.lane.b32.xlu0 %v4844, 126
      %v5025 = vpop.permute.xlu0 %5024
      %5026 = vrot.lane.b32.xlu0 %v4845, 126
      %v5027 = vpop.permute.xlu0 %5026
      %5028 = vrot.lane.b32.xlu0 %v4846, 126
      %v5029 = vpop.permute.xlu0 %5028
      %5030 = vrot.lane.b32.xlu0 %v4847, 126
      %v5031 = vpop.permute.xlu0 %5030
      %5032 = vrot.lane.b32.xlu0 %v4848, 126
      %v5033 = vpop.permute.xlu0 %5032
      %5034 = vrot.lane.b32.xlu0 %v4849, 126
      %v5035 = vpop.permute.xlu0 %5034
      %5036 = vrot.lane.b32.xlu0 %v4850, 126
      %v5037 = vpop.permute.xlu0 %5036
      %5038 = vrot.lane.b32.xlu0 %v4851, 126
      %v5039 = vpop.permute.xlu0 %5038
      %5040 = vrot.lane.b32.xlu0 %v4852, 126
      %v5041 = vpop.permute.xlu0 %5040
      %5042 = vrot.lane.b32.xlu0 %v4853, 126
      %v5043 = vpop.permute.xlu0 %5042
      %5044 = vrot.lane.b32.xlu0 %v4854, 126
      %v5045 = vpop.permute.xlu0 %5044
      %5046 = vrot.lane.b32.xlu0 %v4855, 126
      %v5047 = vpop.permute.xlu0 %5046
      %v5112 = vadd.f32 %v4152, %v4921
      %v5113 = vadd.f32 %v4153, %v4923
      %v5114 = vadd.f32 %v4154, %v4925
      %v5115 = vadd.f32 %v4155, %v4927
      %v5116 = vadd.f32 %v4156, %v4929
      %v5117 = vadd.f32 %v4157, %v4931
      %v5118 = vadd.f32 %v4158, %v4933
      %v5119 = vadd.f32 %v4159, %v4935
      %v5120 = vadd.f32 %v4160, %v4937
      %v5121 = vadd.f32 %v4161, %v4939
      %v5122 = vadd.f32 %v4162, %v4941
      %v5123 = vadd.f32 %v4163, %v4943
      %v5124 = vadd.f32 %v4164, %v4945
      %v5125 = vadd.f32 %v4165, %v4947
      %v5126 = vadd.f32 %v4166, %v4949
      %v5127 = vadd.f32 %v4167, %v4951
      %v5128 = vadd.f32 %v4168, %v4953
      %v5129 = vadd.f32 %v4169, %v4955
      %v5130 = vadd.f32 %v4170, %v4957
      %v5131 = vadd.f32 %v4171, %v4959
      %v5132 = vadd.f32 %v4172, %v4961
      %v5133 = vadd.f32 %v4173, %v4963
      %v5134 = vadd.f32 %v4174, %v4965
      %v5135 = vadd.f32 %v4175, %v4967
      %v5136 = vadd.f32 %v4176, %v4969
      %v5137 = vadd.f32 %v4177, %v4971
      %v5138 = vadd.f32 %v4178, %v4973
      %v5139 = vadd.f32 %v4179, %v4975
      %v5140 = vadd.f32 %v4180, %v4977
      %v5141 = vadd.f32 %v4181, %v4979
      %v5142 = vadd.f32 %v4182, %v4981
      %v5143 = vadd.f32 %v4183, %v4983
      %v5144 = vadd.f32 %v4184, %v4985
      %v5145 = vadd.f32 %v4185, %v4987
      %v5146 = vadd.f32 %v4186, %v4989
      %v5147 = vadd.f32 %v4187, %v4991
      %v5148 = vadd.f32 %v4188, %v4993
      %v5149 = vadd.f32 %v4189, %v4995
      %v5150 = vadd.f32 %v4190, %v4997
      %v5151 = vadd.f32 %v4191, %v4999
      %v5152 = vadd.f32 %v4192, %v5001
      %v5153 = vadd.f32 %v4193, %v5003
      %v5154 = vadd.f32 %v4194, %v5005
      %v5155 = vadd.f32 %v4195, %v5007
      %v5156 = vadd.f32 %v4196, %v5009
      %v5157 = vadd.f32 %v4197, %v5011
      %v5158 = vadd.f32 %v4198, %v5013
      %v5159 = vadd.f32 %v4199, %v5015
      %v5160 = vadd.f32 %v4200, %v5017
      %v5161 = vadd.f32 %v4201, %v5019
      %v5162 = vadd.f32 %v4202, %v5021
      %v5163 = vadd.f32 %v4203, %v5023
      %v5164 = vadd.f32 %v4204, %v5025
      %v5165 = vadd.f32 %v4205, %v5027
      %v5166 = vadd.f32 %v4206, %v5029
      %v5167 = vadd.f32 %v4207, %v5031
      %v5168 = vadd.f32 %v4208, %v5033
      %v5169 = vadd.f32 %v4209, %v5035
      %v5170 = vadd.f32 %v4210, %v5037
      %v5171 = vadd.f32 %v4211, %v5039
      %v5172 = vadd.f32 %v4212, %v5041
      %v5173 = vadd.f32 %v4213, %v5043
      %v5174 = vadd.f32 %v4214, %v5045
      %v5175 = vadd.f32 %v4215, %v5047
      %5240 = vrot.lane.b32.xlu0 %v5112, 127
      %v5241 = vpop.permute.xlu0 %5240
      %5242 = vrot.lane.b32.xlu0 %v5113, 127
      %v5243 = vpop.permute.xlu0 %5242
      %5244 = vrot.lane.b32.xlu0 %v5114, 127
      %v5245 = vpop.permute.xlu0 %5244
      %5246 = vrot.lane.b32.xlu0 %v5115, 127
      %v5247 = vpop.permute.xlu0 %5246
      %5248 = vrot.lane.b32.xlu0 %v5116, 127
      %v5249 = vpop.permute.xlu0 %5248
      %5250 = vrot.lane.b32.xlu0 %v5117, 127
      %v5251 = vpop.permute.xlu0 %5250
      %5252 = vrot.lane.b32.xlu0 %v5118, 127
      %v5253 = vpop.permute.xlu0 %5252
      %5254 = vrot.lane.b32.xlu0 %v5119, 127
      %v5255 = vpop.permute.xlu0 %5254
      %5256 = vrot.lane.b32.xlu0 %v5120, 127
      %v5257 = vpop.permute.xlu0 %5256
      %5258 = vrot.lane.b32.xlu0 %v5121, 127
      %v5259 = vpop.permute.xlu0 %5258
      %5260 = vrot.lane.b32.xlu0 %v5122, 127
      %v5261 = vpop.permute.xlu0 %5260
      %5262 = vrot.lane.b32.xlu0 %v5123, 127
      %v5263 = vpop.permute.xlu0 %5262
      %5264 = vrot.lane.b32.xlu0 %v5124, 127
      %v5265 = vpop.permute.xlu0 %5264
      %5266 = vrot.lane.b32.xlu0 %v5125, 127
      %v5267 = vpop.permute.xlu0 %5266
      %5268 = vrot.lane.b32.xlu0 %v5126, 127
      %v5269 = vpop.permute.xlu0 %5268
      %5270 = vrot.lane.b32.xlu0 %v5127, 127
      %v5271 = vpop.permute.xlu0 %5270
      %5272 = vrot.lane.b32.xlu0 %v5128, 127
      %v5273 = vpop.permute.xlu0 %5272
      %5274 = vrot.lane.b32.xlu0 %v5129, 127
      %v5275 = vpop.permute.xlu0 %5274
      %5276 = vrot.lane.b32.xlu0 %v5130, 127
      %v5277 = vpop.permute.xlu0 %5276
      %5278 = vrot.lane.b32.xlu0 %v5131, 127
      %v5279 = vpop.permute.xlu0 %5278
      %5280 = vrot.lane.b32.xlu0 %v5132, 127
      %v5281 = vpop.permute.xlu0 %5280
      %5282 = vrot.lane.b32.xlu0 %v5133, 127
      %v5283 = vpop.permute.xlu0 %5282
      %5284 = vrot.lane.b32.xlu0 %v5134, 127
      %v5285 = vpop.permute.xlu0 %5284
      %5286 = vrot.lane.b32.xlu0 %v5135, 127
      %v5287 = vpop.permute.xlu0 %5286
      %5288 = vrot.lane.b32.xlu0 %v5136, 127
      %v5289 = vpop.permute.xlu0 %5288
      %5290 = vrot.lane.b32.xlu0 %v5137, 127
      %v5291 = vpop.permute.xlu0 %5290
      %5292 = vrot.lane.b32.xlu0 %v5138, 127
      %v5293 = vpop.permute.xlu0 %5292
      %5294 = vrot.lane.b32.xlu0 %v5139, 127
      %v5295 = vpop.permute.xlu0 %5294
      %5296 = vrot.lane.b32.xlu0 %v5140, 127
      %v5297 = vpop.permute.xlu0 %5296
      %5298 = vrot.lane.b32.xlu0 %v5141, 127
      %v5299 = vpop.permute.xlu0 %5298
      %5300 = vrot.lane.b32.xlu0 %v5142, 127
      %v5301 = vpop.permute.xlu0 %5300
      %5302 = vrot.lane.b32.xlu0 %v5143, 127
      %v5303 = vpop.permute.xlu0 %5302
      %5304 = vrot.lane.b32.xlu0 %v5144, 127
      %v5305 = vpop.permute.xlu0 %5304
      %5306 = vrot.lane.b32.xlu0 %v5145, 127
      %v5307 = vpop.permute.xlu0 %5306
      %5308 = vrot.lane.b32.xlu0 %v5146, 127
      %v5309 = vpop.permute.xlu0 %5308
      %5310 = vrot.lane.b32.xlu0 %v5147, 127
      %v5311 = vpop.permute.xlu0 %5310
      %5312 = vrot.lane.b32.xlu0 %v5148, 127
      %v5313 = vpop.permute.xlu0 %5312
      %5314 = vrot.lane.b32.xlu0 %v5149, 127
      %v5315 = vpop.permute.xlu0 %5314
      %5316 = vrot.lane.b32.xlu0 %v5150, 127
      %v5317 = vpop.permute.xlu0 %5316
      %5318 = vrot.lane.b32.xlu0 %v5151, 127
      %v5319 = vpop.permute.xlu0 %5318
      %5320 = vrot.lane.b32.xlu0 %v5152, 127
      %v5321 = vpop.permute.xlu0 %5320
      %5322 = vrot.lane.b32.xlu0 %v5153, 127
      %v5323 = vpop.permute.xlu0 %5322
      %5324 = vrot.lane.b32.xlu0 %v5154, 127
      %v5325 = vpop.permute.xlu0 %5324
      %5326 = vrot.lane.b32.xlu0 %v5155, 127
      %v5327 = vpop.permute.xlu0 %5326
      %5328 = vrot.lane.b32.xlu0 %v5156, 127
      %v5329 = vpop.permute.xlu0 %5328
      %5330 = vrot.lane.b32.xlu0 %v5157, 127
      %v5331 = vpop.permute.xlu0 %5330
      %5332 = vrot.lane.b32.xlu0 %v5158, 127
      %v5333 = vpop.permute.xlu0 %5332
      %5334 = vrot.lane.b32.xlu0 %v5159, 127
      %v5335 = vpop.permute.xlu0 %5334
      %5336 = vrot.lane.b32.xlu0 %v5160, 127
      %v5337 = vpop.permute.xlu0 %5336
      %5338 = vrot.lane.b32.xlu0 %v5161, 127
      %v5339 = vpop.permute.xlu0 %5338
      %5340 = vrot.lane.b32.xlu0 %v5162, 127
      %v5341 = vpop.permute.xlu0 %5340
      %5342 = vrot.lane.b32.xlu0 %v5163, 127
      %v5343 = vpop.permute.xlu0 %5342
      %5344 = vrot.lane.b32.xlu0 %v5164, 127
      %v5345 = vpop.permute.xlu0 %5344
      %5346 = vrot.lane.b32.xlu0 %v5165, 127
      %v5347 = vpop.permute.xlu0 %5346
      %5348 = vrot.lane.b32.xlu0 %v5166, 127
      %v5349 = vpop.permute.xlu0 %5348
      %5350 = vrot.lane.b32.xlu0 %v5167, 127
      %v5351 = vpop.permute.xlu0 %5350
      %5352 = vrot.lane.b32.xlu0 %v5168, 127
      %v5353 = vpop.permute.xlu0 %5352
      %5354 = vrot.lane.b32.xlu0 %v5169, 127
      %v5355 = vpop.permute.xlu0 %5354
      %5356 = vrot.lane.b32.xlu0 %v5170, 127
      %v5357 = vpop.permute.xlu0 %5356
      %5358 = vrot.lane.b32.xlu0 %v5171, 127
      %v5359 = vpop.permute.xlu0 %5358
      %5360 = vrot.lane.b32.xlu0 %v5172, 127
      %v5361 = vpop.permute.xlu0 %5360
      %5362 = vrot.lane.b32.xlu0 %v5173, 127
      %v5363 = vpop.permute.xlu0 %5362
      %5364 = vrot.lane.b32.xlu0 %v5174, 127
      %v5365 = vpop.permute.xlu0 %5364
      %5366 = vrot.lane.b32.xlu0 %v5175, 127
      %v5367 = vpop.permute.xlu0 %5366
      %vm5432 = vcmask 7168
      %5433 = vst.msk [vmem:[%s194] sm:$0xff] %vm5432, %v5241
      %5434 = vst.msk [vmem:[%s194 + $0x8] sm:$0xff] %vm5432, %v5243
      %5435 = vst.msk [vmem:[%s194 + $0x10] sm:$0xff] %vm5432, %v5245
      %5436 = vst.msk [vmem:[%s194 + $0x18] sm:$0xff] %vm5432, %v5247
      %5437 = vst.msk [vmem:[%s194 + $0x20] sm:$0xff] %vm5432, %v5249
      %5438 = vst.msk [vmem:[%s194 + $0x28] sm:$0xff] %vm5432, %v5251
      %5439 = vst.msk [vmem:[%s194 + $0x30] sm:$0xff] %vm5432, %v5253
      %5440 = vst.msk [vmem:[%s194 + $0x38] sm:$0xff] %vm5432, %v5255
      %5441 = vst.msk [vmem:[%s194 + $0x40] sm:$0xff] %vm5432, %v5257
      %5442 = vst.msk [vmem:[%s194 + $0x48] sm:$0xff] %vm5432, %v5259
      %5443 = vst.msk [vmem:[%s194 + $0x50] sm:$0xff] %vm5432, %v5261
      %5444 = vst.msk [vmem:[%s194 + $0x58] sm:$0xff] %vm5432, %v5263
      %5445 = vst.msk [vmem:[%s194 + $0x60] sm:$0xff] %vm5432, %v5265
      %5446 = vst.msk [vmem:[%s194 + $0x68] sm:$0xff] %vm5432, %v5267
      %5447 = vst.msk [vmem:[%s194 + $0x70] sm:$0xff] %vm5432, %v5269
      %5448 = vst.msk [vmem:[%s194 + $0x78] sm:$0xff] %vm5432, %v5271
      %5449 = vst.msk [vmem:[%s194 + $0x80] sm:$0xff] %vm5432, %v5273
      %5450 = vst.msk [vmem:[%s194 + $0x88] sm:$0xff] %vm5432, %v5275
      %5451 = vst.msk [vmem:[%s194 + $0x90] sm:$0xff] %vm5432, %v5277
      %5452 = vst.msk [vmem:[%s194 + $0x98] sm:$0xff] %vm5432, %v5279
      %5453 = vst.msk [vmem:[%s194 + $0xa0] sm:$0xff] %vm5432, %v5281
      %5454 = vst.msk [vmem:[%s194 + $0xa8] sm:$0xff] %vm5432, %v5283
      %5455 = vst.msk [vmem:[%s194 + $0xb0] sm:$0xff] %vm5432, %v5285
      %5456 = vst.msk [vmem:[%s194 + $0xb8] sm:$0xff] %vm5432, %v5287
      %5457 = vst.msk [vmem:[%s194 + $0xc0] sm:$0xff] %vm5432, %v5289
      %5458 = vst.msk [vmem:[%s194 + $0xc8] sm:$0xff] %vm5432, %v5291
      %5459 = vst.msk [vmem:[%s194 + $0xd0] sm:$0xff] %vm5432, %v5293
      %5460 = vst.msk [vmem:[%s194 + $0xd8] sm:$0xff] %vm5432, %v5295
      %5461 = vst.msk [vmem:[%s194 + $0xe0] sm:$0xff] %vm5432, %v5297
      %5462 = vst.msk [vmem:[%s194 + $0xe8] sm:$0xff] %vm5432, %v5299
      %5463 = vst.msk [vmem:[%s194 + $0xf0] sm:$0xff] %vm5432, %v5301
      %5464 = vst.msk [vmem:[%s194 + $0xf8] sm:$0xff] %vm5432, %v5303
      %5465 = vst.msk [vmem:[%s194 + $0x100] sm:$0xff] %vm5432, %v5305
      %5466 = vst.msk [vmem:[%s194 + $0x108] sm:$0xff] %vm5432, %v5307
      %5467 = vst.msk [vmem:[%s194 + $0x110] sm:$0xff] %vm5432, %v5309
      %5468 = vst.msk [vmem:[%s194 + $0x118] sm:$0xff] %vm5432, %v5311
      %5469 = vst.msk [vmem:[%s194 + $0x120] sm:$0xff] %vm5432, %v5313
      %5470 = vst.msk [vmem:[%s194 + $0x128] sm:$0xff] %vm5432, %v5315
      %5471 = vst.msk [vmem:[%s194 + $0x130] sm:$0xff] %vm5432, %v5317
      %5472 = vst.msk [vmem:[%s194 + $0x138] sm:$0xff] %vm5432, %v5319
      %5473 = vst.msk [vmem:[%s194 + $0x140] sm:$0xff] %vm5432, %v5321
      %5474 = vst.msk [vmem:[%s194 + $0x148] sm:$0xff] %vm5432, %v5323
      %5475 = vst.msk [vmem:[%s194 + $0x150] sm:$0xff] %vm5432, %v5325
      %5476 = vst.msk [vmem:[%s194 + $0x158] sm:$0xff] %vm5432, %v5327
      %5477 = vst.msk [vmem:[%s194 + $0x160] sm:$0xff] %vm5432, %v5329
      %5478 = vst.msk [vmem:[%s194 + $0x168] sm:$0xff] %vm5432, %v5331
      %5479 = vst.msk [vmem:[%s194 + $0x170] sm:$0xff] %vm5432, %v5333
      %5480 = vst.msk [vmem:[%s194 + $0x178] sm:$0xff] %vm5432, %v5335
      %5481 = vst.msk [vmem:[%s194 + $0x180] sm:$0xff] %vm5432, %v5337
      %5482 = vst.msk [vmem:[%s194 + $0x188] sm:$0xff] %vm5432, %v5339
      %5483 = vst.msk [vmem:[%s194 + $0x190] sm:$0xff] %vm5432, %v5341
      %5484 = vst.msk [vmem:[%s194 + $0x198] sm:$0xff] %vm5432, %v5343
      %5485 = vst.msk [vmem:[%s194 + $0x1a0] sm:$0xff] %vm5432, %v5345
      %5486 = vst.msk [vmem:[%s194 + $0x1a8] sm:$0xff] %vm5432, %v5347
      %5487 = vst.msk [vmem:[%s194 + $0x1b0] sm:$0xff] %vm5432, %v5349
      %5488 = vst.msk [vmem:[%s194 + $0x1b8] sm:$0xff] %vm5432, %v5351
      %5489 = vst.msk [vmem:[%s194 + $0x1c0] sm:$0xff] %vm5432, %v5353
      %5490 = vst.msk [vmem:[%s194 + $0x1c8] sm:$0xff] %vm5432, %v5355
      %5491 = vst.msk [vmem:[%s194 + $0x1d0] sm:$0xff] %vm5432, %v5357
      %5492 = vst.msk [vmem:[%s194 + $0x1d8] sm:$0xff] %vm5432, %v5359
      %5493 = vst.msk [vmem:[%s194 + $0x1e0] sm:$0xff] %vm5432, %v5361
      %5494 = vst.msk [vmem:[%s194 + $0x1e8] sm:$0xff] %vm5432, %v5363
      %5495 = vst.msk [vmem:[%s194 + $0x1f0] sm:$0xff] %vm5432, %v5365
      %5496 = vst.msk [vmem:[%s194 + $0x1f8] sm:$0xff] %vm5432, %v5367
      %s5497 = smul.u32 64, %s14
      %p5498 = scmp.lt.s32.totalorder %s5497, 255
      %s5499 = scalar_select %p5498, %s5497, 255
      %s5500 = smul.addr %s5499, 8
      %s5501 = scalar_lea.vmem %s3, %s5500
      // Predicated region
      $region33: #{tpu_custom_call.1} parent=31 // pred_check
        %p5502 = pneg %p105
      $region34: #{tpu_custom_call.1} parent=31 // pred_check_branch
        %5504 = sbr.rel (%p5502) target = $region36
      $region35: #{tpu_custom_call.1} parent=31 // pred_region
        %s5505 = smul.u32 64, %s14
      $region36: #{tpu_custom_call.1} parent=31 // pred_fallthru
        _
    $region32: #{tpu_custom_call.1} parent=5 // pred_fallthru
      _
    %p5506 = scmp.le.s32.totalorder 2, %s9
    // Predicated region
    $region37: #{tpu_custom_call.1} parent=5 // pred_check
      %p5507 = pneg %p5506
    $region38: #{tpu_custom_call.1} parent=5 // pred_check_branch
      %5509 = sbr.rel (%p5507) target = $region40
    $region39: #{tpu_custom_call.1} parent=5 // pred_region
      %s5510 = ssub.s32 %s9, 2
      // Predicated region
      $region41: #{tpu_custom_call.1} parent=39 // pred_check
        %p5511 = pneg %p111
      $region42: #{tpu_custom_call.1} parent=39 // pred_check_branch
        %5513 = sbr.rel (%p5511) target = $region44
      $region43: #{tpu_custom_call.1} parent=39 // pred_region
        %s5514 = smul.u32 64, %s15
        %p5515 = scmp.lt.s32.totalorder %s5514, 255
        %s5516 = scalar_select %p5515, %s5514, 255
        %s5517 = smul.addr %s5516, 8
        %s5518 = scalar_lea.vmem %s3, %s5517
      $region44: #{tpu_custom_call.1} parent=39 // pred_fallthru
        _
    $region40: #{tpu_custom_call.1} parent=5 // pred_fallthru
      _
  $region6: #{tpu_custom_call.1} parent=0 // loop_footer
    %s13 = sadd.s32 1, %s9
  $region7: #{tpu_custom_call.1} parent=0 // loop_footer_branch
    %8 = sbr.rel target = $region3
  $region8: #{tpu_custom_call.1} parent=0 // loop_exit
    _

</llo_original>
